<compile_context>
chip_gen: v5e
topology: v5e:2x2
jax: 0.10.0
libtpu: 0.0.40
codegen_flags: <defaults>
</compile_context>

<pallas_src>
import functools

import jax
import jax.numpy as jnp
from jax import lax
from jax.experimental import pallas as pl
from jax.experimental.pallas import tpu as pltpu

S_STATES = 5      # number of per-state linears
K_IN = 5          # Linear input features
K_PAD = 8         # K zero-padded to a sublane multiple for a clean MXU contraction
D_LLM = 4096      # plm_embed_size


def _state_embed_kernel(x_ref, te_ref, w_ref, b_ref, o0, o1, o2, o3, o4):
    # x_ref : (tm, S, K_PAD)  rows of state_ts for this m block (K zero-padded to 8)
    # te_ref: (tm, tn)        time-embedding tile
    # w_ref : (S, K_PAD, tn)  all 5 transposed weights for this n slice (reused over m)
    # b_ref : (S, 1, tn)      all 5 biases for this n slice (reused over m)
    # o*    : (tm, tn)        one output per state, all written in this grid step
    te = te_ref[...].astype(jnp.float32)
    for s, o_ref in enumerate((o0, o1, o2, o3, o4)):
        x_s = x_ref[:, s, :]                                    # (tm, K_PAD)
        # K=8 contraction on the MXU (vextended slot) keeps the VPU free for the adds.
        acc = jnp.dot(x_s, w_ref[s], preferred_element_type=jnp.float32)
        o_ref[...] = (acc + b_ref[s].astype(jnp.float32) + te).astype(o_ref.dtype)


def _vmem_limits():
    """Generation-aware VMEM request + streaming-block budget."""
    try:
        cap = pltpu.get_tpu_info().vmem_capacity_bytes
    except Exception:
        cap = 64 * 1024 * 1024   # conservative (v7x per-TC physical)
    limit = max(32 * 1024 * 1024, min(int(cap * 0.55), 80 * 1024 * 1024))
    budget = limit - 8 * 1024 * 1024   # headroom for w/b/x buffers + compiler scratch
    return limit, budget


def _pick_tm(M, max_tm=1024):
    if M <= max_tm:
        return M                       # single full-extent M block: no padding needed
    for cand in range(max_tm, 7, -8):  # largest divisor of M that is a multiple of 8
        if cand >= 256 and M % cand == 0:
            return cand
    # No convenient divisor: ragged last block (Pallas masks out-of-bounds rows/writes).
    return 512


def _pick_tn(grid_m, N, tm, te_item, out_item, budget):
    cands = [d for d in range(128, N + 1, 128) if N % d == 0]
    if grid_m == 1:
        # Guarantee >=2 grid blocks so both v7x TensorCores get work.
        halves = [d for d in cands if d <= N // 2]
        if halves:
            cands = halves

    def step_bytes(tn):
        # Double-buffered streaming blocks per grid step: te + 5 outputs (+ small w/b/x).
        return (tm * tn * (2 * te_item + 2 * S_STATES * out_item)
                + 2 * tn * S_STATES * (K_PAD + 1) * 4
                + 2 * tm * S_STATES * K_PAD * 4)

    fit = [d for d in cands if step_bytes(d) <= budget]
    return max(fit) if fit else min(cands)


@functools.partial(jax.jit, static_argnames=("tm", "tn", "vmem_limit"))
def _forward(state_ts, time_embeddings, w_t, b, *, tm, tn, vmem_limit):
    B, T, S, K = state_ts.shape
    N = w_t.shape[-1]
    M = B * T

    # split(dim=2)+squeeze -> contiguous (free) reshape to (M, S, K); pad K 5->8 (tiny).
    x = state_ts.reshape(M, S, K)
    x = jnp.pad(x, ((0, 0), (0, 0), (0, K_PAD - K)))
    wt = jnp.pad(w_t, ((0, 0), (0, K_PAD - K), (0, 0)))          # (S, K_PAD, N)
    te = time_embeddings.reshape(M, N)
    out_dtype = te.dtype          # pass bf16 time_embeddings to get bf16 outputs

    grid = (N // tn, pl.cdiv(M, tm))   # n outer, m inner: w/b blocks DMA'd once per n
    outs = pl.pallas_call(
        _state_embed_kernel,
        out_shape=tuple(jax.ShapeDtypeStruct((M, N), out_dtype) for _ in range(S)),
        grid_spec=pltpu.PrefetchScalarGridSpec(
            num_scalar_prefetch=0,
            grid=grid,
            in_specs=[
                pl.BlockSpec((tm, S, K_PAD), lambda n, m: (m, 0, 0)),   # x (tiny)
                pl.BlockSpec((tm, tn), lambda n, m: (m, n)),            # time_emb
                pl.BlockSpec((S, K_PAD, tn), lambda n, m: (0, 0, n)),   # all W^T (per n)
                pl.BlockSpec((S, 1, tn), lambda n, m: (0, 0, n)),       # all biases (per n)
            ],
            out_specs=tuple(
                pl.BlockSpec((tm, tn), lambda n, m: (m, n)) for _ in range(S)
            ),
        ),
        compiler_params=pltpu.CompilerParams(
            dimension_semantics=("parallel", "parallel"),
            vmem_limit_bytes=vmem_limit,
        ),
    )(x, te, wt, b)

    return tuple(o.reshape(B, T, N) for o in outs)


def state_embedding(state_ts, time_embeddings, w_t, b):
    """Mirrors StateEmbedding.forward: returns a list of 5 (B, T, 4096) arrays."""
    B, T, S, K = state_ts.shape
    assert S == S_STATES and K == K_IN
    N = w_t.shape[-1]
    assert N % 128 == 0
    M = B * T

    item = jnp.dtype(time_embeddings.dtype).itemsize
    vmem_limit, budget = _vmem_limits()
    tm = _pick_tm(M)
    tn = _pick_tn(pl.cdiv(M, tm), N, tm, item, item, budget)
    return list(_forward(state_ts, time_embeddings, w_t, b,
                         tm=tm, tn=tn, vmem_limit=vmem_limit))


def init_params(key):
    """Deterministic init of 5 x Linear(5, 4096), mimicking nn.Linear U(-1/sqrt(5), 1/sqrt(5))."""
    bound = 1.0 / (K_IN ** 0.5)
    kw, kb = jax.random.split(key)
    # weights stored already transposed: (S, K_in, D_LLM) == W^T per state
    w_t = jax.random.uniform(kw, (S_STATES, K_IN, D_LLM), jnp.float32, -bound, bound)
    b = jax.random.uniform(kb, (S_STATES, 1, D_LLM), jnp.float32, -bound, bound)
    return w_t, b


if __name__ == "__main__":
    key = jax.random.PRNGKey(0)
    k_param, k_state, k_time = jax.random.split(key, 3)

    B, T = 2, 8  # small batch / sequence
    w_t, b = init_params(k_param)

    state_ts = jax.random.normal(k_state, (B, T, S_STATES, K_IN), jnp.float32)
    time_embeddings = jax.random.normal(k_time, (B, T, D_LLM), jnp.float32)

    outs = state_embedding(state_ts, time_embeddings, w_t, b)
    outs = [jax.block_until_ready(o) for o in outs]

    # Pure-JAX reference (HIGHEST-precision contraction) of the same semantics.
    # Tolerance allows for the MXU's f32 matmul decomposition on the kernel side.
    for k in range(S_STATES):
        xk = state_ts[:, :, k, :]                                       # (B, T, 5)
        ref = jnp.einsum("btk,kn->btn", xk, w_t[k],
                         precision=lax.Precision.HIGHEST) + b[k][0] + time_embeddings
        assert outs[k].shape == (B, T, D_LLM)
        assert jnp.allclose(outs[k], ref, atol=5e-3, rtol=5e-3), f"mismatch in state {k}"

    print("KERNEL_OK")
</pallas_src>

<mosaic_0001>
module attributes {stable_mosaic.version = 11 : i64} {
  func.func @_state_embed_kernel(%arg0: i32, %arg1: i32, %arg2: memref<16x5x8xf32, #tpu.memory_space<vmem>>, %arg3: memref<16x2048xf32, #tpu.memory_space<vmem>>, %arg4: memref<5x8x2048xf32, #tpu.memory_space<vmem>>, %arg5: memref<5x1x2048xf32, #tpu.memory_space<vmem>>, %arg6: memref<16x2048xf32, #tpu.memory_space<vmem>>, %arg7: memref<16x2048xf32, #tpu.memory_space<vmem>>, %arg8: memref<16x2048xf32, #tpu.memory_space<vmem>>, %arg9: memref<16x2048xf32, #tpu.memory_space<vmem>>, %arg10: memref<16x2048xf32, #tpu.memory_space<vmem>>) attributes {dimension_semantics = [#tpu.dimension_semantics<parallel>, #tpu.dimension_semantics<parallel>], iteration_bounds = array<i64: 2, 1>, scalar_prefetch = 0 : i64, scratch_operands = 0 : i64, tpu.core_type = #tpu.core_type<tc>, window_params = [{transform_indices = @transform_0, window_bounds = array<i64: 16, 5, 8>}, {transform_indices = @transform_1, window_bounds = array<i64: 16, 2048>}, {transform_indices = @transform_2, window_bounds = array<i64: 5, 8, 2048>}, {transform_indices = @transform_3, window_bounds = array<i64: 5, 1, 2048>}, {transform_indices = @transform_4, window_bounds = array<i64: 16, 2048>}, {transform_indices = @transform_5, window_bounds = array<i64: 16, 2048>}, {transform_indices = @transform_6, window_bounds = array<i64: 16, 2048>}, {transform_indices = @transform_7, window_bounds = array<i64: 16, 2048>}, {transform_indices = @transform_8, window_bounds = array<i64: 16, 2048>}]} {
    %c0 = arith.constant 0 : index
    %c0_0 = arith.constant 0 : index
    %0 = vector.load %arg3[%c0, %c0_0] : memref<16x2048xf32, #tpu.memory_space<vmem>>, vector<16x2048xf32>
    %c0_1 = arith.constant 0 : index
    %c0_2 = arith.constant 0 : index
    %c0_3 = arith.constant 0 : index
    %1 = vector.load %arg2[%c0_1, %c0_2, %c0_3] : memref<16x5x8xf32, #tpu.memory_space<vmem>>, vector<16x1x8xf32>
    %2 = vector.shape_cast %1 : vector<16x1x8xf32> to vector<16x8xf32>
    %c0_4 = arith.constant 0 : index
    %c0_5 = arith.constant 0 : index
    %c0_6 = arith.constant 0 : index
    %3 = vector.load %arg4[%c0_4, %c0_5, %c0_6] : memref<5x8x2048xf32, #tpu.memory_space<vmem>>, vector<1x8x2048xf32>
    %4 = vector.shape_cast %3 : vector<1x8x2048xf32> to vector<8x2048xf32>
    %cst = arith.constant dense<0.000000e+00> : vector<16x2048xf32>
    %5 = tpu.matmul %2, %4, %cst {dimension_numbers = #tpu.dot_dimension_numbers<[1], [0], [0], [1], [0, 0, 1, 1], [], []>} : vector<16x8xf32>, vector<8x2048xf32>, vector<16x2048xf32> -> vector<16x2048xf32>
    %c0_7 = arith.constant 0 : index
    %c0_8 = arith.constant 0 : index
    %c0_9 = arith.constant 0 : index
    %6 = vector.load %arg5[%c0_7, %c0_8, %c0_9] : memref<5x1x2048xf32, #tpu.memory_space<vmem>>, vector<1x1x2048xf32>
    %7 = vector.shape_cast %6 : vector<1x1x2048xf32> to vector<1x2048xf32>
    %8 = vector.broadcast %7 : vector<1x2048xf32> to vector<16x2048xf32>
    %9 = arith.addf %5, %8 : vector<16x2048xf32>
    %10 = arith.addf %9, %0 : vector<16x2048xf32>
    %c0_10 = arith.constant 0 : index
    %c0_11 = arith.constant 0 : index
    %11 = vector.load %arg6[%c0_10, %c0_11] : memref<16x2048xf32, #tpu.memory_space<vmem>>, vector<16x2048xf32>
    tpu.vector_store %arg6[%c0_10, %c0_11], %10 {strides = array<i32>} : memref<16x2048xf32, #tpu.memory_space<vmem>>, vector<16x2048xf32>,
    %c0_12 = arith.constant 0 : index
    %c1 = arith.constant 1 : index
    %c0_13 = arith.constant 0 : index
    %12 = vector.load %arg2[%c0_12, %c1, %c0_13] : memref<16x5x8xf32, #tpu.memory_space<vmem>>, vector<16x1x8xf32>
    %13 = vector.shape_cast %12 : vector<16x1x8xf32> to vector<16x8xf32>
    %c1_14 = arith.constant 1 : index
    %c0_15 = arith.constant 0 : index
    %c0_16 = arith.constant 0 : index
    %14 = vector.load %arg4[%c1_14, %c0_15, %c0_16] : memref<5x8x2048xf32, #tpu.memory_space<vmem>>, vector<1x8x2048xf32>
    %15 = vector.shape_cast %14 : vector<1x8x2048xf32> to vector<8x2048xf32>
    %cst_17 = arith.constant dense<0.000000e+00> : vector<16x2048xf32>
    %16 = tpu.matmul %13, %15, %cst_17 {dimension_numbers = #tpu.dot_dimension_numbers<[1], [0], [0], [1], [0, 0, 1, 1], [], []>} : vector<16x8xf32>, vector<8x2048xf32>, vector<16x2048xf32> -> vector<16x2048xf32>
    %c1_18 = arith.constant 1 : index
    %c0_19 = arith.constant 0 : index
    %c0_20 = arith.constant 0 : index
    %17 = vector.load %arg5[%c1_18, %c0_19, %c0_20] : memref<5x1x2048xf32, #tpu.memory_space<vmem>>, vector<1x1x2048xf32>
    %18 = vector.shape_cast %17 : vector<1x1x2048xf32> to vector<1x2048xf32>
    %19 = vector.broadcast %18 : vector<1x2048xf32> to vector<16x2048xf32>
    %20 = arith.addf %16, %19 : vector<16x2048xf32>
    %21 = arith.addf %20, %0 : vector<16x2048xf32>
    %c0_21 = arith.constant 0 : index
    %c0_22 = arith.constant 0 : index
    %22 = vector.load %arg7[%c0_21, %c0_22] : memref<16x2048xf32, #tpu.memory_space<vmem>>, vector<16x2048xf32>
    tpu.vector_store %arg7[%c0_21, %c0_22], %21 {strides = array<i32>} : memref<16x2048xf32, #tpu.memory_space<vmem>>, vector<16x2048xf32>,
    %c0_23 = arith.constant 0 : index
    %c2 = arith.constant 2 : index
    %c0_24 = arith.constant 0 : index
    %23 = vector.load %arg2[%c0_23, %c2, %c0_24] : memref<16x5x8xf32, #tpu.memory_space<vmem>>, vector<16x1x8xf32>
    %24 = vector.shape_cast %23 : vector<16x1x8xf32> to vector<16x8xf32>
    %c2_25 = arith.constant 2 : index
    %c0_26 = arith.constant 0 : index
    %c0_27 = arith.constant 0 : index
    %25 = vector.load %arg4[%c2_25, %c0_26, %c0_27] : memref<5x8x2048xf32, #tpu.memory_space<vmem>>, vector<1x8x2048xf32>
    %26 = vector.shape_cast %25 : vector<1x8x2048xf32> to vector<8x2048xf32>
    %cst_28 = arith.constant dense<0.000000e+00> : vector<16x2048xf32>
    %27 = tpu.matmul %24, %26, %cst_28 {dimension_numbers = #tpu.dot_dimension_numbers<[1], [0], [0], [1], [0, 0, 1, 1], [], []>} : vector<16x8xf32>, vector<8x2048xf32>, vector<16x2048xf32> -> vector<16x2048xf32>
    %c2_29 = arith.constant 2 : index
    %c0_30 = arith.constant 0 : index
    %c0_31 = arith.constant 0 : index
    %28 = vector.load %arg5[%c2_29, %c0_30, %c0_31] : memref<5x1x2048xf32, #tpu.memory_space<vmem>>, vector<1x1x2048xf32>
    %29 = vector.shape_cast %28 : vector<1x1x2048xf32> to vector<1x2048xf32>
    %30 = vector.broadcast %29 : vector<1x2048xf32> to vector<16x2048xf32>
    %31 = arith.addf %27, %30 : vector<16x2048xf32>
    %32 = arith.addf %31, %0 : vector<16x2048xf32>
    %c0_32 = arith.constant 0 : index
    %c0_33 = arith.constant 0 : index
    %33 = vector.load %arg8[%c0_32, %c0_33] : memref<16x2048xf32, #tpu.memory_space<vmem>>, vector<16x2048xf32>
    tpu.vector_store %arg8[%c0_32, %c0_33], %32 {strides = array<i32>} : memref<16x2048xf32, #tpu.memory_space<vmem>>, vector<16x2048xf32>,
    %c0_34 = arith.constant 0 : index
    %c3 = arith.constant 3 : index
    %c0_35 = arith.constant 0 : index
    %34 = vector.load %arg2[%c0_34, %c3, %c0_35] : memref<16x5x8xf32, #tpu.memory_space<vmem>>, vector<16x1x8xf32>
    %35 = vector.shape_cast %34 : vector<16x1x8xf32> to vector<16x8xf32>
    %c3_36 = arith.constant 3 : index
    %c0_37 = arith.constant 0 : index
    %c0_38 = arith.constant 0 : index
    %36 = vector.load %arg4[%c3_36, %c0_37, %c0_38] : memref<5x8x2048xf32, #tpu.memory_space<vmem>>, vector<1x8x2048xf32>
    %37 = vector.shape_cast %36 : vector<1x8x2048xf32> to vector<8x2048xf32>
    %cst_39 = arith.constant dense<0.000000e+00> : vector<16x2048xf32>
    %38 = tpu.matmul %35, %37, %cst_39 {dimension_numbers = #tpu.dot_dimension_numbers<[1], [0], [0], [1], [0, 0, 1, 1], [], []>} : vector<16x8xf32>, vector<8x2048xf32>, vector<16x2048xf32> -> vector<16x2048xf32>
    %c3_40 = arith.constant 3 : index
    %c0_41 = arith.constant 0 : index
    %c0_42 = arith.constant 0 : index
    %39 = vector.load %arg5[%c3_40, %c0_41, %c0_42] : memref<5x1x2048xf32, #tpu.memory_space<vmem>>, vector<1x1x2048xf32>
    %40 = vector.shape_cast %39 : vector<1x1x2048xf32> to vector<1x2048xf32>
    %41 = vector.broadcast %40 : vector<1x2048xf32> to vector<16x2048xf32>
    %42 = arith.addf %38, %41 : vector<16x2048xf32>
    %43 = arith.addf %42, %0 : vector<16x2048xf32>
    %c0_43 = arith.constant 0 : index
    %c0_44 = arith.constant 0 : index
    %44 = vector.load %arg9[%c0_43, %c0_44] : memref<16x2048xf32, #tpu.memory_space<vmem>>, vector<16x2048xf32>
    tpu.vector_store %arg9[%c0_43, %c0_44], %43 {strides = array<i32>} : memref<16x2048xf32, #tpu.memory_space<vmem>>, vector<16x2048xf32>,
    %c0_45 = arith.constant 0 : index
    %c4 = arith.constant 4 : index
    %c0_46 = arith.constant 0 : index
    %45 = vector.load %arg2[%c0_45, %c4, %c0_46] : memref<16x5x8xf32, #tpu.memory_space<vmem>>, vector<16x1x8xf32>
    %46 = vector.shape_cast %45 : vector<16x1x8xf32> to vector<16x8xf32>
    %c4_47 = arith.constant 4 : index
    %c0_48 = arith.constant 0 : index
    %c0_49 = arith.constant 0 : index
    %47 = vector.load %arg4[%c4_47, %c0_48, %c0_49] : memref<5x8x2048xf32, #tpu.memory_space<vmem>>, vector<1x8x2048xf32>
    %48 = vector.shape_cast %47 : vector<1x8x2048xf32> to vector<8x2048xf32>
    %cst_50 = arith.constant dense<0.000000e+00> : vector<16x2048xf32>
    %49 = tpu.matmul %46, %48, %cst_50 {dimension_numbers = #tpu.dot_dimension_numbers<[1], [0], [0], [1], [0, 0, 1, 1], [], []>} : vector<16x8xf32>, vector<8x2048xf32>, vector<16x2048xf32> -> vector<16x2048xf32>
    %c4_51 = arith.constant 4 : index
    %c0_52 = arith.constant 0 : index
    %c0_53 = arith.constant 0 : index
    %50 = vector.load %arg5[%c4_51, %c0_52, %c0_53] : memref<5x1x2048xf32, #tpu.memory_space<vmem>>, vector<1x1x2048xf32>
    %51 = vector.shape_cast %50 : vector<1x1x2048xf32> to vector<1x2048xf32>
    %52 = vector.broadcast %51 : vector<1x2048xf32> to vector<16x2048xf32>
    %53 = arith.addf %49, %52 : vector<16x2048xf32>
    %54 = arith.addf %53, %0 : vector<16x2048xf32>
    %c0_54 = arith.constant 0 : index
    %c0_55 = arith.constant 0 : index
    %55 = vector.load %arg10[%c0_54, %c0_55] : memref<16x2048xf32, #tpu.memory_space<vmem>>, vector<16x2048xf32>
    tpu.vector_store %arg10[%c0_54, %c0_55], %54 {strides = array<i32>} : memref<16x2048xf32, #tpu.memory_space<vmem>>, vector<16x2048xf32>,
    return
  }
  func.func @transform_0(%arg0: i32, %arg1: i32) -> (i32, i32, i32) {
    %c0_i32 = arith.constant 0 : i32
    %c0_i32_0 = arith.constant 0 : i32
    %c0_i32_1 = arith.constant 0 : i32
    return %arg1, %c0_i32, %c0_i32_0 : i32, i32, i32
  }
  func.func @transform_1(%arg0: i32, %arg1: i32) -> (i32, i32) {
    %c0_i32 = arith.constant 0 : i32
    return %arg1, %arg0 : i32, i32
  }
  func.func @transform_2(%arg0: i32, %arg1: i32) -> (i32, i32, i32) {
    %c0_i32 = arith.constant 0 : i32
    %c0_i32_0 = arith.constant 0 : i32
    %c0_i32_1 = arith.constant 0 : i32
    return %c0_i32, %c0_i32_0, %arg0 : i32, i32, i32
  }
  func.func @transform_3(%arg0: i32, %arg1: i32) -> (i32, i32, i32) {
    %c0_i32 = arith.constant 0 : i32
    %c0_i32_0 = arith.constant 0 : i32
    %c0_i32_1 = arith.constant 0 : i32
    return %c0_i32, %c0_i32_0, %arg0 : i32, i32, i32
  }
  func.func @transform_4(%arg0: i32, %arg1: i32) -> (i32, i32) {
    %c0_i32 = arith.constant 0 : i32
    return %arg1, %arg0 : i32, i32
  }
  func.func @transform_5(%arg0: i32, %arg1: i32) -> (i32, i32) {
    %c0_i32 = arith.constant 0 : i32
    return %arg1, %arg0 : i32, i32
  }
  func.func @transform_6(%arg0: i32, %arg1: i32) -> (i32, i32) {
    %c0_i32 = arith.constant 0 : i32
    return %arg1, %arg0 : i32, i32
  }
  func.func @transform_7(%arg0: i32, %arg1: i32) -> (i32, i32) {
    %c0_i32 = arith.constant 0 : i32
    return %arg1, %arg0 : i32, i32
  }
  func.func @transform_8(%arg0: i32, %arg1: i32) -> (i32, i32) {
    %c0_i32 = arith.constant 0 : i32
    return %arg1, %arg0 : i32, i32
  }
}

</mosaic_0001>

<llo_original>
// kernel: _forward.1
$region0: #{_forward.1}
  #allocation0 [shape = 'u32[]', space=smem, size = 0x4, offset = 0x4, fixed_abs, tag = 'smem constant byte address 0x4 - core index']
  #allocation1 [shape = 'u32[72,128]{1,0:T(1,128)}', space=vmem, size = 0x9000, scoped, tag = 'internal scratch']
  %s0 = inlined_call_operand.vmem [shape: f32[16,5,8], index: 0, kind: input, shape index: {}]
  %s1 = inlined_call_operand.vmem [shape: f32[16,4096], index: 1, kind: input, shape index: {}]
  %s2 = inlined_call_operand.vmem [shape: f32[5,8,4096], index: 2, kind: input, shape index: {}]
  %s3 = inlined_call_operand.vmem [shape: f32[5,1,4096], index: 3, kind: input, shape index: {}]
  %s4 = inlined_call_operand.hbm [shape: f32[16,4096], index: 4, kind: output, shape index: {0}]
  %s5 = inlined_call_operand.hbm [shape: f32[16,4096], index: 5, kind: output, shape index: {1}]
  %s6 = inlined_call_operand.hbm [shape: f32[16,4096], index: 6, kind: output, shape index: {2}]
  %s7 = inlined_call_operand.hbm [shape: f32[16,4096], index: 7, kind: output, shape index: {3}]
  %s8 = inlined_call_operand.hbm [shape: f32[16,4096], index: 8, kind: output, shape index: {4}]
  %9 = xla_tuple %s4, %s5, %s6, %s7, %s8
  %s10 = sld [smem:[#allocation0]]
  $region150: #{_forward.1} parent=0
    _
  %s12 = ssub.s32 1, %s10
  %s13 = scalar_select 0, %s12, %s10
  $region1: #{_forward.1} parent=0
    #allocation2 [shape = 'u8[262144]{0}', space=vmem, size = 0x40000, scoped, tag = 'input window, operand 1']
    #allocation3 [shape = 'u8[655360]{0}', space=vmem, size = 0xa0000, scoped, tag = 'input window, operand 2']
    #allocation4 [shape = 'u8[81920]{0}', space=vmem, size = 0x14000, scoped, tag = 'input window, operand 3']
    #allocation5 [shape = 'u8[262144]{0}', space=vmem, size = 0x40000, scoped, tag = 'output window, operand 0']
    #allocation6 [shape = 's32[2]{0}', space=sflag, size = 0x8, scoped, tag = 'scoped memory for _forward.1']
    #allocation7 [shape = 'u8[262144]{0}', space=vmem, size = 0x40000, scoped, tag = 'output window, operand 1']
    #allocation8 [shape = 's32[2]{0}', space=sflag, size = 0x8, scoped, tag = 'scoped memory for _forward.1']
    #allocation9 [shape = 'u8[262144]{0}', space=vmem, size = 0x40000, scoped, tag = 'output window, operand 2']
    #allocation10 [shape = 'u8[262144]{0}', space=vmem, size = 0x40000, scoped, tag = 'output window, operand 3']
    #allocation11 [shape = 's32[2]{0}', space=sflag, size = 0x8, scoped, tag = 'scoped memory for _forward.1']
    #allocation12 [shape = 'u8[262144]{0}', space=vmem, size = 0x40000, scoped, tag = 'output window, operand 4']
    %14 = vsyncpa [#allocation6], 0
    %s15 = scalar_lea.sflag [#allocation6], 1
    %16 = vsyncpa %s15, 0
    %17 = vsyncpa [#allocation8], 0
    %s18 = scalar_lea.sflag [#allocation8], 1
    %19 = vsyncpa %s18, 0
    %20 = vsyncpa [#allocation11], 0
    %s21 = scalar_lea.sflag [#allocation11], 1
    %22 = vsyncpa %s21, 0
    loop: start=0, step=1, limit=4
    $region2: #{_forward.1} parent=1 // loop_pre_header
      _
    $region3: #{_forward.1} parent=1 // loop_header
      %s24 = sphi 0, %s28
      %p25 = scmp.ge.s32.totalorder %s24, 4
      %s31 = sphi 0, %s43
      %s32 = sphi 0, %s39
      %s33 = sphi 0, %s31
      %s34 = sphi 0, %s32
      %s35 = sphi 0, %s33
      %s36 = sphi 0, %s34
      %s46 = sphi 0, %s48
      %s49 = sphi 0, %s46
      %s50 = sphi 0, %s49
      %s66 = sphi 0, %s50
      %s74 = sphi 0, %s76
      %s77 = sphi 0, %s74
      %s78 = sphi 0, %s77
      %s94 = sphi 0, %s78
      %s100 = sphi 0, %s102
      %s103 = sphi 0, %s100
      %s104 = sphi 0, %s103
      %s120 = sphi 0, %s104
      %s126 = sphi 0, %s128
      %s129 = sphi 0, %s126
      %s130 = sphi 0, %s129
      %s146 = sphi 0, %s130
      %s154 = sphi 0, %s156
      %s157 = sphi 0, %s154
      %s158 = sphi 0, %s157
      %s174 = sphi 0, %s158
      %s182 = sphi 0, %s184
      %s185 = sphi 0, %s182
      %s186 = sphi 0, %s185
      %s202 = sphi 0, %s186
      %s210 = sphi 0, %s212
      %s213 = sphi 0, %s210
      %s214 = sphi 0, %s213
      %s230 = sphi 0, %s214
      %s238 = sphi 0, %s240
      %s241 = sphi 0, %s238
      %s242 = sphi 0, %s241
      %s258 = sphi 0, %s242
      %s266 = sphi 0, %s268
      %s269 = sphi 0, %s266
      %s270 = sphi 0, %s269
      %s286 = sphi 0, %s270
    $region4: #{_forward.1} parent=1 // loop_header_branch
      %27 = sbr.rel (%p25) target = $region8
    $region5: #{_forward.1} parent=1 // loop_body
      %s29 = ssub.s32 %s24, 1
      %s30 = ssub.s32 %s24, 2
      %s37 = sadd.s32 1, %s32
      %p38 = scmp.ge.s32.totalorder %s37, 1
      %s39 = scalar_select %p38, 0, %s37
      %s40 = sadd.s32 1, %s31
      %s41 = scalar_select %p38, %s40, %s31
      %p42 = scmp.ge.s32.totalorder %s41, 2
      %s43 = scalar_select %p42, 0, %s41
      %s44 = ssub.s32 %s32, %s39
      %p45 = scmp.eq.s32.totalorder %s44, 0
      %s47 = sadd.s32 %s46, 1
      %s48 = scalar_select %p45, %s46, %s47
      %p51 = pneg %p45
      %p52 = scmp.eq.s32.totalorder %s24, 1
      %p53 = por %p51, %p52
      %p54 = scmp.ne.s32.totalorder %s46, %s49
      %p55 = scmp.eq.s32.totalorder %s24, 0
      %p56 = por %p54, %p55
      %p57 = scmp.ne.s32.totalorder %s46, %s49
      %p58 = scmp.eq.s32.totalorder %s29, 1
      %p59 = por %p57, %p58
      %p60 = scmp.ne.s32.totalorder %s49, %s50
      %p61 = scmp.eq.s32.totalorder %s29, 0
      %p62 = por %p60, %p61
      %p63 = scmp.ne.s32.totalorder %s49, %s50
      %p64 = scmp.eq.s32.totalorder %s30, 1
      %p65 = por %p63, %p64
      %p67 = scmp.ne.s32.totalorder %s50, %s66
      %p68 = scmp.eq.s32.totalorder %s30, 0
      %p69 = por %p67, %p68
      %s70 = ssub.s32 %s32, %s39
      %s71 = ssub.s32 %s31, %s43
      %s72 = sor.u32 %s70, %s71
      %p73 = scmp.eq.s32.totalorder %s72, 0
      %s75 = sadd.s32 %s74, 1
      %s76 = scalar_select %p73, %s74, %s75
      %p79 = pneg %p73
      %p80 = scmp.eq.s32.totalorder %s24, 1
      %p81 = por %p79, %p80
      %p82 = scmp.ne.s32.totalorder %s74, %s77
      %p83 = scmp.eq.s32.totalorder %s24, 0
      %p84 = por %p82, %p83
      %p85 = scmp.ne.s32.totalorder %s74, %s77
      %p86 = scmp.eq.s32.totalorder %s29, 1
      %p87 = por %p85, %p86
      %p88 = scmp.ne.s32.totalorder %s77, %s78
      %p89 = scmp.eq.s32.totalorder %s29, 0
      %p90 = por %p88, %p89
      %p91 = scmp.ne.s32.totalorder %s77, %s78
      %p92 = scmp.eq.s32.totalorder %s30, 1
      %p93 = por %p91, %p92
      %p95 = scmp.ne.s32.totalorder %s78, %s94
      %p96 = scmp.eq.s32.totalorder %s30, 0
      %p97 = por %p95, %p96
      %s98 = ssub.s32 %s31, %s43
      %p99 = scmp.eq.s32.totalorder %s98, 0
      %s101 = sadd.s32 %s100, 1
      %s102 = scalar_select %p99, %s100, %s101
      %p105 = pneg %p99
      %p106 = scmp.eq.s32.totalorder %s24, 1
      %p107 = por %p105, %p106
      %p108 = scmp.ne.s32.totalorder %s100, %s103
      %p109 = scmp.eq.s32.totalorder %s24, 0
      %p110 = por %p108, %p109
      %p111 = scmp.ne.s32.totalorder %s100, %s103
      %p112 = scmp.eq.s32.totalorder %s29, 1
      %p113 = por %p111, %p112
      %p114 = scmp.ne.s32.totalorder %s103, %s104
      %p115 = scmp.eq.s32.totalorder %s29, 0
      %p116 = por %p114, %p115
      %p117 = scmp.ne.s32.totalorder %s103, %s104
      %p118 = scmp.eq.s32.totalorder %s30, 1
      %p119 = por %p117, %p118
      %p121 = scmp.ne.s32.totalorder %s104, %s120
      %p122 = scmp.eq.s32.totalorder %s30, 0
      %p123 = por %p121, %p122
      %s124 = ssub.s32 %s31, %s43
      %p125 = scmp.eq.s32.totalorder %s124, 0
      %s127 = sadd.s32 %s126, 1
      %s128 = scalar_select %p125, %s126, %s127
      %p131 = pneg %p125
      %p132 = scmp.eq.s32.totalorder %s24, 1
      %p133 = por %p131, %p132
      %p134 = scmp.ne.s32.totalorder %s126, %s129
      %p135 = scmp.eq.s32.totalorder %s24, 0
      %p136 = por %p134, %p135
      %p137 = scmp.ne.s32.totalorder %s126, %s129
      %p138 = scmp.eq.s32.totalorder %s29, 1
      %p139 = por %p137, %p138
      %p140 = scmp.ne.s32.totalorder %s129, %s130
      %p141 = scmp.eq.s32.totalorder %s29, 0
      %p142 = por %p140, %p141
      %p143 = scmp.ne.s32.totalorder %s129, %s130
      %p144 = scmp.eq.s32.totalorder %s30, 1
      %p145 = por %p143, %p144
      %p147 = scmp.ne.s32.totalorder %s130, %s146
      %p148 = scmp.eq.s32.totalorder %s30, 0
      %p149 = por %p147, %p148
      %s150 = ssub.s32 %s32, %s39
      %s151 = ssub.s32 %s31, %s43
      %s152 = sor.u32 %s150, %s151
      %p153 = scmp.eq.s32.totalorder %s152, 0
      %s155 = sadd.s32 %s154, 1
      %s156 = scalar_select %p153, %s154, %s155
      %p159 = pneg %p153
      %p160 = scmp.eq.s32.totalorder %s24, 1
      %p161 = por %p159, %p160
      %p162 = scmp.ne.s32.totalorder %s154, %s157
      %p163 = scmp.eq.s32.totalorder %s24, 0
      %p164 = por %p162, %p163
      %p165 = scmp.ne.s32.totalorder %s154, %s157
      %p166 = scmp.eq.s32.totalorder %s29, 1
      %p167 = por %p165, %p166
      %p168 = scmp.ne.s32.totalorder %s157, %s158
      %p169 = scmp.eq.s32.totalorder %s29, 0
      %p170 = por %p168, %p169
      %p171 = scmp.ne.s32.totalorder %s157, %s158
      %p172 = scmp.eq.s32.totalorder %s30, 1
      %p173 = por %p171, %p172
      %p175 = scmp.ne.s32.totalorder %s158, %s174
      %p176 = scmp.eq.s32.totalorder %s30, 0
      %p177 = por %p175, %p176
      %s178 = ssub.s32 %s32, %s39
      %s179 = ssub.s32 %s31, %s43
      %s180 = sor.u32 %s178, %s179
      %p181 = scmp.eq.s32.totalorder %s180, 0
      %s183 = sadd.s32 %s182, 1
      %s184 = scalar_select %p181, %s182, %s183
      %p187 = pneg %p181
      %p188 = scmp.eq.s32.totalorder %s24, 1
      %p189 = por %p187, %p188
      %p190 = scmp.ne.s32.totalorder %s182, %s185
      %p191 = scmp.eq.s32.totalorder %s24, 0
      %p192 = por %p190, %p191
      %p193 = scmp.ne.s32.totalorder %s182, %s185
      %p194 = scmp.eq.s32.totalorder %s29, 1
      %p195 = por %p193, %p194
      %p196 = scmp.ne.s32.totalorder %s185, %s186
      %p197 = scmp.eq.s32.totalorder %s29, 0
      %p198 = por %p196, %p197
      %p199 = scmp.ne.s32.totalorder %s185, %s186
      %p200 = scmp.eq.s32.totalorder %s30, 1
      %p201 = por %p199, %p200
      %p203 = scmp.ne.s32.totalorder %s186, %s202
      %p204 = scmp.eq.s32.totalorder %s30, 0
      %p205 = por %p203, %p204
      %s206 = ssub.s32 %s32, %s39
      %s207 = ssub.s32 %s31, %s43
      %s208 = sor.u32 %s206, %s207
      %p209 = scmp.eq.s32.totalorder %s208, 0
      %s211 = sadd.s32 %s210, 1
      %s212 = scalar_select %p209, %s210, %s211
      %p215 = pneg %p209
      %p216 = scmp.eq.s32.totalorder %s24, 1
      %p217 = por %p215, %p216
      %p218 = scmp.ne.s32.totalorder %s210, %s213
      %p219 = scmp.eq.s32.totalorder %s24, 0
      %p220 = por %p218, %p219
      %p221 = scmp.ne.s32.totalorder %s210, %s213
      %p222 = scmp.eq.s32.totalorder %s29, 1
      %p223 = por %p221, %p222
      %p224 = scmp.ne.s32.totalorder %s213, %s214
      %p225 = scmp.eq.s32.totalorder %s29, 0
      %p226 = por %p224, %p225
      %p227 = scmp.ne.s32.totalorder %s213, %s214
      %p228 = scmp.eq.s32.totalorder %s30, 1
      %p229 = por %p227, %p228
      %p231 = scmp.ne.s32.totalorder %s214, %s230
      %p232 = scmp.eq.s32.totalorder %s30, 0
      %p233 = por %p231, %p232
      %s234 = ssub.s32 %s32, %s39
      %s235 = ssub.s32 %s31, %s43
      %s236 = sor.u32 %s234, %s235
      %p237 = scmp.eq.s32.totalorder %s236, 0
      %s239 = sadd.s32 %s238, 1
      %s240 = scalar_select %p237, %s238, %s239
      %p243 = pneg %p237
      %p244 = scmp.eq.s32.totalorder %s24, 1
      %p245 = por %p243, %p244
      %p246 = scmp.ne.s32.totalorder %s238, %s241
      %p247 = scmp.eq.s32.totalorder %s24, 0
      %p248 = por %p246, %p247
      %p249 = scmp.ne.s32.totalorder %s238, %s241
      %p250 = scmp.eq.s32.totalorder %s29, 1
      %p251 = por %p249, %p250
      %p252 = scmp.ne.s32.totalorder %s241, %s242
      %p253 = scmp.eq.s32.totalorder %s29, 0
      %p254 = por %p252, %p253
      %p255 = scmp.ne.s32.totalorder %s241, %s242
      %p256 = scmp.eq.s32.totalorder %s30, 1
      %p257 = por %p255, %p256
      %p259 = scmp.ne.s32.totalorder %s242, %s258
      %p260 = scmp.eq.s32.totalorder %s30, 0
      %p261 = por %p259, %p260
      %s262 = ssub.s32 %s32, %s39
      %s263 = ssub.s32 %s31, %s43
      %s264 = sor.u32 %s262, %s263
      %p265 = scmp.eq.s32.totalorder %s264, 0
      %s267 = sadd.s32 %s266, 1
      %s268 = scalar_select %p265, %s266, %s267
      %p271 = pneg %p265
      %p272 = scmp.eq.s32.totalorder %s24, 1
      %p273 = por %p271, %p272
      %p274 = scmp.ne.s32.totalorder %s266, %s269
      %p275 = scmp.eq.s32.totalorder %s24, 0
      %p276 = por %p274, %p275
      %p277 = scmp.ne.s32.totalorder %s266, %s269
      %p278 = scmp.eq.s32.totalorder %s29, 1
      %p279 = por %p277, %p278
      %p280 = scmp.ne.s32.totalorder %s269, %s270
      %p281 = scmp.eq.s32.totalorder %s29, 0
      %p282 = por %p280, %p281
      %p283 = scmp.ne.s32.totalorder %s269, %s270
      %p284 = scmp.eq.s32.totalorder %s30, 1
      %p285 = por %p283, %p284
      %p287 = scmp.ne.s32.totalorder %s270, %s286
      %p288 = scmp.eq.s32.totalorder %s30, 0
      %p289 = por %p287, %p288
      %p290 = scmp.le.s32.totalorder 1, %s24
      %p291 = scmp.lt.s32.totalorder %s24, 3
      %p292 = pnand %p290, %p291
      %p293 = pneg %p292
      // Predicated region
      $region9: #{_forward.1} parent=5 // pred_check
        _
      $region10: #{_forward.1} parent=5 // pred_check_branch
        %295 = sbr.rel (%p292) target = $region12
      $region11: #{_forward.1} parent=5 // pred_region
        %s296 = ssub.s32 %s24, 1
        // Predicated region
        $region13: #{_forward.1} parent=11 // pred_check
          %p297 = pneg %p62
        $region14: #{_forward.1} parent=11 // pred_check_branch
          %299 = sbr.rel (%p297) target = $region16
        $region15: #{_forward.1} parent=11 // pred_region
          %s300 = smul.u32 16, %s34
          %p301 = scmp.lt.s32.totalorder %s300, 15
          %s302 = scalar_select %p301, %s300, 15
          %s303 = smul.addr %s302, 8
          %s304 = scalar_lea.vmem %s0, %s303
          %s305 = smul.u32 16, %s34
        $region16: #{_forward.1} parent=11 // pred_fallthru
          _
      $region12: #{_forward.1} parent=5 // pred_fallthru
        _
      %p306 = scmp.lt.s32.totalorder %s24, 2
      // Predicated region
      $region17: #{_forward.1} parent=5 // pred_check
        %p307 = pneg %p306
      $region18: #{_forward.1} parent=5 // pred_check_branch
        %309 = sbr.rel (%p307) target = $region20
      $region19: #{_forward.1} parent=5 // pred_region
        // Predicated region
        $region21: #{_forward.1} parent=19 // pred_check
          %p310 = pneg %p84
        $region22: #{_forward.1} parent=19 // pred_check_branch
          %312 = sbr.rel (%p310) target = $region24
        $region23: #{_forward.1} parent=19 // pred_region
          %s313 = sand.u32 %s74, 1
          %s314 = sand.u32 %s74, 1
          %s315 = smul.addr %s314, 256
          %s316 = scalar_lea.vmem [#allocation2], %s315
          %s317 = smul.u32 2, %s32
          %s318 = smul.u32 16, %s31
          %s319 = smul.addr %s317, 32
          %s320 = sadd.s32 %s318, %s319
          %s321 = smul.addr %s320, 8
          %s322 = scalar_lea.vmem %s1, %s321
          // Predicated region
          $region25: #{_forward.1} parent=23 // pred_check
            _
          $region26: #{_forward.1} parent=23 // pred_check_branch
            %324 = sbr.rel (0) target = $region28
          $region27: #{_forward.1} parent=23 // pred_region
            // Predicated region
            $region29: #{_forward.1} parent=27 // pred_check
              _
            $region30: #{_forward.1} parent=27 // pred_check_branch
              %326 = sbr.rel (0) target = $region32
            $region31: #{_forward.1} parent=27 // pred_region
              loop: start=0, step=1, limit=1
              $region33: #{_forward.1} parent=31 // loop_pre_header
                _
              $region34: #{_forward.1} parent=31 // loop_header
                %s328 = sphi 0, %s332
                %p329 = scmp.ge.s32.totalorder %s328, 1
                %s333 = sphi %s322, %s322
                %s334 = sphi %s316, %s316
              $region35: #{_forward.1} parent=31 // loop_header_branch
                %331 = sbr.rel (%p329) target = $region39
              $region36: #{_forward.1} parent=31 // loop_body
                %v335 = vld [vmem:[%s333] sm:$0xff]
                %336 = vst [vmem:[%s334] sm:$0xff] %v335
                %v337 = vld [vmem:[%s333 + $0x8] sm:$0xff]
                %338 = vst [vmem:[%s334 + $0x8] sm:$0xff] %v337
                %v339 = vld [vmem:[%s333 + $0x10] sm:$0xff]
                %340 = vst [vmem:[%s334 + $0x10] sm:$0xff] %v339
                %v341 = vld [vmem:[%s333 + $0x18] sm:$0xff]
                %342 = vst [vmem:[%s334 + $0x18] sm:$0xff] %v341
                %v343 = vld [vmem:[%s333 + $0x20] sm:$0xff]
                %344 = vst [vmem:[%s334 + $0x20] sm:$0xff] %v343
                %v345 = vld [vmem:[%s333 + $0x28] sm:$0xff]
                %346 = vst [vmem:[%s334 + $0x28] sm:$0xff] %v345
                %v347 = vld [vmem:[%s333 + $0x30] sm:$0xff]
                %348 = vst [vmem:[%s334 + $0x30] sm:$0xff] %v347
                %v349 = vld [vmem:[%s333 + $0x38] sm:$0xff]
                %350 = vst [vmem:[%s334 + $0x38] sm:$0xff] %v349
                %v351 = vld [vmem:[%s333 + $0x40] sm:$0xff]
                %352 = vst [vmem:[%s334 + $0x40] sm:$0xff] %v351
                %v353 = vld [vmem:[%s333 + $0x48] sm:$0xff]
                %354 = vst [vmem:[%s334 + $0x48] sm:$0xff] %v353
                %v355 = vld [vmem:[%s333 + $0x50] sm:$0xff]
                %356 = vst [vmem:[%s334 + $0x50] sm:$0xff] %v355
                %v357 = vld [vmem:[%s333 + $0x58] sm:$0xff]
                %358 = vst [vmem:[%s334 + $0x58] sm:$0xff] %v357
                %v359 = vld [vmem:[%s333 + $0x60] sm:$0xff]
                %360 = vst [vmem:[%s334 + $0x60] sm:$0xff] %v359
                %v361 = vld [vmem:[%s333 + $0x68] sm:$0xff]
                %362 = vst [vmem:[%s334 + $0x68] sm:$0xff] %v361
                %v363 = vld [vmem:[%s333 + $0x70] sm:$0xff]
                %364 = vst [vmem:[%s334 + $0x70] sm:$0xff] %v363
                %v365 = vld [vmem:[%s333 + $0x78] sm:$0xff]
                %366 = vst [vmem:[%s334 + $0x78] sm:$0xff] %v365
                %v367 = vld [vmem:[%s333 + $0x100] sm:$0xff]
                %368 = vst [vmem:[%s334 + $0x80] sm:$0xff] %v367
                %v369 = vld [vmem:[%s333 + $0x108] sm:$0xff]
                %370 = vst [vmem:[%s334 + $0x88] sm:$0xff] %v369
                %v371 = vld [vmem:[%s333 + $0x110] sm:$0xff]
                %372 = vst [vmem:[%s334 + $0x90] sm:$0xff] %v371
                %v373 = vld [vmem:[%s333 + $0x118] sm:$0xff]
                %374 = vst [vmem:[%s334 + $0x98] sm:$0xff] %v373
                %v375 = vld [vmem:[%s333 + $0x120] sm:$0xff]
                %376 = vst [vmem:[%s334 + $0xa0] sm:$0xff] %v375
                %v377 = vld [vmem:[%s333 + $0x128] sm:$0xff]
                %378 = vst [vmem:[%s334 + $0xa8] sm:$0xff] %v377
                %v379 = vld [vmem:[%s333 + $0x130] sm:$0xff]
                %380 = vst [vmem:[%s334 + $0xb0] sm:$0xff] %v379
                %v381 = vld [vmem:[%s333 + $0x138] sm:$0xff]
                %382 = vst [vmem:[%s334 + $0xb8] sm:$0xff] %v381
                %v383 = vld [vmem:[%s333 + $0x140] sm:$0xff]
                %384 = vst [vmem:[%s334 + $0xc0] sm:$0xff] %v383
                %v385 = vld [vmem:[%s333 + $0x148] sm:$0xff]
                %386 = vst [vmem:[%s334 + $0xc8] sm:$0xff] %v385
                %v387 = vld [vmem:[%s333 + $0x150] sm:$0xff]
                %388 = vst [vmem:[%s334 + $0xd0] sm:$0xff] %v387
                %v389 = vld [vmem:[%s333 + $0x158] sm:$0xff]
                %390 = vst [vmem:[%s334 + $0xd8] sm:$0xff] %v389
                %v391 = vld [vmem:[%s333 + $0x160] sm:$0xff]
                %392 = vst [vmem:[%s334 + $0xe0] sm:$0xff] %v391
                %v393 = vld [vmem:[%s333 + $0x168] sm:$0xff]
                %394 = vst [vmem:[%s334 + $0xe8] sm:$0xff] %v393
                %v395 = vld [vmem:[%s333 + $0x170] sm:$0xff]
                %396 = vst [vmem:[%s334 + $0xf0] sm:$0xff] %v395
                %v397 = vld [vmem:[%s333 + $0x178] sm:$0xff]
                %398 = vst [vmem:[%s334 + $0xf8] sm:$0xff] %v397
              $region37: #{_forward.1} parent=31 // loop_footer
                %s332 = sadd.s32 1, %s328
              $region38: #{_forward.1} parent=31 // loop_footer_branch
                %327 = sbr.rel target = $region34
              $region39: #{_forward.1} parent=31 // loop_exit
                _
            $region32: #{_forward.1} parent=27 // pred_fallthru
              _
            // Predicated region
            $region40: #{_forward.1} parent=27 // pred_check
              _
            $region41: #{_forward.1} parent=27 // pred_check_branch
              %400 = sbr.rel target = $region43
            $region42: #{_forward.1} parent=27 // pred_region
              _
            $region43: #{_forward.1} parent=27 // pred_fallthru
              _
          $region28: #{_forward.1} parent=23 // pred_fallthru
            _
          %401 = vnop
        $region24: #{_forward.1} parent=19 // pred_fallthru
          _
        // Predicated region
        $region44: #{_forward.1} parent=19 // pred_check
          %p402 = pneg %p110
        $region45: #{_forward.1} parent=19 // pred_check_branch
          %404 = sbr.rel (%p402) target = $region47
        $region46: #{_forward.1} parent=19 // pred_region
          %s405 = sand.u32 %s100, 1
          %s406 = sand.u32 %s100, 1
          %s407 = smul.addr %s406, 640
          %s408 = scalar_lea.vmem [#allocation3], %s407
          %s409 = smul.u32 16, %s31
          %s410 = smul.addr %s409, 8
          %s411 = scalar_lea.vmem %s2, %s410
          // Predicated region
          $region48: #{_forward.1} parent=46 // pred_check
            _
          $region49: #{_forward.1} parent=46 // pred_check_branch
            %413 = sbr.rel (0) target = $region51
          $region50: #{_forward.1} parent=46 // pred_region
            // Predicated region
            $region52: #{_forward.1} parent=50 // pred_check
              _
            $region53: #{_forward.1} parent=50 // pred_check_branch
              %415 = sbr.rel (0) target = $region55
            $region54: #{_forward.1} parent=50 // pred_region
              loop: start=0, step=1, limit=1
              $region56: #{_forward.1} parent=54 // loop_pre_header
                _
              $region57: #{_forward.1} parent=54 // loop_header
                %s417 = sphi 0, %s421
                %p418 = scmp.ge.s32.totalorder %s417, 1
                %s422 = sphi %s411, %s411
                %s423 = sphi %s408, %s408
              $region58: #{_forward.1} parent=54 // loop_header_branch
                %420 = sbr.rel (%p418) target = $region62
              $region59: #{_forward.1} parent=54 // loop_body
                %v424 = vld [vmem:[%s422] sm:$0xff]
                %425 = vst [vmem:[%s423] sm:$0xff] %v424
                %v426 = vld [vmem:[%s422 + $0x8] sm:$0xff]
                %427 = vst [vmem:[%s423 + $0x8] sm:$0xff] %v426
                %v428 = vld [vmem:[%s422 + $0x10] sm:$0xff]
                %429 = vst [vmem:[%s423 + $0x10] sm:$0xff] %v428
                %v430 = vld [vmem:[%s422 + $0x18] sm:$0xff]
                %431 = vst [vmem:[%s423 + $0x18] sm:$0xff] %v430
                %v432 = vld [vmem:[%s422 + $0x20] sm:$0xff]
                %433 = vst [vmem:[%s423 + $0x20] sm:$0xff] %v432
                %v434 = vld [vmem:[%s422 + $0x28] sm:$0xff]
                %435 = vst [vmem:[%s423 + $0x28] sm:$0xff] %v434
                %v436 = vld [vmem:[%s422 + $0x30] sm:$0xff]
                %437 = vst [vmem:[%s423 + $0x30] sm:$0xff] %v436
                %v438 = vld [vmem:[%s422 + $0x38] sm:$0xff]
                %439 = vst [vmem:[%s423 + $0x38] sm:$0xff] %v438
                %v440 = vld [vmem:[%s422 + $0x40] sm:$0xff]
                %441 = vst [vmem:[%s423 + $0x40] sm:$0xff] %v440
                %v442 = vld [vmem:[%s422 + $0x48] sm:$0xff]
                %443 = vst [vmem:[%s423 + $0x48] sm:$0xff] %v442
                %v444 = vld [vmem:[%s422 + $0x50] sm:$0xff]
                %445 = vst [vmem:[%s423 + $0x50] sm:$0xff] %v444
                %v446 = vld [vmem:[%s422 + $0x58] sm:$0xff]
                %447 = vst [vmem:[%s423 + $0x58] sm:$0xff] %v446
                %v448 = vld [vmem:[%s422 + $0x60] sm:$0xff]
                %449 = vst [vmem:[%s423 + $0x60] sm:$0xff] %v448
                %v450 = vld [vmem:[%s422 + $0x68] sm:$0xff]
                %451 = vst [vmem:[%s423 + $0x68] sm:$0xff] %v450
                %v452 = vld [vmem:[%s422 + $0x70] sm:$0xff]
                %453 = vst [vmem:[%s423 + $0x70] sm:$0xff] %v452
                %v454 = vld [vmem:[%s422 + $0x78] sm:$0xff]
                %455 = vst [vmem:[%s423 + $0x78] sm:$0xff] %v454
                %v456 = vld [vmem:[%s422 + $0x100] sm:$0xff]
                %457 = vst [vmem:[%s423 + $0x80] sm:$0xff] %v456
                %v458 = vld [vmem:[%s422 + $0x108] sm:$0xff]
                %459 = vst [vmem:[%s423 + $0x88] sm:$0xff] %v458
                %v460 = vld [vmem:[%s422 + $0x110] sm:$0xff]
                %461 = vst [vmem:[%s423 + $0x90] sm:$0xff] %v460
                %v462 = vld [vmem:[%s422 + $0x118] sm:$0xff]
                %463 = vst [vmem:[%s423 + $0x98] sm:$0xff] %v462
                %v464 = vld [vmem:[%s422 + $0x120] sm:$0xff]
                %465 = vst [vmem:[%s423 + $0xa0] sm:$0xff] %v464
                %v466 = vld [vmem:[%s422 + $0x128] sm:$0xff]
                %467 = vst [vmem:[%s423 + $0xa8] sm:$0xff] %v466
                %v468 = vld [vmem:[%s422 + $0x130] sm:$0xff]
                %469 = vst [vmem:[%s423 + $0xb0] sm:$0xff] %v468
                %v470 = vld [vmem:[%s422 + $0x138] sm:$0xff]
                %471 = vst [vmem:[%s423 + $0xb8] sm:$0xff] %v470
                %v472 = vld [vmem:[%s422 + $0x140] sm:$0xff]
                %473 = vst [vmem:[%s423 + $0xc0] sm:$0xff] %v472
                %v474 = vld [vmem:[%s422 + $0x148] sm:$0xff]
                %475 = vst [vmem:[%s423 + $0xc8] sm:$0xff] %v474
                %v476 = vld [vmem:[%s422 + $0x150] sm:$0xff]
                %477 = vst [vmem:[%s423 + $0xd0] sm:$0xff] %v476
                %v478 = vld [vmem:[%s422 + $0x158] sm:$0xff]
                %479 = vst [vmem:[%s423 + $0xd8] sm:$0xff] %v478
                %v480 = vld [vmem:[%s422 + $0x160] sm:$0xff]
                %481 = vst [vmem:[%s423 + $0xe0] sm:$0xff] %v480
                %v482 = vld [vmem:[%s422 + $0x168] sm:$0xff]
                %483 = vst [vmem:[%s423 + $0xe8] sm:$0xff] %v482
                %v484 = vld [vmem:[%s422 + $0x170] sm:$0xff]
                %485 = vst [vmem:[%s423 + $0xf0] sm:$0xff] %v484
                %v486 = vld [vmem:[%s422 + $0x178] sm:$0xff]
                %487 = vst [vmem:[%s423 + $0xf8] sm:$0xff] %v486
                %v488 = vld [vmem:[%s422 + $0x200] sm:$0xff]
                %489 = vst [vmem:[%s423 + $0x100] sm:$0xff] %v488
                %v490 = vld [vmem:[%s422 + $0x208] sm:$0xff]
                %491 = vst [vmem:[%s423 + $0x108] sm:$0xff] %v490
                %v492 = vld [vmem:[%s422 + $0x210] sm:$0xff]
                %493 = vst [vmem:[%s423 + $0x110] sm:$0xff] %v492
                %v494 = vld [vmem:[%s422 + $0x218] sm:$0xff]
                %495 = vst [vmem:[%s423 + $0x118] sm:$0xff] %v494
                %v496 = vld [vmem:[%s422 + $0x220] sm:$0xff]
                %497 = vst [vmem:[%s423 + $0x120] sm:$0xff] %v496
                %v498 = vld [vmem:[%s422 + $0x228] sm:$0xff]
                %499 = vst [vmem:[%s423 + $0x128] sm:$0xff] %v498
                %v500 = vld [vmem:[%s422 + $0x230] sm:$0xff]
                %501 = vst [vmem:[%s423 + $0x130] sm:$0xff] %v500
                %v502 = vld [vmem:[%s422 + $0x238] sm:$0xff]
                %503 = vst [vmem:[%s423 + $0x138] sm:$0xff] %v502
                %v504 = vld [vmem:[%s422 + $0x240] sm:$0xff]
                %505 = vst [vmem:[%s423 + $0x140] sm:$0xff] %v504
                %v506 = vld [vmem:[%s422 + $0x248] sm:$0xff]
                %507 = vst [vmem:[%s423 + $0x148] sm:$0xff] %v506
                %v508 = vld [vmem:[%s422 + $0x250] sm:$0xff]
                %509 = vst [vmem:[%s423 + $0x150] sm:$0xff] %v508
                %v510 = vld [vmem:[%s422 + $0x258] sm:$0xff]
                %511 = vst [vmem:[%s423 + $0x158] sm:$0xff] %v510
                %v512 = vld [vmem:[%s422 + $0x260] sm:$0xff]
                %513 = vst [vmem:[%s423 + $0x160] sm:$0xff] %v512
                %v514 = vld [vmem:[%s422 + $0x268] sm:$0xff]
                %515 = vst [vmem:[%s423 + $0x168] sm:$0xff] %v514
                %v516 = vld [vmem:[%s422 + $0x270] sm:$0xff]
                %517 = vst [vmem:[%s423 + $0x170] sm:$0xff] %v516
                %v518 = vld [vmem:[%s422 + $0x278] sm:$0xff]
                %519 = vst [vmem:[%s423 + $0x178] sm:$0xff] %v518
                %v520 = vld [vmem:[%s422 + $0x300] sm:$0xff]
                %521 = vst [vmem:[%s423 + $0x180] sm:$0xff] %v520
                %v522 = vld [vmem:[%s422 + $0x308] sm:$0xff]
                %523 = vst [vmem:[%s423 + $0x188] sm:$0xff] %v522
                %v524 = vld [vmem:[%s422 + $0x310] sm:$0xff]
                %525 = vst [vmem:[%s423 + $0x190] sm:$0xff] %v524
                %v526 = vld [vmem:[%s422 + $0x318] sm:$0xff]
                %527 = vst [vmem:[%s423 + $0x198] sm:$0xff] %v526
                %v528 = vld [vmem:[%s422 + $0x320] sm:$0xff]
                %529 = vst [vmem:[%s423 + $0x1a0] sm:$0xff] %v528
                %v530 = vld [vmem:[%s422 + $0x328] sm:$0xff]
                %531 = vst [vmem:[%s423 + $0x1a8] sm:$0xff] %v530
                %v532 = vld [vmem:[%s422 + $0x330] sm:$0xff]
                %533 = vst [vmem:[%s423 + $0x1b0] sm:$0xff] %v532
                %v534 = vld [vmem:[%s422 + $0x338] sm:$0xff]
                %535 = vst [vmem:[%s423 + $0x1b8] sm:$0xff] %v534
                %v536 = vld [vmem:[%s422 + $0x340] sm:$0xff]
                %537 = vst [vmem:[%s423 + $0x1c0] sm:$0xff] %v536
                %v538 = vld [vmem:[%s422 + $0x348] sm:$0xff]
                %539 = vst [vmem:[%s423 + $0x1c8] sm:$0xff] %v538
                %v540 = vld [vmem:[%s422 + $0x350] sm:$0xff]
                %541 = vst [vmem:[%s423 + $0x1d0] sm:$0xff] %v540
                %v542 = vld [vmem:[%s422 + $0x358] sm:$0xff]
                %543 = vst [vmem:[%s423 + $0x1d8] sm:$0xff] %v542
                %v544 = vld [vmem:[%s422 + $0x360] sm:$0xff]
                %545 = vst [vmem:[%s423 + $0x1e0] sm:$0xff] %v544
                %v546 = vld [vmem:[%s422 + $0x368] sm:$0xff]
                %547 = vst [vmem:[%s423 + $0x1e8] sm:$0xff] %v546
                %v548 = vld [vmem:[%s422 + $0x370] sm:$0xff]
                %549 = vst [vmem:[%s423 + $0x1f0] sm:$0xff] %v548
                %v550 = vld [vmem:[%s422 + $0x378] sm:$0xff]
                %551 = vst [vmem:[%s423 + $0x1f8] sm:$0xff] %v550
                %v552 = vld [vmem:[%s422 + $0x400] sm:$0xff]
                %553 = vst [vmem:[%s423 + $0x200] sm:$0xff] %v552
                %v554 = vld [vmem:[%s422 + $0x408] sm:$0xff]
                %555 = vst [vmem:[%s423 + $0x208] sm:$0xff] %v554
                %v556 = vld [vmem:[%s422 + $0x410] sm:$0xff]
                %557 = vst [vmem:[%s423 + $0x210] sm:$0xff] %v556
                %v558 = vld [vmem:[%s422 + $0x418] sm:$0xff]
                %559 = vst [vmem:[%s423 + $0x218] sm:$0xff] %v558
                %v560 = vld [vmem:[%s422 + $0x420] sm:$0xff]
                %561 = vst [vmem:[%s423 + $0x220] sm:$0xff] %v560
                %v562 = vld [vmem:[%s422 + $0x428] sm:$0xff]
                %563 = vst [vmem:[%s423 + $0x228] sm:$0xff] %v562
                %v564 = vld [vmem:[%s422 + $0x430] sm:$0xff]
                %565 = vst [vmem:[%s423 + $0x230] sm:$0xff] %v564
                %v566 = vld [vmem:[%s422 + $0x438] sm:$0xff]
                %567 = vst [vmem:[%s423 + $0x238] sm:$0xff] %v566
                %v568 = vld [vmem:[%s422 + $0x440] sm:$0xff]
                %569 = vst [vmem:[%s423 + $0x240] sm:$0xff] %v568
                %v570 = vld [vmem:[%s422 + $0x448] sm:$0xff]
                %571 = vst [vmem:[%s423 + $0x248] sm:$0xff] %v570
                %v572 = vld [vmem:[%s422 + $0x450] sm:$0xff]
                %573 = vst [vmem:[%s423 + $0x250] sm:$0xff] %v572
                %v574 = vld [vmem:[%s422 + $0x458] sm:$0xff]
                %575 = vst [vmem:[%s423 + $0x258] sm:$0xff] %v574
                %v576 = vld [vmem:[%s422 + $0x460] sm:$0xff]
                %577 = vst [vmem:[%s423 + $0x260] sm:$0xff] %v576
                %v578 = vld [vmem:[%s422 + $0x468] sm:$0xff]
                %579 = vst [vmem:[%s423 + $0x268] sm:$0xff] %v578
                %v580 = vld [vmem:[%s422 + $0x470] sm:$0xff]
                %581 = vst [vmem:[%s423 + $0x270] sm:$0xff] %v580
                %v582 = vld [vmem:[%s422 + $0x478] sm:$0xff]
                %583 = vst [vmem:[%s423 + $0x278] sm:$0xff] %v582
              $region60: #{_forward.1} parent=54 // loop_footer
                %s421 = sadd.s32 1, %s417
              $region61: #{_forward.1} parent=54 // loop_footer_branch
                %416 = sbr.rel target = $region57
              $region62: #{_forward.1} parent=54 // loop_exit
                _
            $region55: #{_forward.1} parent=50 // pred_fallthru
              _
            // Predicated region
            $region63: #{_forward.1} parent=50 // pred_check
              _
            $region64: #{_forward.1} parent=50 // pred_check_branch
              %585 = sbr.rel target = $region66
            $region65: #{_forward.1} parent=50 // pred_region
              _
            $region66: #{_forward.1} parent=50 // pred_fallthru
              _
          $region51: #{_forward.1} parent=46 // pred_fallthru
            _
          %586 = vnop
        $region47: #{_forward.1} parent=19 // pred_fallthru
          _
        // Predicated region
        $region67: #{_forward.1} parent=19 // pred_check
          %p587 = pneg %p136
        $region68: #{_forward.1} parent=19 // pred_check_branch
          %589 = sbr.rel (%p587) target = $region70
        $region69: #{_forward.1} parent=19 // pred_region
          %s590 = sand.u32 %s126, 1
          %s591 = sand.u32 %s126, 1
          %s592 = smul.addr %s591, 80
          %s593 = scalar_lea.vmem [#allocation4], %s592
          %s594 = smul.u32 16, %s31
          %s595 = scalar_lea.vmem %s3, %s594
          // Predicated region
          $region71: #{_forward.1} parent=69 // pred_check
            _
          $region72: #{_forward.1} parent=69 // pred_check_branch
            %597 = sbr.rel (0) target = $region74
          $region73: #{_forward.1} parent=69 // pred_region
            // Predicated region
            $region75: #{_forward.1} parent=73 // pred_check
              _
            $region76: #{_forward.1} parent=73 // pred_check_branch
              %599 = sbr.rel (0) target = $region78
            $region77: #{_forward.1} parent=73 // pred_region
              loop: start=0, step=1, limit=1
              $region79: #{_forward.1} parent=77 // loop_pre_header
                _
              $region80: #{_forward.1} parent=77 // loop_header
                %s601 = sphi 0, %s605
                %p602 = scmp.ge.s32.totalorder %s601, 1
                %s606 = sphi %s595, %s595
                %s607 = sphi %s593, %s593
              $region81: #{_forward.1} parent=77 // loop_header_branch
                %604 = sbr.rel (%p602) target = $region85
              $region82: #{_forward.1} parent=77 // loop_body
                %v608 = vld [vmem:[%s606] sm:$0xff]
                %609 = vst [vmem:[%s607] sm:$0xff] %v608
                %v610 = vld [vmem:[%s606 + $0x8] sm:$0xff]
                %611 = vst [vmem:[%s607 + $0x8] sm:$0xff] %v610
                %v612 = vld [vmem:[%s606 + $0x20] sm:$0xff]
                %613 = vst [vmem:[%s607 + $0x10] sm:$0xff] %v612
                %v614 = vld [vmem:[%s606 + $0x28] sm:$0xff]
                %615 = vst [vmem:[%s607 + $0x18] sm:$0xff] %v614
                %v616 = vld [vmem:[%s606 + $0x40] sm:$0xff]
                %617 = vst [vmem:[%s607 + $0x20] sm:$0xff] %v616
                %v618 = vld [vmem:[%s606 + $0x48] sm:$0xff]
                %619 = vst [vmem:[%s607 + $0x28] sm:$0xff] %v618
                %v620 = vld [vmem:[%s606 + $0x60] sm:$0xff]
                %621 = vst [vmem:[%s607 + $0x30] sm:$0xff] %v620
                %v622 = vld [vmem:[%s606 + $0x68] sm:$0xff]
                %623 = vst [vmem:[%s607 + $0x38] sm:$0xff] %v622
                %v624 = vld [vmem:[%s606 + $0x80] sm:$0xff]
                %625 = vst [vmem:[%s607 + $0x40] sm:$0xff] %v624
                %v626 = vld [vmem:[%s606 + $0x88] sm:$0xff]
                %627 = vst [vmem:[%s607 + $0x48] sm:$0xff] %v626
              $region83: #{_forward.1} parent=77 // loop_footer
                %s605 = sadd.s32 1, %s601
              $region84: #{_forward.1} parent=77 // loop_footer_branch
                %600 = sbr.rel target = $region80
              $region85: #{_forward.1} parent=77 // loop_exit
                _
            $region78: #{_forward.1} parent=73 // pred_fallthru
              _
            // Predicated region
            $region86: #{_forward.1} parent=73 // pred_check
              _
            $region87: #{_forward.1} parent=73 // pred_check_branch
              %629 = sbr.rel target = $region89
            $region88: #{_forward.1} parent=73 // pred_region
              _
            $region89: #{_forward.1} parent=73 // pred_fallthru
              _
          $region74: #{_forward.1} parent=69 // pred_fallthru
            _
          %630 = vnop
        $region70: #{_forward.1} parent=19 // pred_fallthru
          _
      $region20: #{_forward.1} parent=5 // pred_fallthru
        _
      %p631 = scmp.le.s32.totalorder 1, %s24
      %p632 = scmp.lt.s32.totalorder %s24, 3
      %p633 = pnand %p631, %p632
      %p634 = pneg %p633
      // Predicated region
      $region90: #{_forward.1} parent=5 // pred_check
        _
      $region91: #{_forward.1} parent=5 // pred_check_branch
        %636 = sbr.rel (%p633) target = $region93
      $region92: #{_forward.1} parent=5 // pred_region
        %s637 = ssub.s32 %s24, 1
        %s638 = sand.u32 %s77, 1
        %s639 = sand.u32 %s77, 1
        %s640 = smul.addr %s639, 256
        %s641 = scalar_lea.vmem [#allocation2], %s640
        // Predicated region
        $region94: #{_forward.1} parent=92 // pred_check
          %p642 = pneg %p90
        $region95: #{_forward.1} parent=92 // pred_check_branch
          %644 = sbr.rel (%p642) target = $region97
        $region96: #{_forward.1} parent=92 // pred_region
          _
        $region97: #{_forward.1} parent=92 // pred_fallthru
          _
        %s645 = sand.u32 %s103, 1
        %s646 = sand.u32 %s103, 1
        %s647 = smul.addr %s646, 640
        %s648 = scalar_lea.vmem [#allocation3], %s647
        // Predicated region
        $region98: #{_forward.1} parent=92 // pred_check
          %p649 = pneg %p116
        $region99: #{_forward.1} parent=92 // pred_check_branch
          %651 = sbr.rel (%p649) target = $region101
        $region100: #{_forward.1} parent=92 // pred_region
          _
        $region101: #{_forward.1} parent=92 // pred_fallthru
          _
        %s652 = sand.u32 %s129, 1
        %s653 = sand.u32 %s129, 1
        %s654 = smul.addr %s653, 80
        %s655 = scalar_lea.vmem [#allocation4], %s654
        // Predicated region
        $region102: #{_forward.1} parent=92 // pred_check
          %p656 = pneg %p142
        $region103: #{_forward.1} parent=92 // pred_check_branch
          %658 = sbr.rel (%p656) target = $region105
        $region104: #{_forward.1} parent=92 // pred_region
          _
        $region105: #{_forward.1} parent=92 // pred_fallthru
          _
        %s659 = smul.u32 16, %s34
        %p660 = scmp.lt.s32.totalorder %s659, 15
        %s661 = scalar_select %p660, %s659, 15
        %s662 = smul.addr %s661, 8
        %s663 = scalar_lea.vmem %s0, %s662
        %p664 = pneg %p62
        %p665 = pneg %p59
        %s666 = sand.u32 %s77, 1
        %s667 = sand.u32 %s77, 1
        %s668 = smul.addr %s667, 256
        %s669 = scalar_lea.vmem [#allocation2], %s668
        %p670 = pneg %p90
        %p671 = pneg %p87
        %s672 = sand.u32 %s103, 1
        %s673 = sand.u32 %s103, 1
        %s674 = smul.addr %s673, 640
        %s675 = scalar_lea.vmem [#allocation3], %s674
        %p676 = pneg %p116
        %p677 = pneg %p113
        %s678 = sand.u32 %s129, 1
        %s679 = sand.u32 %s129, 1
        %s680 = smul.addr %s679, 80
        %s681 = scalar_lea.vmem [#allocation4], %s680
        %p682 = pneg %p142
        %p683 = pneg %p139
        %p684 = pneg %p170
        %p685 = pneg %p167
        %s686 = sand.u32 %s157, 1
        %s687 = scalar_lea.sflag [#allocation6], %s686
        %s688 = sand.u32 %s157, 1
        %s689 = smul.addr %s688, 256
        %s690 = scalar_lea.vmem [#allocation5], %s689
        %p691 = pneg %p198
        %p692 = pneg %p195
        %s693 = sand.u32 %s29, 1
        %s694 = scalar_lea.sflag [#allocation8], %s693
        %s695 = sand.u32 %s185, 1
        %s696 = smul.addr %s695, 256
        %s697 = scalar_lea.vmem [#allocation7], %s696
        %p698 = pneg %p226
        %p699 = pneg %p223
        %s700 = sand.u32 %s29, 1
        %s701 = scalar_lea.sflag [#allocation8], %s700
        %s702 = sand.u32 %s213, 1
        %s703 = smul.addr %s702, 256
        %s704 = scalar_lea.vmem [#allocation9], %s703
        %p705 = pneg %p254
        %p706 = pneg %p251
        %s707 = sand.u32 %s29, 1
        %s708 = scalar_lea.sflag [#allocation11], %s707
        %s709 = sand.u32 %s241, 1
        %s710 = smul.addr %s709, 256
        %s711 = scalar_lea.vmem [#allocation10], %s710
        %p712 = pneg %p282
        %p713 = pneg %p279
        %s714 = sand.u32 %s29, 1
        %s715 = scalar_lea.sflag [#allocation11], %s714
        %s716 = sand.u32 %s269, 1
        %s717 = smul.addr %s716, 256
        %s718 = scalar_lea.vmem [#allocation12], %s717
        %s719 = smul.u32 16, %s34
        %p720 = scmp.lt.s32.totalorder %s719, 15
        %s721 = scalar_select %p720, %s719, 15
        %s722 = smul.addr %s721, 8
        %s723 = scalar_lea.vmem %s0, %s722
        %s724 = smul.u32 16, %s34
        %s725 = smul.u32 2, %s34
        %s726 = smul.u32 16, %s33
        %s727 = smul.u32 16, %s33
        %s728 = smul.u32 16, %s33
        %s729 = smul.u32 2, %s34
        %s730 = smul.u32 16, %s33
        %s731 = smul.u32 2, %s34
        %s732 = smul.u32 16, %s33
        %s733 = smul.u32 2, %s34
        %s734 = smul.u32 16, %s33
        %s735 = smul.u32 2, %s34
        %s736 = smul.u32 16, %s33
        %s737 = smul.u32 2, %s34
        %s738 = smul.u32 16, %s33
        %v739 = vld [vmem:[%s641] sm:$0xff]
        %v740 = vld [vmem:[%s641 + $0x8] sm:$0xff]
        %v741 = vld [vmem:[%s641 + $0x10] sm:$0xff]
        %v742 = vld [vmem:[%s641 + $0x18] sm:$0xff]
        %v743 = vld [vmem:[%s641 + $0x20] sm:$0xff]
        %v744 = vld [vmem:[%s641 + $0x28] sm:$0xff]
        %v745 = vld [vmem:[%s641 + $0x30] sm:$0xff]
        %v746 = vld [vmem:[%s641 + $0x38] sm:$0xff]
        %v747 = vld [vmem:[%s641 + $0x40] sm:$0xff]
        %v748 = vld [vmem:[%s641 + $0x48] sm:$0xff]
        %v749 = vld [vmem:[%s641 + $0x50] sm:$0xff]
        %v750 = vld [vmem:[%s641 + $0x58] sm:$0xff]
        %v751 = vld [vmem:[%s641 + $0x60] sm:$0xff]
        %v752 = vld [vmem:[%s641 + $0x68] sm:$0xff]
        %v753 = vld [vmem:[%s641 + $0x70] sm:$0xff]
        %v754 = vld [vmem:[%s641 + $0x78] sm:$0xff]
        %v755 = vld [vmem:[%s641 + $0x80] sm:$0xff]
        %v756 = vld [vmem:[%s641 + $0x88] sm:$0xff]
        %v757 = vld [vmem:[%s641 + $0x90] sm:$0xff]
        %v758 = vld [vmem:[%s641 + $0x98] sm:$0xff]
        %v759 = vld [vmem:[%s641 + $0xa0] sm:$0xff]
        %v760 = vld [vmem:[%s641 + $0xa8] sm:$0xff]
        %v761 = vld [vmem:[%s641 + $0xb0] sm:$0xff]
        %v762 = vld [vmem:[%s641 + $0xb8] sm:$0xff]
        %v763 = vld [vmem:[%s641 + $0xc0] sm:$0xff]
        %v764 = vld [vmem:[%s641 + $0xc8] sm:$0xff]
        %v765 = vld [vmem:[%s641 + $0xd0] sm:$0xff]
        %v766 = vld [vmem:[%s641 + $0xd8] sm:$0xff]
        %v767 = vld [vmem:[%s641 + $0xe0] sm:$0xff]
        %v768 = vld [vmem:[%s641 + $0xe8] sm:$0xff]
        %v769 = vld [vmem:[%s641 + $0xf0] sm:$0xff]
        %v770 = vld [vmem:[%s641 + $0xf8] sm:$0xff]
        %v771 = vld [vmem:[%s723] sm:$0x1]
        %v772 = vld [vmem:[%s723 + $0x8] sm:$0x1]
        %v773 = vld [vmem:[%s723 + $0x10] sm:$0x1]
        %v774 = vld [vmem:[%s723 + $0x18] sm:$0x1]
        %v775 = vld [vmem:[%s723 + $0x20] sm:$0x1]
        %v776 = vld [vmem:[%s723 + $0x28] sm:$0x1]
        %v777 = vld [vmem:[%s723 + $0x30] sm:$0x1]
        %v778 = vld [vmem:[%s723 + $0x38] sm:$0x1]
        %v779 = vld [vmem:[%s723 + $0x40] sm:$0x1]
        %v780 = vld [vmem:[%s723 + $0x48] sm:$0x1]
        %v781 = vld [vmem:[%s723 + $0x50] sm:$0x1]
        %v782 = vld [vmem:[%s723 + $0x58] sm:$0x1]
        %v783 = vld [vmem:[%s723 + $0x60] sm:$0x1]
        %v784 = vld [vmem:[%s723 + $0x68] sm:$0x1]
        %v785 = vld [vmem:[%s723 + $0x70] sm:$0x1]
        %v786 = vld [vmem:[%s723 + $0x78] sm:$0x1]
        %v787 = vld [vmem:[%s648] sm:$0xff]
        %v788 = vld [vmem:[%s648 + $0x8] sm:$0xff]
        %v789 = vld [vmem:[%s648 + $0x10] sm:$0xff]
        %v790 = vld [vmem:[%s648 + $0x18] sm:$0xff]
        %v791 = vld [vmem:[%s648 + $0x20] sm:$0xff]
        %v792 = vld [vmem:[%s648 + $0x28] sm:$0xff]
        %v793 = vld [vmem:[%s648 + $0x30] sm:$0xff]
        %v794 = vld [vmem:[%s648 + $0x38] sm:$0xff]
        %v795 = vld [vmem:[%s648 + $0x40] sm:$0xff]
        %v796 = vld [vmem:[%s648 + $0x48] sm:$0xff]
        %v797 = vld [vmem:[%s648 + $0x50] sm:$0xff]
        %v798 = vld [vmem:[%s648 + $0x58] sm:$0xff]
        %v799 = vld [vmem:[%s648 + $0x60] sm:$0xff]
        %v800 = vld [vmem:[%s648 + $0x68] sm:$0xff]
        %v801 = vld [vmem:[%s648 + $0x70] sm:$0xff]
        %v802 = vld [vmem:[%s648 + $0x78] sm:$0xff]
        %v803 = vld [vmem:[%s655] sm:$0xff]
        %v804 = vld [vmem:[%s655 + $0x8] sm:$0xff]
        %v807 = vperm.slane %v803, 0
        %v808 = vperm.slane %v803, 1
        %v809 = vperm.slane %v803, 2
        %v810 = vperm.slane %v803, 3
        %v811 = vperm.slane %v803, 4
        %v812 = vperm.slane %v803, 5
        %v813 = vperm.slane %v803, 6
        %v814 = vperm.slane %v803, 7
        %v815 = vperm.slane %v804, 0
        %v816 = vperm.slane %v804, 1
        %v817 = vperm.slane %v804, 2
        %v818 = vperm.slane %v804, 3
        %v819 = vperm.slane %v804, 4
        %v820 = vperm.slane %v804, 5
        %v821 = vperm.slane %v804, 6
        %v822 = vperm.slane %v804, 7
        %v855 = vrot.slane %v772, 7
        %vm856 = vcmask 1041409
        %v857 = vsel %vm856, %v855, %v771
        %v858 = vrot.slane %v773, 6
        %vm859 = vcmask 1042434
        %v860 = vsel %vm859, %v858, %v857
        %v861 = vrot.slane %v774, 5
        %vm862 = vcmask 1043459
        %v863 = vsel %vm862, %v861, %v860
        %v864 = vrot.slane %v775, 4
        %vm865 = vcmask 1044484
        %v866 = vsel %vm865, %v864, %v863
        %v867 = vrot.slane %v776, 3
        %vm868 = vcmask 1045509
        %v869 = vsel %vm868, %v867, %v866
        %v870 = vrot.slane %v777, 2
        %vm871 = vcmask 1046534
        %v872 = vsel %vm871, %v870, %v869
        %v873 = vrot.slane %v778, 1
        %vm874 = vcmask 1047559
        %v875 = vsel %vm874, %v873, %v872
        %v876 = vrot.slane %v780, 7
        %v877 = vsel %vm856, %v876, %v779
        %v878 = vrot.slane %v781, 6
        %v879 = vsel %vm859, %v878, %v877
        %v880 = vrot.slane %v782, 5
        %v881 = vsel %vm862, %v880, %v879
        %v882 = vrot.slane %v783, 4
        %v883 = vsel %vm865, %v882, %v881
        %v884 = vrot.slane %v784, 3
        %v885 = vsel %vm868, %v884, %v883
        %v886 = vrot.slane %v785, 2
        %v887 = vsel %vm871, %v886, %v885
        %v888 = vrot.slane %v786, 1
        %v889 = vsel %vm874, %v888, %v887
        %vm890 = vcmask 64512
        %v891 = vsel %vm890, %v875, 0
        %v893 = vsel %vm890, %v889, 0
        %895 = vmatpush.msra.mxu0 0.0
        %896 = vmatpush.msra.mxu0 0.0
        %897 = vmatpush.msra.mxu0 0.0
        %898 = vmatpush.msra.mxu0 0.0
        %899 = vmatpush.msra.mxu0 0.0
        %900 = vmatpush.msra.mxu0 0.0
        %901 = vmatpush.msra.mxu0 0.0
        %902 = vmatpush.msra.mxu0 0.0
        %903 = vmatpush.msra.mxu0 0.0
        %904 = vmatpush.msra.mxu0 0.0
        %905 = vmatpush.msra.mxu0 0.0
        %906 = vmatpush.msra.mxu0 0.0
        %907 = vmatpush.msra.mxu0 0.0
        %908 = vmatpush.msra.mxu0 0.0
        %909 = vmatpush.msra.mxu0 0.0
        %910 = vmatpush.msra.mxu0 %v787
        %911 = vmatmul.f32.gmra.mxu0 %v891
        %v912 = vpop.f32.mrf.mxu0
        %v913 = vadd.f32 %v807, %v912
        %914 = vmatmul.f32.gmra.mxu0 %v893
        %v915 = vpop.f32.mrf.mxu0
        %v916 = vadd.f32 %v807, %v915
        %917 = vdwg.mxu0
        %918 = vmatpush.msra.mxu0 0.0
        %919 = vmatpush.msra.mxu0 0.0
        %920 = vmatpush.msra.mxu0 0.0
        %921 = vmatpush.msra.mxu0 0.0
        %922 = vmatpush.msra.mxu0 0.0
        %923 = vmatpush.msra.mxu0 0.0
        %924 = vmatpush.msra.mxu0 0.0
        %925 = vmatpush.msra.mxu0 0.0
        %926 = vmatpush.msra.mxu0 0.0
        %927 = vmatpush.msra.mxu0 0.0
        %928 = vmatpush.msra.mxu0 0.0
        %929 = vmatpush.msra.mxu0 0.0
        %930 = vmatpush.msra.mxu0 0.0
        %931 = vmatpush.msra.mxu0 0.0
        %932 = vmatpush.msra.mxu0 0.0
        %933 = vmatpush.msra.mxu0 %v788
        %934 = vmatmul.f32.gmra.mxu0 %v891
        %v935 = vpop.f32.mrf.mxu0
        %v936 = vadd.f32 %v808, %v935
        %937 = vmatmul.f32.gmra.mxu0 %v893
        %v938 = vpop.f32.mrf.mxu0
        %v939 = vadd.f32 %v808, %v938
        %940 = vdwg.mxu0
        %941 = vmatpush.msra.mxu0 0.0
        %942 = vmatpush.msra.mxu0 0.0
        %943 = vmatpush.msra.mxu0 0.0
        %944 = vmatpush.msra.mxu0 0.0
        %945 = vmatpush.msra.mxu0 0.0
        %946 = vmatpush.msra.mxu0 0.0
        %947 = vmatpush.msra.mxu0 0.0
        %948 = vmatpush.msra.mxu0 0.0
        %949 = vmatpush.msra.mxu0 0.0
        %950 = vmatpush.msra.mxu0 0.0
        %951 = vmatpush.msra.mxu0 0.0
        %952 = vmatpush.msra.mxu0 0.0
        %953 = vmatpush.msra.mxu0 0.0
        %954 = vmatpush.msra.mxu0 0.0
        %955 = vmatpush.msra.mxu0 0.0
        %956 = vmatpush.msra.mxu0 %v789
        %957 = vmatmul.f32.gmra.mxu0 %v891
        %v958 = vpop.f32.mrf.mxu0
        %v959 = vadd.f32 %v809, %v958
        %960 = vmatmul.f32.gmra.mxu0 %v893
        %v961 = vpop.f32.mrf.mxu0
        %v962 = vadd.f32 %v809, %v961
        %963 = vdwg.mxu0
        %964 = vmatpush.msra.mxu0 0.0
        %965 = vmatpush.msra.mxu0 0.0
        %966 = vmatpush.msra.mxu0 0.0
        %967 = vmatpush.msra.mxu0 0.0
        %968 = vmatpush.msra.mxu0 0.0
        %969 = vmatpush.msra.mxu0 0.0
        %970 = vmatpush.msra.mxu0 0.0
        %971 = vmatpush.msra.mxu0 0.0
        %972 = vmatpush.msra.mxu0 0.0
        %973 = vmatpush.msra.mxu0 0.0
        %974 = vmatpush.msra.mxu0 0.0
        %975 = vmatpush.msra.mxu0 0.0
        %976 = vmatpush.msra.mxu0 0.0
        %977 = vmatpush.msra.mxu0 0.0
        %978 = vmatpush.msra.mxu0 0.0
        %979 = vmatpush.msra.mxu0 %v790
        %980 = vmatmul.f32.gmra.mxu0 %v891
        %v981 = vpop.f32.mrf.mxu0
        %v982 = vadd.f32 %v810, %v981
        %983 = vmatmul.f32.gmra.mxu0 %v893
        %v984 = vpop.f32.mrf.mxu0
        %v985 = vadd.f32 %v810, %v984
        %986 = vdwg.mxu0
        %987 = vmatpush.msra.mxu0 0.0
        %988 = vmatpush.msra.mxu0 0.0
        %989 = vmatpush.msra.mxu0 0.0
        %990 = vmatpush.msra.mxu0 0.0
        %991 = vmatpush.msra.mxu0 0.0
        %992 = vmatpush.msra.mxu0 0.0
        %993 = vmatpush.msra.mxu0 0.0
        %994 = vmatpush.msra.mxu0 0.0
        %995 = vmatpush.msra.mxu0 0.0
        %996 = vmatpush.msra.mxu0 0.0
        %997 = vmatpush.msra.mxu0 0.0
        %998 = vmatpush.msra.mxu0 0.0
        %999 = vmatpush.msra.mxu0 0.0
        %1000 = vmatpush.msra.mxu0 0.0
        %1001 = vmatpush.msra.mxu0 0.0
        %1002 = vmatpush.msra.mxu0 %v791
        %1003 = vmatmul.f32.gmra.mxu0 %v891
        %v1004 = vpop.f32.mrf.mxu0
        %v1005 = vadd.f32 %v811, %v1004
        %1006 = vmatmul.f32.gmra.mxu0 %v893
        %v1007 = vpop.f32.mrf.mxu0
        %v1008 = vadd.f32 %v811, %v1007
        %1009 = vdwg.mxu0
        %1010 = vmatpush.msra.mxu0 0.0
        %1011 = vmatpush.msra.mxu0 0.0
        %1012 = vmatpush.msra.mxu0 0.0
        %1013 = vmatpush.msra.mxu0 0.0
        %1014 = vmatpush.msra.mxu0 0.0
        %1015 = vmatpush.msra.mxu0 0.0
        %1016 = vmatpush.msra.mxu0 0.0
        %1017 = vmatpush.msra.mxu0 0.0
        %1018 = vmatpush.msra.mxu0 0.0
        %1019 = vmatpush.msra.mxu0 0.0
        %1020 = vmatpush.msra.mxu0 0.0
        %1021 = vmatpush.msra.mxu0 0.0
        %1022 = vmatpush.msra.mxu0 0.0
        %1023 = vmatpush.msra.mxu0 0.0
        %1024 = vmatpush.msra.mxu0 0.0
        %1025 = vmatpush.msra.mxu0 %v792
        %1026 = vmatmul.f32.gmra.mxu0 %v891
        %v1027 = vpop.f32.mrf.mxu0
        %v1028 = vadd.f32 %v812, %v1027
        %1029 = vmatmul.f32.gmra.mxu0 %v893
        %v1030 = vpop.f32.mrf.mxu0
        %v1031 = vadd.f32 %v812, %v1030
        %1032 = vdwg.mxu0
        %1033 = vmatpush.msra.mxu0 0.0
        %1034 = vmatpush.msra.mxu0 0.0
        %1035 = vmatpush.msra.mxu0 0.0
        %1036 = vmatpush.msra.mxu0 0.0
        %1037 = vmatpush.msra.mxu0 0.0
        %1038 = vmatpush.msra.mxu0 0.0
        %1039 = vmatpush.msra.mxu0 0.0
        %1040 = vmatpush.msra.mxu0 0.0
        %1041 = vmatpush.msra.mxu0 0.0
        %1042 = vmatpush.msra.mxu0 0.0
        %1043 = vmatpush.msra.mxu0 0.0
        %1044 = vmatpush.msra.mxu0 0.0
        %1045 = vmatpush.msra.mxu0 0.0
        %1046 = vmatpush.msra.mxu0 0.0
        %1047 = vmatpush.msra.mxu0 0.0
        %1048 = vmatpush.msra.mxu0 %v793
        %1049 = vmatmul.f32.gmra.mxu0 %v891
        %v1050 = vpop.f32.mrf.mxu0
        %v1051 = vadd.f32 %v813, %v1050
        %1052 = vmatmul.f32.gmra.mxu0 %v893
        %v1053 = vpop.f32.mrf.mxu0
        %v1054 = vadd.f32 %v813, %v1053
        %1055 = vdwg.mxu0
        %1056 = vmatpush.msra.mxu0 0.0
        %1057 = vmatpush.msra.mxu0 0.0
        %1058 = vmatpush.msra.mxu0 0.0
        %1059 = vmatpush.msra.mxu0 0.0
        %1060 = vmatpush.msra.mxu0 0.0
        %1061 = vmatpush.msra.mxu0 0.0
        %1062 = vmatpush.msra.mxu0 0.0
        %1063 = vmatpush.msra.mxu0 0.0
        %1064 = vmatpush.msra.mxu0 0.0
        %1065 = vmatpush.msra.mxu0 0.0
        %1066 = vmatpush.msra.mxu0 0.0
        %1067 = vmatpush.msra.mxu0 0.0
        %1068 = vmatpush.msra.mxu0 0.0
        %1069 = vmatpush.msra.mxu0 0.0
        %1070 = vmatpush.msra.mxu0 0.0
        %1071 = vmatpush.msra.mxu0 %v794
        %1072 = vmatmul.f32.gmra.mxu0 %v891
        %v1073 = vpop.f32.mrf.mxu0
        %v1074 = vadd.f32 %v814, %v1073
        %1075 = vmatmul.f32.gmra.mxu0 %v893
        %v1076 = vpop.f32.mrf.mxu0
        %v1077 = vadd.f32 %v814, %v1076
        %1078 = vdwg.mxu0
        %1079 = vmatpush.msra.mxu0 0.0
        %1080 = vmatpush.msra.mxu0 0.0
        %1081 = vmatpush.msra.mxu0 0.0
        %1082 = vmatpush.msra.mxu0 0.0
        %1083 = vmatpush.msra.mxu0 0.0
        %1084 = vmatpush.msra.mxu0 0.0
        %1085 = vmatpush.msra.mxu0 0.0
        %1086 = vmatpush.msra.mxu0 0.0
        %1087 = vmatpush.msra.mxu0 0.0
        %1088 = vmatpush.msra.mxu0 0.0
        %1089 = vmatpush.msra.mxu0 0.0
        %1090 = vmatpush.msra.mxu0 0.0
        %1091 = vmatpush.msra.mxu0 0.0
        %1092 = vmatpush.msra.mxu0 0.0
        %1093 = vmatpush.msra.mxu0 0.0
        %1094 = vmatpush.msra.mxu0 %v795
        %1095 = vmatmul.f32.gmra.mxu0 %v891
        %v1096 = vpop.f32.mrf.mxu0
        %v1097 = vadd.f32 %v815, %v1096
        %1098 = vmatmul.f32.gmra.mxu0 %v893
        %v1099 = vpop.f32.mrf.mxu0
        %v1100 = vadd.f32 %v815, %v1099
        %1101 = vdwg.mxu0
        %1102 = vmatpush.msra.mxu0 0.0
        %1103 = vmatpush.msra.mxu0 0.0
        %1104 = vmatpush.msra.mxu0 0.0
        %1105 = vmatpush.msra.mxu0 0.0
        %1106 = vmatpush.msra.mxu0 0.0
        %1107 = vmatpush.msra.mxu0 0.0
        %1108 = vmatpush.msra.mxu0 0.0
        %1109 = vmatpush.msra.mxu0 0.0
        %1110 = vmatpush.msra.mxu0 0.0
        %1111 = vmatpush.msra.mxu0 0.0
        %1112 = vmatpush.msra.mxu0 0.0
        %1113 = vmatpush.msra.mxu0 0.0
        %1114 = vmatpush.msra.mxu0 0.0
        %1115 = vmatpush.msra.mxu0 0.0
        %1116 = vmatpush.msra.mxu0 0.0
        %1117 = vmatpush.msra.mxu0 %v796
        %1118 = vmatmul.f32.gmra.mxu0 %v891
        %v1119 = vpop.f32.mrf.mxu0
        %v1120 = vadd.f32 %v816, %v1119
        %1121 = vmatmul.f32.gmra.mxu0 %v893
        %v1122 = vpop.f32.mrf.mxu0
        %v1123 = vadd.f32 %v816, %v1122
        %1124 = vdwg.mxu0
        %1125 = vmatpush.msra.mxu0 0.0
        %1126 = vmatpush.msra.mxu0 0.0
        %1127 = vmatpush.msra.mxu0 0.0
        %1128 = vmatpush.msra.mxu0 0.0
        %1129 = vmatpush.msra.mxu0 0.0
        %1130 = vmatpush.msra.mxu0 0.0
        %1131 = vmatpush.msra.mxu0 0.0
        %1132 = vmatpush.msra.mxu0 0.0
        %1133 = vmatpush.msra.mxu0 0.0
        %1134 = vmatpush.msra.mxu0 0.0
        %1135 = vmatpush.msra.mxu0 0.0
        %1136 = vmatpush.msra.mxu0 0.0
        %1137 = vmatpush.msra.mxu0 0.0
        %1138 = vmatpush.msra.mxu0 0.0
        %1139 = vmatpush.msra.mxu0 0.0
        %1140 = vmatpush.msra.mxu0 %v797
        %1141 = vmatmul.f32.gmra.mxu0 %v891
        %v1142 = vpop.f32.mrf.mxu0
        %v1143 = vadd.f32 %v817, %v1142
        %1144 = vmatmul.f32.gmra.mxu0 %v893
        %v1145 = vpop.f32.mrf.mxu0
        %v1146 = vadd.f32 %v817, %v1145
        %1147 = vdwg.mxu0
        %1148 = vmatpush.msra.mxu0 0.0
        %1149 = vmatpush.msra.mxu0 0.0
        %1150 = vmatpush.msra.mxu0 0.0
        %1151 = vmatpush.msra.mxu0 0.0
        %1152 = vmatpush.msra.mxu0 0.0
        %1153 = vmatpush.msra.mxu0 0.0
        %1154 = vmatpush.msra.mxu0 0.0
        %1155 = vmatpush.msra.mxu0 0.0
        %1156 = vmatpush.msra.mxu0 0.0
        %1157 = vmatpush.msra.mxu0 0.0
        %1158 = vmatpush.msra.mxu0 0.0
        %1159 = vmatpush.msra.mxu0 0.0
        %1160 = vmatpush.msra.mxu0 0.0
        %1161 = vmatpush.msra.mxu0 0.0
        %1162 = vmatpush.msra.mxu0 0.0
        %1163 = vmatpush.msra.mxu0 %v798
        %1164 = vmatmul.f32.gmra.mxu0 %v891
        %v1165 = vpop.f32.mrf.mxu0
        %v1166 = vadd.f32 %v818, %v1165
        %1167 = vmatmul.f32.gmra.mxu0 %v893
        %v1168 = vpop.f32.mrf.mxu0
        %v1169 = vadd.f32 %v818, %v1168
        %1170 = vdwg.mxu0
        %1171 = vmatpush.msra.mxu0 0.0
        %1172 = vmatpush.msra.mxu0 0.0
        %1173 = vmatpush.msra.mxu0 0.0
        %1174 = vmatpush.msra.mxu0 0.0
        %1175 = vmatpush.msra.mxu0 0.0
        %1176 = vmatpush.msra.mxu0 0.0
        %1177 = vmatpush.msra.mxu0 0.0
        %1178 = vmatpush.msra.mxu0 0.0
        %1179 = vmatpush.msra.mxu0 0.0
        %1180 = vmatpush.msra.mxu0 0.0
        %1181 = vmatpush.msra.mxu0 0.0
        %1182 = vmatpush.msra.mxu0 0.0
        %1183 = vmatpush.msra.mxu0 0.0
        %1184 = vmatpush.msra.mxu0 0.0
        %1185 = vmatpush.msra.mxu0 0.0
        %1186 = vmatpush.msra.mxu0 %v799
        %1187 = vmatmul.f32.gmra.mxu0 %v891
        %v1188 = vpop.f32.mrf.mxu0
        %v1189 = vadd.f32 %v819, %v1188
        %1190 = vmatmul.f32.gmra.mxu0 %v893
        %v1191 = vpop.f32.mrf.mxu0
        %v1192 = vadd.f32 %v819, %v1191
        %1193 = vdwg.mxu0
        %1194 = vmatpush.msra.mxu0 0.0
        %1195 = vmatpush.msra.mxu0 0.0
        %1196 = vmatpush.msra.mxu0 0.0
        %1197 = vmatpush.msra.mxu0 0.0
        %1198 = vmatpush.msra.mxu0 0.0
        %1199 = vmatpush.msra.mxu0 0.0
        %1200 = vmatpush.msra.mxu0 0.0
        %1201 = vmatpush.msra.mxu0 0.0
        %1202 = vmatpush.msra.mxu0 0.0
        %1203 = vmatpush.msra.mxu0 0.0
        %1204 = vmatpush.msra.mxu0 0.0
        %1205 = vmatpush.msra.mxu0 0.0
        %1206 = vmatpush.msra.mxu0 0.0
        %1207 = vmatpush.msra.mxu0 0.0
        %1208 = vmatpush.msra.mxu0 0.0
        %1209 = vmatpush.msra.mxu0 %v800
        %1210 = vmatmul.f32.gmra.mxu0 %v891
        %v1211 = vpop.f32.mrf.mxu0
        %v1212 = vadd.f32 %v820, %v1211
        %1213 = vmatmul.f32.gmra.mxu0 %v893
        %v1214 = vpop.f32.mrf.mxu0
        %v1215 = vadd.f32 %v820, %v1214
        %1216 = vdwg.mxu0
        %1217 = vmatpush.msra.mxu0 0.0
        %1218 = vmatpush.msra.mxu0 0.0
        %1219 = vmatpush.msra.mxu0 0.0
        %1220 = vmatpush.msra.mxu0 0.0
        %1221 = vmatpush.msra.mxu0 0.0
        %1222 = vmatpush.msra.mxu0 0.0
        %1223 = vmatpush.msra.mxu0 0.0
        %1224 = vmatpush.msra.mxu0 0.0
        %1225 = vmatpush.msra.mxu0 0.0
        %1226 = vmatpush.msra.mxu0 0.0
        %1227 = vmatpush.msra.mxu0 0.0
        %1228 = vmatpush.msra.mxu0 0.0
        %1229 = vmatpush.msra.mxu0 0.0
        %1230 = vmatpush.msra.mxu0 0.0
        %1231 = vmatpush.msra.mxu0 0.0
        %1232 = vmatpush.msra.mxu0 %v801
        %1233 = vmatmul.f32.gmra.mxu0 %v891
        %v1234 = vpop.f32.mrf.mxu0
        %v1235 = vadd.f32 %v821, %v1234
        %1236 = vmatmul.f32.gmra.mxu0 %v893
        %v1237 = vpop.f32.mrf.mxu0
        %v1238 = vadd.f32 %v821, %v1237
        %1239 = vdwg.mxu0
        %1240 = vmatpush.msra.mxu0 0.0
        %1241 = vmatpush.msra.mxu0 0.0
        %1242 = vmatpush.msra.mxu0 0.0
        %1243 = vmatpush.msra.mxu0 0.0
        %1244 = vmatpush.msra.mxu0 0.0
        %1245 = vmatpush.msra.mxu0 0.0
        %1246 = vmatpush.msra.mxu0 0.0
        %1247 = vmatpush.msra.mxu0 0.0
        %1248 = vmatpush.msra.mxu0 0.0
        %1249 = vmatpush.msra.mxu0 0.0
        %1250 = vmatpush.msra.mxu0 0.0
        %1251 = vmatpush.msra.mxu0 0.0
        %1252 = vmatpush.msra.mxu0 0.0
        %1253 = vmatpush.msra.mxu0 0.0
        %1254 = vmatpush.msra.mxu0 0.0
        %1255 = vmatpush.msra.mxu0 %v802
        %1256 = vmatmul.f32.gmra.mxu0 %v891
        %v1257 = vpop.f32.mrf.mxu0
        %v1258 = vadd.f32 %v822, %v1257
        %1259 = vmatmul.f32.gmra.mxu0 %v893
        %v1260 = vpop.f32.mrf.mxu0
        %v1261 = vadd.f32 %v822, %v1260
        %1262 = vdwg.mxu0
        %v1263 = vadd.f32 %v913, %v739
        %v1264 = vadd.f32 %v936, %v740
        %v1265 = vadd.f32 %v959, %v741
        %v1266 = vadd.f32 %v982, %v742
        %v1267 = vadd.f32 %v1005, %v743
        %v1268 = vadd.f32 %v1028, %v744
        %v1269 = vadd.f32 %v1051, %v745
        %v1270 = vadd.f32 %v1074, %v746
        %v1271 = vadd.f32 %v1097, %v747
        %v1272 = vadd.f32 %v1120, %v748
        %v1273 = vadd.f32 %v1143, %v749
        %v1274 = vadd.f32 %v1166, %v750
        %v1275 = vadd.f32 %v1189, %v751
        %v1276 = vadd.f32 %v1212, %v752
        %v1277 = vadd.f32 %v1235, %v753
        %v1278 = vadd.f32 %v1258, %v754
        %v1279 = vadd.f32 %v916, %v755
        %v1280 = vadd.f32 %v939, %v756
        %v1281 = vadd.f32 %v962, %v757
        %v1282 = vadd.f32 %v985, %v758
        %v1283 = vadd.f32 %v1008, %v759
        %v1284 = vadd.f32 %v1031, %v760
        %v1285 = vadd.f32 %v1054, %v761
        %v1286 = vadd.f32 %v1077, %v762
        %v1287 = vadd.f32 %v1100, %v763
        %v1288 = vadd.f32 %v1123, %v764
        %v1289 = vadd.f32 %v1146, %v765
        %v1290 = vadd.f32 %v1169, %v766
        %v1291 = vadd.f32 %v1192, %v767
        %v1292 = vadd.f32 %v1215, %v768
        %v1293 = vadd.f32 %v1238, %v769
        %v1294 = vadd.f32 %v1261, %v770
        %1295 = vst [vmem:[%s690] sm:$0xff] %v1263
        %1296 = vst [vmem:[%s690 + $0x8] sm:$0xff] %v1264
        %1297 = vst [vmem:[%s690 + $0x10] sm:$0xff] %v1265
        %1298 = vst [vmem:[%s690 + $0x18] sm:$0xff] %v1266
        %1299 = vst [vmem:[%s690 + $0x20] sm:$0xff] %v1267
        %1300 = vst [vmem:[%s690 + $0x28] sm:$0xff] %v1268
        %1301 = vst [vmem:[%s690 + $0x30] sm:$0xff] %v1269
        %1302 = vst [vmem:[%s690 + $0x38] sm:$0xff] %v1270
        %1303 = vst [vmem:[%s690 + $0x40] sm:$0xff] %v1271
        %1304 = vst [vmem:[%s690 + $0x48] sm:$0xff] %v1272
        %1305 = vst [vmem:[%s690 + $0x50] sm:$0xff] %v1273
        %1306 = vst [vmem:[%s690 + $0x58] sm:$0xff] %v1274
        %1307 = vst [vmem:[%s690 + $0x60] sm:$0xff] %v1275
        %1308 = vst [vmem:[%s690 + $0x68] sm:$0xff] %v1276
        %1309 = vst [vmem:[%s690 + $0x70] sm:$0xff] %v1277
        %1310 = vst [vmem:[%s690 + $0x78] sm:$0xff] %v1278
        %1311 = vst [vmem:[%s690 + $0x80] sm:$0xff] %v1279
        %1312 = vst [vmem:[%s690 + $0x88] sm:$0xff] %v1280
        %1313 = vst [vmem:[%s690 + $0x90] sm:$0xff] %v1281
        %1314 = vst [vmem:[%s690 + $0x98] sm:$0xff] %v1282
        %1315 = vst [vmem:[%s690 + $0xa0] sm:$0xff] %v1283
        %1316 = vst [vmem:[%s690 + $0xa8] sm:$0xff] %v1284
        %1317 = vst [vmem:[%s690 + $0xb0] sm:$0xff] %v1285
        %1318 = vst [vmem:[%s690 + $0xb8] sm:$0xff] %v1286
        %1319 = vst [vmem:[%s690 + $0xc0] sm:$0xff] %v1287
        %1320 = vst [vmem:[%s690 + $0xc8] sm:$0xff] %v1288
        %1321 = vst [vmem:[%s690 + $0xd0] sm:$0xff] %v1289
        %1322 = vst [vmem:[%s690 + $0xd8] sm:$0xff] %v1290
        %1323 = vst [vmem:[%s690 + $0xe0] sm:$0xff] %v1291
        %1324 = vst [vmem:[%s690 + $0xe8] sm:$0xff] %v1292
        %1325 = vst [vmem:[%s690 + $0xf0] sm:$0xff] %v1293
        %1326 = vst [vmem:[%s690 + $0xf8] sm:$0xff] %v1294
        %v1327 = vld [vmem:[%s723 + $0x1] sm:$0x1]
        %v1328 = vld [vmem:[%s723 + $0x9] sm:$0x1]
        %v1329 = vld [vmem:[%s723 + $0x11] sm:$0x1]
        %v1330 = vld [vmem:[%s723 + $0x19] sm:$0x1]
        %v1331 = vld [vmem:[%s723 + $0x21] sm:$0x1]
        %v1332 = vld [vmem:[%s723 + $0x29] sm:$0x1]
        %v1333 = vld [vmem:[%s723 + $0x31] sm:$0x1]
        %v1334 = vld [vmem:[%s723 + $0x39] sm:$0x1]
        %v1335 = vld [vmem:[%s723 + $0x41] sm:$0x1]
        %v1336 = vld [vmem:[%s723 + $0x49] sm:$0x1]
        %v1337 = vld [vmem:[%s723 + $0x51] sm:$0x1]
        %v1338 = vld [vmem:[%s723 + $0x59] sm:$0x1]
        %v1339 = vld [vmem:[%s723 + $0x61] sm:$0x1]
        %v1340 = vld [vmem:[%s723 + $0x69] sm:$0x1]
        %v1341 = vld [vmem:[%s723 + $0x71] sm:$0x1]
        %v1342 = vld [vmem:[%s723 + $0x79] sm:$0x1]
        %s1343 = scalar_lea.vmem %s648, 128 [#allocation3]
        %v1344 = vld [vmem:[%s1343] sm:$0xff]
        %v1345 = vld [vmem:[%s1343 + $0x8] sm:$0xff]
        %v1346 = vld [vmem:[%s1343 + $0x10] sm:$0xff]
        %v1347 = vld [vmem:[%s1343 + $0x18] sm:$0xff]
        %v1348 = vld [vmem:[%s1343 + $0x20] sm:$0xff]
        %v1349 = vld [vmem:[%s1343 + $0x28] sm:$0xff]
        %v1350 = vld [vmem:[%s1343 + $0x30] sm:$0xff]
        %v1351 = vld [vmem:[%s1343 + $0x38] sm:$0xff]
        %v1352 = vld [vmem:[%s1343 + $0x40] sm:$0xff]
        %v1353 = vld [vmem:[%s1343 + $0x48] sm:$0xff]
        %v1354 = vld [vmem:[%s1343 + $0x50] sm:$0xff]
        %v1355 = vld [vmem:[%s1343 + $0x58] sm:$0xff]
        %v1356 = vld [vmem:[%s1343 + $0x60] sm:$0xff]
        %v1357 = vld [vmem:[%s1343 + $0x68] sm:$0xff]
        %v1358 = vld [vmem:[%s1343 + $0x70] sm:$0xff]
        %v1359 = vld [vmem:[%s1343 + $0x78] sm:$0xff]
        %s1360 = scalar_lea.vmem %s655, 16 [#allocation4]
        %v1361 = vld [vmem:[%s1360] sm:$0xff]
        %v1362 = vld [vmem:[%s1360 + $0x8] sm:$0xff]
        %v1365 = vperm.slane %v1361, 0
        %v1366 = vperm.slane %v1361, 1
        %v1367 = vperm.slane %v1361, 2
        %v1368 = vperm.slane %v1361, 3
        %v1369 = vperm.slane %v1361, 4
        %v1370 = vperm.slane %v1361, 5
        %v1371 = vperm.slane %v1361, 6
        %v1372 = vperm.slane %v1361, 7
        %v1373 = vperm.slane %v1362, 0
        %v1374 = vperm.slane %v1362, 1
        %v1375 = vperm.slane %v1362, 2
        %v1376 = vperm.slane %v1362, 3
        %v1377 = vperm.slane %v1362, 4
        %v1378 = vperm.slane %v1362, 5
        %v1379 = vperm.slane %v1362, 6
        %v1380 = vperm.slane %v1362, 7
        %v1413 = vrot.slane %v1328, 7
        %v1414 = vsel %vm856, %v1413, %v1327
        %v1415 = vrot.slane %v1329, 6
        %v1416 = vsel %vm859, %v1415, %v1414
        %v1417 = vrot.slane %v1330, 5
        %v1418 = vsel %vm862, %v1417, %v1416
        %v1419 = vrot.slane %v1331, 4
        %v1420 = vsel %vm865, %v1419, %v1418
        %v1421 = vrot.slane %v1332, 3
        %v1422 = vsel %vm868, %v1421, %v1420
        %v1423 = vrot.slane %v1333, 2
        %v1424 = vsel %vm871, %v1423, %v1422
        %v1425 = vrot.slane %v1334, 1
        %v1426 = vsel %vm874, %v1425, %v1424
        %v1427 = vrot.slane %v1336, 7
        %v1428 = vsel %vm856, %v1427, %v1335
        %v1429 = vrot.slane %v1337, 6
        %v1430 = vsel %vm859, %v1429, %v1428
        %v1431 = vrot.slane %v1338, 5
        %v1432 = vsel %vm862, %v1431, %v1430
        %v1433 = vrot.slane %v1339, 4
        %v1434 = vsel %vm865, %v1433, %v1432
        %v1435 = vrot.slane %v1340, 3
        %v1436 = vsel %vm868, %v1435, %v1434
        %v1437 = vrot.slane %v1341, 2
        %v1438 = vsel %vm871, %v1437, %v1436
        %v1439 = vrot.slane %v1342, 1
        %v1440 = vsel %vm874, %v1439, %v1438
        %v1441 = vsel %vm890, %v1426, 0
        %v1443 = vsel %vm890, %v1440, 0
        %1445 = vmatpush.msra.mxu0 0.0
        %1446 = vmatpush.msra.mxu0 0.0
        %1447 = vmatpush.msra.mxu0 0.0
        %1448 = vmatpush.msra.mxu0 0.0
        %1449 = vmatpush.msra.mxu0 0.0
        %1450 = vmatpush.msra.mxu0 0.0
        %1451 = vmatpush.msra.mxu0 0.0
        %1452 = vmatpush.msra.mxu0 0.0
        %1453 = vmatpush.msra.mxu0 0.0
        %1454 = vmatpush.msra.mxu0 0.0
        %1455 = vmatpush.msra.mxu0 0.0
        %1456 = vmatpush.msra.mxu0 0.0
        %1457 = vmatpush.msra.mxu0 0.0
        %1458 = vmatpush.msra.mxu0 0.0
        %1459 = vmatpush.msra.mxu0 0.0
        %1460 = vmatpush.msra.mxu0 %v1344
        %1461 = vmatmul.f32.gmra.mxu0 %v1441
        %v1462 = vpop.f32.mrf.mxu0
        %v1463 = vadd.f32 %v1365, %v1462
        %1464 = vmatmul.f32.gmra.mxu0 %v1443
        %v1465 = vpop.f32.mrf.mxu0
        %v1466 = vadd.f32 %v1365, %v1465
        %1467 = vdwg.mxu0
        %1468 = vmatpush.msra.mxu0 0.0
        %1469 = vmatpush.msra.mxu0 0.0
        %1470 = vmatpush.msra.mxu0 0.0
        %1471 = vmatpush.msra.mxu0 0.0
        %1472 = vmatpush.msra.mxu0 0.0
        %1473 = vmatpush.msra.mxu0 0.0
        %1474 = vmatpush.msra.mxu0 0.0
        %1475 = vmatpush.msra.mxu0 0.0
        %1476 = vmatpush.msra.mxu0 0.0
        %1477 = vmatpush.msra.mxu0 0.0
        %1478 = vmatpush.msra.mxu0 0.0
        %1479 = vmatpush.msra.mxu0 0.0
        %1480 = vmatpush.msra.mxu0 0.0
        %1481 = vmatpush.msra.mxu0 0.0
        %1482 = vmatpush.msra.mxu0 0.0
        %1483 = vmatpush.msra.mxu0 %v1345
        %1484 = vmatmul.f32.gmra.mxu0 %v1441
        %v1485 = vpop.f32.mrf.mxu0
        %v1486 = vadd.f32 %v1366, %v1485
        %1487 = vmatmul.f32.gmra.mxu0 %v1443
        %v1488 = vpop.f32.mrf.mxu0
        %v1489 = vadd.f32 %v1366, %v1488
        %1490 = vdwg.mxu0
        %1491 = vmatpush.msra.mxu0 0.0
        %1492 = vmatpush.msra.mxu0 0.0
        %1493 = vmatpush.msra.mxu0 0.0
        %1494 = vmatpush.msra.mxu0 0.0
        %1495 = vmatpush.msra.mxu0 0.0
        %1496 = vmatpush.msra.mxu0 0.0
        %1497 = vmatpush.msra.mxu0 0.0
        %1498 = vmatpush.msra.mxu0 0.0
        %1499 = vmatpush.msra.mxu0 0.0
        %1500 = vmatpush.msra.mxu0 0.0
        %1501 = vmatpush.msra.mxu0 0.0
        %1502 = vmatpush.msra.mxu0 0.0
        %1503 = vmatpush.msra.mxu0 0.0
        %1504 = vmatpush.msra.mxu0 0.0
        %1505 = vmatpush.msra.mxu0 0.0
        %1506 = vmatpush.msra.mxu0 %v1346
        %1507 = vmatmul.f32.gmra.mxu0 %v1441
        %v1508 = vpop.f32.mrf.mxu0
        %v1509 = vadd.f32 %v1367, %v1508
        %1510 = vmatmul.f32.gmra.mxu0 %v1443
        %v1511 = vpop.f32.mrf.mxu0
        %v1512 = vadd.f32 %v1367, %v1511
        %1513 = vdwg.mxu0
        %1514 = vmatpush.msra.mxu0 0.0
        %1515 = vmatpush.msra.mxu0 0.0
        %1516 = vmatpush.msra.mxu0 0.0
        %1517 = vmatpush.msra.mxu0 0.0
        %1518 = vmatpush.msra.mxu0 0.0
        %1519 = vmatpush.msra.mxu0 0.0
        %1520 = vmatpush.msra.mxu0 0.0
        %1521 = vmatpush.msra.mxu0 0.0
        %1522 = vmatpush.msra.mxu0 0.0
        %1523 = vmatpush.msra.mxu0 0.0
        %1524 = vmatpush.msra.mxu0 0.0
        %1525 = vmatpush.msra.mxu0 0.0
        %1526 = vmatpush.msra.mxu0 0.0
        %1527 = vmatpush.msra.mxu0 0.0
        %1528 = vmatpush.msra.mxu0 0.0
        %1529 = vmatpush.msra.mxu0 %v1347
        %1530 = vmatmul.f32.gmra.mxu0 %v1441
        %v1531 = vpop.f32.mrf.mxu0
        %v1532 = vadd.f32 %v1368, %v1531
        %1533 = vmatmul.f32.gmra.mxu0 %v1443
        %v1534 = vpop.f32.mrf.mxu0
        %v1535 = vadd.f32 %v1368, %v1534
        %1536 = vdwg.mxu0
        %1537 = vmatpush.msra.mxu0 0.0
        %1538 = vmatpush.msra.mxu0 0.0
        %1539 = vmatpush.msra.mxu0 0.0
        %1540 = vmatpush.msra.mxu0 0.0
        %1541 = vmatpush.msra.mxu0 0.0
        %1542 = vmatpush.msra.mxu0 0.0
        %1543 = vmatpush.msra.mxu0 0.0
        %1544 = vmatpush.msra.mxu0 0.0
        %1545 = vmatpush.msra.mxu0 0.0
        %1546 = vmatpush.msra.mxu0 0.0
        %1547 = vmatpush.msra.mxu0 0.0
        %1548 = vmatpush.msra.mxu0 0.0
        %1549 = vmatpush.msra.mxu0 0.0
        %1550 = vmatpush.msra.mxu0 0.0
        %1551 = vmatpush.msra.mxu0 0.0
        %1552 = vmatpush.msra.mxu0 %v1348
        %1553 = vmatmul.f32.gmra.mxu0 %v1441
        %v1554 = vpop.f32.mrf.mxu0
        %v1555 = vadd.f32 %v1369, %v1554
        %1556 = vmatmul.f32.gmra.mxu0 %v1443
        %v1557 = vpop.f32.mrf.mxu0
        %v1558 = vadd.f32 %v1369, %v1557
        %1559 = vdwg.mxu0
        %1560 = vmatpush.msra.mxu0 0.0
        %1561 = vmatpush.msra.mxu0 0.0
        %1562 = vmatpush.msra.mxu0 0.0
        %1563 = vmatpush.msra.mxu0 0.0
        %1564 = vmatpush.msra.mxu0 0.0
        %1565 = vmatpush.msra.mxu0 0.0
        %1566 = vmatpush.msra.mxu0 0.0
        %1567 = vmatpush.msra.mxu0 0.0
        %1568 = vmatpush.msra.mxu0 0.0
        %1569 = vmatpush.msra.mxu0 0.0
        %1570 = vmatpush.msra.mxu0 0.0
        %1571 = vmatpush.msra.mxu0 0.0
        %1572 = vmatpush.msra.mxu0 0.0
        %1573 = vmatpush.msra.mxu0 0.0
        %1574 = vmatpush.msra.mxu0 0.0
        %1575 = vmatpush.msra.mxu0 %v1349
        %1576 = vmatmul.f32.gmra.mxu0 %v1441
        %v1577 = vpop.f32.mrf.mxu0
        %v1578 = vadd.f32 %v1370, %v1577
        %1579 = vmatmul.f32.gmra.mxu0 %v1443
        %v1580 = vpop.f32.mrf.mxu0
        %v1581 = vadd.f32 %v1370, %v1580
        %1582 = vdwg.mxu0
        %1583 = vmatpush.msra.mxu0 0.0
        %1584 = vmatpush.msra.mxu0 0.0
        %1585 = vmatpush.msra.mxu0 0.0
        %1586 = vmatpush.msra.mxu0 0.0
        %1587 = vmatpush.msra.mxu0 0.0
        %1588 = vmatpush.msra.mxu0 0.0
        %1589 = vmatpush.msra.mxu0 0.0
        %1590 = vmatpush.msra.mxu0 0.0
        %1591 = vmatpush.msra.mxu0 0.0
        %1592 = vmatpush.msra.mxu0 0.0
        %1593 = vmatpush.msra.mxu0 0.0
        %1594 = vmatpush.msra.mxu0 0.0
        %1595 = vmatpush.msra.mxu0 0.0
        %1596 = vmatpush.msra.mxu0 0.0
        %1597 = vmatpush.msra.mxu0 0.0
        %1598 = vmatpush.msra.mxu0 %v1350
        %1599 = vmatmul.f32.gmra.mxu0 %v1441
        %v1600 = vpop.f32.mrf.mxu0
        %v1601 = vadd.f32 %v1371, %v1600
        %1602 = vmatmul.f32.gmra.mxu0 %v1443
        %v1603 = vpop.f32.mrf.mxu0
        %v1604 = vadd.f32 %v1371, %v1603
        %1605 = vdwg.mxu0
        %1606 = vmatpush.msra.mxu0 0.0
        %1607 = vmatpush.msra.mxu0 0.0
        %1608 = vmatpush.msra.mxu0 0.0
        %1609 = vmatpush.msra.mxu0 0.0
        %1610 = vmatpush.msra.mxu0 0.0
        %1611 = vmatpush.msra.mxu0 0.0
        %1612 = vmatpush.msra.mxu0 0.0
        %1613 = vmatpush.msra.mxu0 0.0
        %1614 = vmatpush.msra.mxu0 0.0
        %1615 = vmatpush.msra.mxu0 0.0
        %1616 = vmatpush.msra.mxu0 0.0
        %1617 = vmatpush.msra.mxu0 0.0
        %1618 = vmatpush.msra.mxu0 0.0
        %1619 = vmatpush.msra.mxu0 0.0
        %1620 = vmatpush.msra.mxu0 0.0
        %1621 = vmatpush.msra.mxu0 %v1351
        %1622 = vmatmul.f32.gmra.mxu0 %v1441
        %v1623 = vpop.f32.mrf.mxu0
        %v1624 = vadd.f32 %v1372, %v1623
        %1625 = vmatmul.f32.gmra.mxu0 %v1443
        %v1626 = vpop.f32.mrf.mxu0
        %v1627 = vadd.f32 %v1372, %v1626
        %1628 = vdwg.mxu0
        %1629 = vmatpush.msra.mxu0 0.0
        %1630 = vmatpush.msra.mxu0 0.0
        %1631 = vmatpush.msra.mxu0 0.0
        %1632 = vmatpush.msra.mxu0 0.0
        %1633 = vmatpush.msra.mxu0 0.0
        %1634 = vmatpush.msra.mxu0 0.0
        %1635 = vmatpush.msra.mxu0 0.0
        %1636 = vmatpush.msra.mxu0 0.0
        %1637 = vmatpush.msra.mxu0 0.0
        %1638 = vmatpush.msra.mxu0 0.0
        %1639 = vmatpush.msra.mxu0 0.0
        %1640 = vmatpush.msra.mxu0 0.0
        %1641 = vmatpush.msra.mxu0 0.0
        %1642 = vmatpush.msra.mxu0 0.0
        %1643 = vmatpush.msra.mxu0 0.0
        %1644 = vmatpush.msra.mxu0 %v1352
        %1645 = vmatmul.f32.gmra.mxu0 %v1441
        %v1646 = vpop.f32.mrf.mxu0
        %v1647 = vadd.f32 %v1373, %v1646
        %1648 = vmatmul.f32.gmra.mxu0 %v1443
        %v1649 = vpop.f32.mrf.mxu0
        %v1650 = vadd.f32 %v1373, %v1649
        %1651 = vdwg.mxu0
        %1652 = vmatpush.msra.mxu0 0.0
        %1653 = vmatpush.msra.mxu0 0.0
        %1654 = vmatpush.msra.mxu0 0.0
        %1655 = vmatpush.msra.mxu0 0.0
        %1656 = vmatpush.msra.mxu0 0.0
        %1657 = vmatpush.msra.mxu0 0.0
        %1658 = vmatpush.msra.mxu0 0.0
        %1659 = vmatpush.msra.mxu0 0.0
        %1660 = vmatpush.msra.mxu0 0.0
        %1661 = vmatpush.msra.mxu0 0.0
        %1662 = vmatpush.msra.mxu0 0.0
        %1663 = vmatpush.msra.mxu0 0.0
        %1664 = vmatpush.msra.mxu0 0.0
        %1665 = vmatpush.msra.mxu0 0.0
        %1666 = vmatpush.msra.mxu0 0.0
        %1667 = vmatpush.msra.mxu0 %v1353
        %1668 = vmatmul.f32.gmra.mxu0 %v1441
        %v1669 = vpop.f32.mrf.mxu0
        %v1670 = vadd.f32 %v1374, %v1669
        %1671 = vmatmul.f32.gmra.mxu0 %v1443
        %v1672 = vpop.f32.mrf.mxu0
        %v1673 = vadd.f32 %v1374, %v1672
        %1674 = vdwg.mxu0
        %1675 = vmatpush.msra.mxu0 0.0
        %1676 = vmatpush.msra.mxu0 0.0
        %1677 = vmatpush.msra.mxu0 0.0
        %1678 = vmatpush.msra.mxu0 0.0
        %1679 = vmatpush.msra.mxu0 0.0
        %1680 = vmatpush.msra.mxu0 0.0
        %1681 = vmatpush.msra.mxu0 0.0
        %1682 = vmatpush.msra.mxu0 0.0
        %1683 = vmatpush.msra.mxu0 0.0
        %1684 = vmatpush.msra.mxu0 0.0
        %1685 = vmatpush.msra.mxu0 0.0
        %1686 = vmatpush.msra.mxu0 0.0
        %1687 = vmatpush.msra.mxu0 0.0
        %1688 = vmatpush.msra.mxu0 0.0
        %1689 = vmatpush.msra.mxu0 0.0
        %1690 = vmatpush.msra.mxu0 %v1354
        %1691 = vmatmul.f32.gmra.mxu0 %v1441
        %v1692 = vpop.f32.mrf.mxu0
        %v1693 = vadd.f32 %v1375, %v1692
        %1694 = vmatmul.f32.gmra.mxu0 %v1443
        %v1695 = vpop.f32.mrf.mxu0
        %v1696 = vadd.f32 %v1375, %v1695
        %1697 = vdwg.mxu0
        %1698 = vmatpush.msra.mxu0 0.0
        %1699 = vmatpush.msra.mxu0 0.0
        %1700 = vmatpush.msra.mxu0 0.0
        %1701 = vmatpush.msra.mxu0 0.0
        %1702 = vmatpush.msra.mxu0 0.0
        %1703 = vmatpush.msra.mxu0 0.0
        %1704 = vmatpush.msra.mxu0 0.0
        %1705 = vmatpush.msra.mxu0 0.0
        %1706 = vmatpush.msra.mxu0 0.0
        %1707 = vmatpush.msra.mxu0 0.0
        %1708 = vmatpush.msra.mxu0 0.0
        %1709 = vmatpush.msra.mxu0 0.0
        %1710 = vmatpush.msra.mxu0 0.0
        %1711 = vmatpush.msra.mxu0 0.0
        %1712 = vmatpush.msra.mxu0 0.0
        %1713 = vmatpush.msra.mxu0 %v1355
        %1714 = vmatmul.f32.gmra.mxu0 %v1441
        %v1715 = vpop.f32.mrf.mxu0
        %v1716 = vadd.f32 %v1376, %v1715
        %1717 = vmatmul.f32.gmra.mxu0 %v1443
        %v1718 = vpop.f32.mrf.mxu0
        %v1719 = vadd.f32 %v1376, %v1718
        %1720 = vdwg.mxu0
        %1721 = vmatpush.msra.mxu0 0.0
        %1722 = vmatpush.msra.mxu0 0.0
        %1723 = vmatpush.msra.mxu0 0.0
        %1724 = vmatpush.msra.mxu0 0.0
        %1725 = vmatpush.msra.mxu0 0.0
        %1726 = vmatpush.msra.mxu0 0.0
        %1727 = vmatpush.msra.mxu0 0.0
        %1728 = vmatpush.msra.mxu0 0.0
        %1729 = vmatpush.msra.mxu0 0.0
        %1730 = vmatpush.msra.mxu0 0.0
        %1731 = vmatpush.msra.mxu0 0.0
        %1732 = vmatpush.msra.mxu0 0.0
        %1733 = vmatpush.msra.mxu0 0.0
        %1734 = vmatpush.msra.mxu0 0.0
        %1735 = vmatpush.msra.mxu0 0.0
        %1736 = vmatpush.msra.mxu0 %v1356
        %1737 = vmatmul.f32.gmra.mxu0 %v1441
        %v1738 = vpop.f32.mrf.mxu0
        %v1739 = vadd.f32 %v1377, %v1738
        %1740 = vmatmul.f32.gmra.mxu0 %v1443
        %v1741 = vpop.f32.mrf.mxu0
        %v1742 = vadd.f32 %v1377, %v1741
        %1743 = vdwg.mxu0
        %1744 = vmatpush.msra.mxu0 0.0
        %1745 = vmatpush.msra.mxu0 0.0
        %1746 = vmatpush.msra.mxu0 0.0
        %1747 = vmatpush.msra.mxu0 0.0
        %1748 = vmatpush.msra.mxu0 0.0
        %1749 = vmatpush.msra.mxu0 0.0
        %1750 = vmatpush.msra.mxu0 0.0
        %1751 = vmatpush.msra.mxu0 0.0
        %1752 = vmatpush.msra.mxu0 0.0
        %1753 = vmatpush.msra.mxu0 0.0
        %1754 = vmatpush.msra.mxu0 0.0
        %1755 = vmatpush.msra.mxu0 0.0
        %1756 = vmatpush.msra.mxu0 0.0
        %1757 = vmatpush.msra.mxu0 0.0
        %1758 = vmatpush.msra.mxu0 0.0
        %1759 = vmatpush.msra.mxu0 %v1357
        %1760 = vmatmul.f32.gmra.mxu0 %v1441
        %v1761 = vpop.f32.mrf.mxu0
        %v1762 = vadd.f32 %v1378, %v1761
        %1763 = vmatmul.f32.gmra.mxu0 %v1443
        %v1764 = vpop.f32.mrf.mxu0
        %v1765 = vadd.f32 %v1378, %v1764
        %1766 = vdwg.mxu0
        %1767 = vmatpush.msra.mxu0 0.0
        %1768 = vmatpush.msra.mxu0 0.0
        %1769 = vmatpush.msra.mxu0 0.0
        %1770 = vmatpush.msra.mxu0 0.0
        %1771 = vmatpush.msra.mxu0 0.0
        %1772 = vmatpush.msra.mxu0 0.0
        %1773 = vmatpush.msra.mxu0 0.0
        %1774 = vmatpush.msra.mxu0 0.0
        %1775 = vmatpush.msra.mxu0 0.0
        %1776 = vmatpush.msra.mxu0 0.0
        %1777 = vmatpush.msra.mxu0 0.0
        %1778 = vmatpush.msra.mxu0 0.0
        %1779 = vmatpush.msra.mxu0 0.0
        %1780 = vmatpush.msra.mxu0 0.0
        %1781 = vmatpush.msra.mxu0 0.0
        %1782 = vmatpush.msra.mxu0 %v1358
        %1783 = vmatmul.f32.gmra.mxu0 %v1441
        %v1784 = vpop.f32.mrf.mxu0
        %v1785 = vadd.f32 %v1379, %v1784
        %1786 = vmatmul.f32.gmra.mxu0 %v1443
        %v1787 = vpop.f32.mrf.mxu0
        %v1788 = vadd.f32 %v1379, %v1787
        %1789 = vdwg.mxu0
        %1790 = vmatpush.msra.mxu0 0.0
        %1791 = vmatpush.msra.mxu0 0.0
        %1792 = vmatpush.msra.mxu0 0.0
        %1793 = vmatpush.msra.mxu0 0.0
        %1794 = vmatpush.msra.mxu0 0.0
        %1795 = vmatpush.msra.mxu0 0.0
        %1796 = vmatpush.msra.mxu0 0.0
        %1797 = vmatpush.msra.mxu0 0.0
        %1798 = vmatpush.msra.mxu0 0.0
        %1799 = vmatpush.msra.mxu0 0.0
        %1800 = vmatpush.msra.mxu0 0.0
        %1801 = vmatpush.msra.mxu0 0.0
        %1802 = vmatpush.msra.mxu0 0.0
        %1803 = vmatpush.msra.mxu0 0.0
        %1804 = vmatpush.msra.mxu0 0.0
        %1805 = vmatpush.msra.mxu0 %v1359
        %1806 = vmatmul.f32.gmra.mxu0 %v1441
        %v1807 = vpop.f32.mrf.mxu0
        %v1808 = vadd.f32 %v1380, %v1807
        %1809 = vmatmul.f32.gmra.mxu0 %v1443
        %v1810 = vpop.f32.mrf.mxu0
        %v1811 = vadd.f32 %v1380, %v1810
        %1812 = vdwg.mxu0
        %v1813 = vadd.f32 %v1463, %v739
        %v1814 = vadd.f32 %v1486, %v740
        %v1815 = vadd.f32 %v1509, %v741
        %v1816 = vadd.f32 %v1532, %v742
        %v1817 = vadd.f32 %v1555, %v743
        %v1818 = vadd.f32 %v1578, %v744
        %v1819 = vadd.f32 %v1601, %v745
        %v1820 = vadd.f32 %v1624, %v746
        %v1821 = vadd.f32 %v1647, %v747
        %v1822 = vadd.f32 %v1670, %v748
        %v1823 = vadd.f32 %v1693, %v749
        %v1824 = vadd.f32 %v1716, %v750
        %v1825 = vadd.f32 %v1739, %v751
        %v1826 = vadd.f32 %v1762, %v752
        %v1827 = vadd.f32 %v1785, %v753
        %v1828 = vadd.f32 %v1808, %v754
        %v1829 = vadd.f32 %v1466, %v755
        %v1830 = vadd.f32 %v1489, %v756
        %v1831 = vadd.f32 %v1512, %v757
        %v1832 = vadd.f32 %v1535, %v758
        %v1833 = vadd.f32 %v1558, %v759
        %v1834 = vadd.f32 %v1581, %v760
        %v1835 = vadd.f32 %v1604, %v761
        %v1836 = vadd.f32 %v1627, %v762
        %v1837 = vadd.f32 %v1650, %v763
        %v1838 = vadd.f32 %v1673, %v764
        %v1839 = vadd.f32 %v1696, %v765
        %v1840 = vadd.f32 %v1719, %v766
        %v1841 = vadd.f32 %v1742, %v767
        %v1842 = vadd.f32 %v1765, %v768
        %v1843 = vadd.f32 %v1788, %v769
        %v1844 = vadd.f32 %v1811, %v770
        %1845 = vst [vmem:[%s697] sm:$0xff] %v1813
        %1846 = vst [vmem:[%s697 + $0x8] sm:$0xff] %v1814
        %1847 = vst [vmem:[%s697 + $0x10] sm:$0xff] %v1815
        %1848 = vst [vmem:[%s697 + $0x18] sm:$0xff] %v1816
        %1849 = vst [vmem:[%s697 + $0x20] sm:$0xff] %v1817
        %1850 = vst [vmem:[%s697 + $0x28] sm:$0xff] %v1818
        %1851 = vst [vmem:[%s697 + $0x30] sm:$0xff] %v1819
        %1852 = vst [vmem:[%s697 + $0x38] sm:$0xff] %v1820
        %1853 = vst [vmem:[%s697 + $0x40] sm:$0xff] %v1821
        %1854 = vst [vmem:[%s697 + $0x48] sm:$0xff] %v1822
        %1855 = vst [vmem:[%s697 + $0x50] sm:$0xff] %v1823
        %1856 = vst [vmem:[%s697 + $0x58] sm:$0xff] %v1824
        %1857 = vst [vmem:[%s697 + $0x60] sm:$0xff] %v1825
        %1858 = vst [vmem:[%s697 + $0x68] sm:$0xff] %v1826
        %1859 = vst [vmem:[%s697 + $0x70] sm:$0xff] %v1827
        %1860 = vst [vmem:[%s697 + $0x78] sm:$0xff] %v1828
        %1861 = vst [vmem:[%s697 + $0x80] sm:$0xff] %v1829
        %1862 = vst [vmem:[%s697 + $0x88] sm:$0xff] %v1830
        %1863 = vst [vmem:[%s697 + $0x90] sm:$0xff] %v1831
        %1864 = vst [vmem:[%s697 + $0x98] sm:$0xff] %v1832
        %1865 = vst [vmem:[%s697 + $0xa0] sm:$0xff] %v1833
        %1866 = vst [vmem:[%s697 + $0xa8] sm:$0xff] %v1834
        %1867 = vst [vmem:[%s697 + $0xb0] sm:$0xff] %v1835
        %1868 = vst [vmem:[%s697 + $0xb8] sm:$0xff] %v1836
        %1869 = vst [vmem:[%s697 + $0xc0] sm:$0xff] %v1837
        %1870 = vst [vmem:[%s697 + $0xc8] sm:$0xff] %v1838
        %1871 = vst [vmem:[%s697 + $0xd0] sm:$0xff] %v1839
        %1872 = vst [vmem:[%s697 + $0xd8] sm:$0xff] %v1840
        %1873 = vst [vmem:[%s697 + $0xe0] sm:$0xff] %v1841
        %1874 = vst [vmem:[%s697 + $0xe8] sm:$0xff] %v1842
        %1875 = vst [vmem:[%s697 + $0xf0] sm:$0xff] %v1843
        %1876 = vst [vmem:[%s697 + $0xf8] sm:$0xff] %v1844
        %v1877 = vld [vmem:[%s723 + $0x2] sm:$0x1]
        %v1878 = vld [vmem:[%s723 + $0xa] sm:$0x1]
        %v1879 = vld [vmem:[%s723 + $0x12] sm:$0x1]
        %v1880 = vld [vmem:[%s723 + $0x1a] sm:$0x1]
        %v1881 = vld [vmem:[%s723 + $0x22] sm:$0x1]
        %v1882 = vld [vmem:[%s723 + $0x2a] sm:$0x1]
        %v1883 = vld [vmem:[%s723 + $0x32] sm:$0x1]
        %v1884 = vld [vmem:[%s723 + $0x3a] sm:$0x1]
        %v1885 = vld [vmem:[%s723 + $0x42] sm:$0x1]
        %v1886 = vld [vmem:[%s723 + $0x4a] sm:$0x1]
        %v1887 = vld [vmem:[%s723 + $0x52] sm:$0x1]
        %v1888 = vld [vmem:[%s723 + $0x5a] sm:$0x1]
        %v1889 = vld [vmem:[%s723 + $0x62] sm:$0x1]
        %v1890 = vld [vmem:[%s723 + $0x6a] sm:$0x1]
        %v1891 = vld [vmem:[%s723 + $0x72] sm:$0x1]
        %v1892 = vld [vmem:[%s723 + $0x7a] sm:$0x1]
        %s1893 = scalar_lea.vmem %s648, 256 [#allocation3]
        %v1894 = vld [vmem:[%s1893] sm:$0xff]
        %v1895 = vld [vmem:[%s1893 + $0x8] sm:$0xff]
        %v1896 = vld [vmem:[%s1893 + $0x10] sm:$0xff]
        %v1897 = vld [vmem:[%s1893 + $0x18] sm:$0xff]
        %v1898 = vld [vmem:[%s1893 + $0x20] sm:$0xff]
        %v1899 = vld [vmem:[%s1893 + $0x28] sm:$0xff]
        %v1900 = vld [vmem:[%s1893 + $0x30] sm:$0xff]
        %v1901 = vld [vmem:[%s1893 + $0x38] sm:$0xff]
        %v1902 = vld [vmem:[%s1893 + $0x40] sm:$0xff]
        %v1903 = vld [vmem:[%s1893 + $0x48] sm:$0xff]
        %v1904 = vld [vmem:[%s1893 + $0x50] sm:$0xff]
        %v1905 = vld [vmem:[%s1893 + $0x58] sm:$0xff]
        %v1906 = vld [vmem:[%s1893 + $0x60] sm:$0xff]
        %v1907 = vld [vmem:[%s1893 + $0x68] sm:$0xff]
        %v1908 = vld [vmem:[%s1893 + $0x70] sm:$0xff]
        %v1909 = vld [vmem:[%s1893 + $0x78] sm:$0xff]
        %s1910 = scalar_lea.vmem %s655, 32 [#allocation4]
        %v1911 = vld [vmem:[%s1910] sm:$0xff]
        %v1912 = vld [vmem:[%s1910 + $0x8] sm:$0xff]
        %v1915 = vperm.slane %v1911, 0
        %v1916 = vperm.slane %v1911, 1
        %v1917 = vperm.slane %v1911, 2
        %v1918 = vperm.slane %v1911, 3
        %v1919 = vperm.slane %v1911, 4
        %v1920 = vperm.slane %v1911, 5
        %v1921 = vperm.slane %v1911, 6
        %v1922 = vperm.slane %v1911, 7
        %v1923 = vperm.slane %v1912, 0
        %v1924 = vperm.slane %v1912, 1
        %v1925 = vperm.slane %v1912, 2
        %v1926 = vperm.slane %v1912, 3
        %v1927 = vperm.slane %v1912, 4
        %v1928 = vperm.slane %v1912, 5
        %v1929 = vperm.slane %v1912, 6
        %v1930 = vperm.slane %v1912, 7
        %v1963 = vrot.slane %v1878, 7
        %v1964 = vsel %vm856, %v1963, %v1877
        %v1965 = vrot.slane %v1879, 6
        %v1966 = vsel %vm859, %v1965, %v1964
        %v1967 = vrot.slane %v1880, 5
        %v1968 = vsel %vm862, %v1967, %v1966
        %v1969 = vrot.slane %v1881, 4
        %v1970 = vsel %vm865, %v1969, %v1968
        %v1971 = vrot.slane %v1882, 3
        %v1972 = vsel %vm868, %v1971, %v1970
        %v1973 = vrot.slane %v1883, 2
        %v1974 = vsel %vm871, %v1973, %v1972
        %v1975 = vrot.slane %v1884, 1
        %v1976 = vsel %vm874, %v1975, %v1974
        %v1977 = vrot.slane %v1886, 7
        %v1978 = vsel %vm856, %v1977, %v1885
        %v1979 = vrot.slane %v1887, 6
        %v1980 = vsel %vm859, %v1979, %v1978
        %v1981 = vrot.slane %v1888, 5
        %v1982 = vsel %vm862, %v1981, %v1980
        %v1983 = vrot.slane %v1889, 4
        %v1984 = vsel %vm865, %v1983, %v1982
        %v1985 = vrot.slane %v1890, 3
        %v1986 = vsel %vm868, %v1985, %v1984
        %v1987 = vrot.slane %v1891, 2
        %v1988 = vsel %vm871, %v1987, %v1986
        %v1989 = vrot.slane %v1892, 1
        %v1990 = vsel %vm874, %v1989, %v1988
        %v1991 = vsel %vm890, %v1976, 0
        %v1993 = vsel %vm890, %v1990, 0
        %1995 = vmatpush.msra.mxu0 0.0
        %1996 = vmatpush.msra.mxu0 0.0
        %1997 = vmatpush.msra.mxu0 0.0
        %1998 = vmatpush.msra.mxu0 0.0
        %1999 = vmatpush.msra.mxu0 0.0
        %2000 = vmatpush.msra.mxu0 0.0
        %2001 = vmatpush.msra.mxu0 0.0
        %2002 = vmatpush.msra.mxu0 0.0
        %2003 = vmatpush.msra.mxu0 0.0
        %2004 = vmatpush.msra.mxu0 0.0
        %2005 = vmatpush.msra.mxu0 0.0
        %2006 = vmatpush.msra.mxu0 0.0
        %2007 = vmatpush.msra.mxu0 0.0
        %2008 = vmatpush.msra.mxu0 0.0
        %2009 = vmatpush.msra.mxu0 0.0
        %2010 = vmatpush.msra.mxu0 %v1894
        %2011 = vmatmul.f32.gmra.mxu0 %v1991
        %v2012 = vpop.f32.mrf.mxu0
        %v2013 = vadd.f32 %v1915, %v2012
        %2014 = vmatmul.f32.gmra.mxu0 %v1993
        %v2015 = vpop.f32.mrf.mxu0
        %v2016 = vadd.f32 %v1915, %v2015
        %2017 = vdwg.mxu0
        %2018 = vmatpush.msra.mxu0 0.0
        %2019 = vmatpush.msra.mxu0 0.0
        %2020 = vmatpush.msra.mxu0 0.0
        %2021 = vmatpush.msra.mxu0 0.0
        %2022 = vmatpush.msra.mxu0 0.0
        %2023 = vmatpush.msra.mxu0 0.0
        %2024 = vmatpush.msra.mxu0 0.0
        %2025 = vmatpush.msra.mxu0 0.0
        %2026 = vmatpush.msra.mxu0 0.0
        %2027 = vmatpush.msra.mxu0 0.0
        %2028 = vmatpush.msra.mxu0 0.0
        %2029 = vmatpush.msra.mxu0 0.0
        %2030 = vmatpush.msra.mxu0 0.0
        %2031 = vmatpush.msra.mxu0 0.0
        %2032 = vmatpush.msra.mxu0 0.0
        %2033 = vmatpush.msra.mxu0 %v1895
        %2034 = vmatmul.f32.gmra.mxu0 %v1991
        %v2035 = vpop.f32.mrf.mxu0
        %v2036 = vadd.f32 %v1916, %v2035
        %2037 = vmatmul.f32.gmra.mxu0 %v1993
        %v2038 = vpop.f32.mrf.mxu0
        %v2039 = vadd.f32 %v1916, %v2038
        %2040 = vdwg.mxu0
        %2041 = vmatpush.msra.mxu0 0.0
        %2042 = vmatpush.msra.mxu0 0.0
        %2043 = vmatpush.msra.mxu0 0.0
        %2044 = vmatpush.msra.mxu0 0.0
        %2045 = vmatpush.msra.mxu0 0.0
        %2046 = vmatpush.msra.mxu0 0.0
        %2047 = vmatpush.msra.mxu0 0.0
        %2048 = vmatpush.msra.mxu0 0.0
        %2049 = vmatpush.msra.mxu0 0.0
        %2050 = vmatpush.msra.mxu0 0.0
        %2051 = vmatpush.msra.mxu0 0.0
        %2052 = vmatpush.msra.mxu0 0.0
        %2053 = vmatpush.msra.mxu0 0.0
        %2054 = vmatpush.msra.mxu0 0.0
        %2055 = vmatpush.msra.mxu0 0.0
        %2056 = vmatpush.msra.mxu0 %v1896
        %2057 = vmatmul.f32.gmra.mxu0 %v1991
        %v2058 = vpop.f32.mrf.mxu0
        %v2059 = vadd.f32 %v1917, %v2058
        %2060 = vmatmul.f32.gmra.mxu0 %v1993
        %v2061 = vpop.f32.mrf.mxu0
        %v2062 = vadd.f32 %v1917, %v2061
        %2063 = vdwg.mxu0
        %2064 = vmatpush.msra.mxu0 0.0
        %2065 = vmatpush.msra.mxu0 0.0
        %2066 = vmatpush.msra.mxu0 0.0
        %2067 = vmatpush.msra.mxu0 0.0
        %2068 = vmatpush.msra.mxu0 0.0
        %2069 = vmatpush.msra.mxu0 0.0
        %2070 = vmatpush.msra.mxu0 0.0
        %2071 = vmatpush.msra.mxu0 0.0
        %2072 = vmatpush.msra.mxu0 0.0
        %2073 = vmatpush.msra.mxu0 0.0
        %2074 = vmatpush.msra.mxu0 0.0
        %2075 = vmatpush.msra.mxu0 0.0
        %2076 = vmatpush.msra.mxu0 0.0
        %2077 = vmatpush.msra.mxu0 0.0
        %2078 = vmatpush.msra.mxu0 0.0
        %2079 = vmatpush.msra.mxu0 %v1897
        %2080 = vmatmul.f32.gmra.mxu0 %v1991
        %v2081 = vpop.f32.mrf.mxu0
        %v2082 = vadd.f32 %v1918, %v2081
        %2083 = vmatmul.f32.gmra.mxu0 %v1993
        %v2084 = vpop.f32.mrf.mxu0
        %v2085 = vadd.f32 %v1918, %v2084
        %2086 = vdwg.mxu0
        %2087 = vmatpush.msra.mxu0 0.0
        %2088 = vmatpush.msra.mxu0 0.0
        %2089 = vmatpush.msra.mxu0 0.0
        %2090 = vmatpush.msra.mxu0 0.0
        %2091 = vmatpush.msra.mxu0 0.0
        %2092 = vmatpush.msra.mxu0 0.0
        %2093 = vmatpush.msra.mxu0 0.0
        %2094 = vmatpush.msra.mxu0 0.0
        %2095 = vmatpush.msra.mxu0 0.0
        %2096 = vmatpush.msra.mxu0 0.0
        %2097 = vmatpush.msra.mxu0 0.0
        %2098 = vmatpush.msra.mxu0 0.0
        %2099 = vmatpush.msra.mxu0 0.0
        %2100 = vmatpush.msra.mxu0 0.0
        %2101 = vmatpush.msra.mxu0 0.0
        %2102 = vmatpush.msra.mxu0 %v1898
        %2103 = vmatmul.f32.gmra.mxu0 %v1991
        %v2104 = vpop.f32.mrf.mxu0
        %v2105 = vadd.f32 %v1919, %v2104
        %2106 = vmatmul.f32.gmra.mxu0 %v1993
        %v2107 = vpop.f32.mrf.mxu0
        %v2108 = vadd.f32 %v1919, %v2107
        %2109 = vdwg.mxu0
        %2110 = vmatpush.msra.mxu0 0.0
        %2111 = vmatpush.msra.mxu0 0.0
        %2112 = vmatpush.msra.mxu0 0.0
        %2113 = vmatpush.msra.mxu0 0.0
        %2114 = vmatpush.msra.mxu0 0.0
        %2115 = vmatpush.msra.mxu0 0.0
        %2116 = vmatpush.msra.mxu0 0.0
        %2117 = vmatpush.msra.mxu0 0.0
        %2118 = vmatpush.msra.mxu0 0.0
        %2119 = vmatpush.msra.mxu0 0.0
        %2120 = vmatpush.msra.mxu0 0.0
        %2121 = vmatpush.msra.mxu0 0.0
        %2122 = vmatpush.msra.mxu0 0.0
        %2123 = vmatpush.msra.mxu0 0.0
        %2124 = vmatpush.msra.mxu0 0.0
        %2125 = vmatpush.msra.mxu0 %v1899
        %2126 = vmatmul.f32.gmra.mxu0 %v1991
        %v2127 = vpop.f32.mrf.mxu0
        %v2128 = vadd.f32 %v1920, %v2127
        %2129 = vmatmul.f32.gmra.mxu0 %v1993
        %v2130 = vpop.f32.mrf.mxu0
        %v2131 = vadd.f32 %v1920, %v2130
        %2132 = vdwg.mxu0
        %2133 = vmatpush.msra.mxu0 0.0
        %2134 = vmatpush.msra.mxu0 0.0
        %2135 = vmatpush.msra.mxu0 0.0
        %2136 = vmatpush.msra.mxu0 0.0
        %2137 = vmatpush.msra.mxu0 0.0
        %2138 = vmatpush.msra.mxu0 0.0
        %2139 = vmatpush.msra.mxu0 0.0
        %2140 = vmatpush.msra.mxu0 0.0
        %2141 = vmatpush.msra.mxu0 0.0
        %2142 = vmatpush.msra.mxu0 0.0
        %2143 = vmatpush.msra.mxu0 0.0
        %2144 = vmatpush.msra.mxu0 0.0
        %2145 = vmatpush.msra.mxu0 0.0
        %2146 = vmatpush.msra.mxu0 0.0
        %2147 = vmatpush.msra.mxu0 0.0
        %2148 = vmatpush.msra.mxu0 %v1900
        %2149 = vmatmul.f32.gmra.mxu0 %v1991
        %v2150 = vpop.f32.mrf.mxu0
        %v2151 = vadd.f32 %v1921, %v2150
        %2152 = vmatmul.f32.gmra.mxu0 %v1993
        %v2153 = vpop.f32.mrf.mxu0
        %v2154 = vadd.f32 %v1921, %v2153
        %2155 = vdwg.mxu0
        %2156 = vmatpush.msra.mxu0 0.0
        %2157 = vmatpush.msra.mxu0 0.0
        %2158 = vmatpush.msra.mxu0 0.0
        %2159 = vmatpush.msra.mxu0 0.0
        %2160 = vmatpush.msra.mxu0 0.0
        %2161 = vmatpush.msra.mxu0 0.0
        %2162 = vmatpush.msra.mxu0 0.0
        %2163 = vmatpush.msra.mxu0 0.0
        %2164 = vmatpush.msra.mxu0 0.0
        %2165 = vmatpush.msra.mxu0 0.0
        %2166 = vmatpush.msra.mxu0 0.0
        %2167 = vmatpush.msra.mxu0 0.0
        %2168 = vmatpush.msra.mxu0 0.0
        %2169 = vmatpush.msra.mxu0 0.0
        %2170 = vmatpush.msra.mxu0 0.0
        %2171 = vmatpush.msra.mxu0 %v1901
        %2172 = vmatmul.f32.gmra.mxu0 %v1991
        %v2173 = vpop.f32.mrf.mxu0
        %v2174 = vadd.f32 %v1922, %v2173
        %2175 = vmatmul.f32.gmra.mxu0 %v1993
        %v2176 = vpop.f32.mrf.mxu0
        %v2177 = vadd.f32 %v1922, %v2176
        %2178 = vdwg.mxu0
        %2179 = vmatpush.msra.mxu0 0.0
        %2180 = vmatpush.msra.mxu0 0.0
        %2181 = vmatpush.msra.mxu0 0.0
        %2182 = vmatpush.msra.mxu0 0.0
        %2183 = vmatpush.msra.mxu0 0.0
        %2184 = vmatpush.msra.mxu0 0.0
        %2185 = vmatpush.msra.mxu0 0.0
        %2186 = vmatpush.msra.mxu0 0.0
        %2187 = vmatpush.msra.mxu0 0.0
        %2188 = vmatpush.msra.mxu0 0.0
        %2189 = vmatpush.msra.mxu0 0.0
        %2190 = vmatpush.msra.mxu0 0.0
        %2191 = vmatpush.msra.mxu0 0.0
        %2192 = vmatpush.msra.mxu0 0.0
        %2193 = vmatpush.msra.mxu0 0.0
        %2194 = vmatpush.msra.mxu0 %v1902
        %2195 = vmatmul.f32.gmra.mxu0 %v1991
        %v2196 = vpop.f32.mrf.mxu0
        %v2197 = vadd.f32 %v1923, %v2196
        %2198 = vmatmul.f32.gmra.mxu0 %v1993
        %v2199 = vpop.f32.mrf.mxu0
        %v2200 = vadd.f32 %v1923, %v2199
        %2201 = vdwg.mxu0
        %2202 = vmatpush.msra.mxu0 0.0
        %2203 = vmatpush.msra.mxu0 0.0
        %2204 = vmatpush.msra.mxu0 0.0
        %2205 = vmatpush.msra.mxu0 0.0
        %2206 = vmatpush.msra.mxu0 0.0
        %2207 = vmatpush.msra.mxu0 0.0
        %2208 = vmatpush.msra.mxu0 0.0
        %2209 = vmatpush.msra.mxu0 0.0
        %2210 = vmatpush.msra.mxu0 0.0
        %2211 = vmatpush.msra.mxu0 0.0
        %2212 = vmatpush.msra.mxu0 0.0
        %2213 = vmatpush.msra.mxu0 0.0
        %2214 = vmatpush.msra.mxu0 0.0
        %2215 = vmatpush.msra.mxu0 0.0
        %2216 = vmatpush.msra.mxu0 0.0
        %2217 = vmatpush.msra.mxu0 %v1903
        %2218 = vmatmul.f32.gmra.mxu0 %v1991
        %v2219 = vpop.f32.mrf.mxu0
        %v2220 = vadd.f32 %v1924, %v2219
        %2221 = vmatmul.f32.gmra.mxu0 %v1993
        %v2222 = vpop.f32.mrf.mxu0
        %v2223 = vadd.f32 %v1924, %v2222
        %2224 = vdwg.mxu0
        %2225 = vmatpush.msra.mxu0 0.0
        %2226 = vmatpush.msra.mxu0 0.0
        %2227 = vmatpush.msra.mxu0 0.0
        %2228 = vmatpush.msra.mxu0 0.0
        %2229 = vmatpush.msra.mxu0 0.0
        %2230 = vmatpush.msra.mxu0 0.0
        %2231 = vmatpush.msra.mxu0 0.0
        %2232 = vmatpush.msra.mxu0 0.0
        %2233 = vmatpush.msra.mxu0 0.0
        %2234 = vmatpush.msra.mxu0 0.0
        %2235 = vmatpush.msra.mxu0 0.0
        %2236 = vmatpush.msra.mxu0 0.0
        %2237 = vmatpush.msra.mxu0 0.0
        %2238 = vmatpush.msra.mxu0 0.0
        %2239 = vmatpush.msra.mxu0 0.0
        %2240 = vmatpush.msra.mxu0 %v1904
        %2241 = vmatmul.f32.gmra.mxu0 %v1991
        %v2242 = vpop.f32.mrf.mxu0
        %v2243 = vadd.f32 %v1925, %v2242
        %2244 = vmatmul.f32.gmra.mxu0 %v1993
        %v2245 = vpop.f32.mrf.mxu0
        %v2246 = vadd.f32 %v1925, %v2245
        %2247 = vdwg.mxu0
        %2248 = vmatpush.msra.mxu0 0.0
        %2249 = vmatpush.msra.mxu0 0.0
        %2250 = vmatpush.msra.mxu0 0.0
        %2251 = vmatpush.msra.mxu0 0.0
        %2252 = vmatpush.msra.mxu0 0.0
        %2253 = vmatpush.msra.mxu0 0.0
        %2254 = vmatpush.msra.mxu0 0.0
        %2255 = vmatpush.msra.mxu0 0.0
        %2256 = vmatpush.msra.mxu0 0.0
        %2257 = vmatpush.msra.mxu0 0.0
        %2258 = vmatpush.msra.mxu0 0.0
        %2259 = vmatpush.msra.mxu0 0.0
        %2260 = vmatpush.msra.mxu0 0.0
        %2261 = vmatpush.msra.mxu0 0.0
        %2262 = vmatpush.msra.mxu0 0.0
        %2263 = vmatpush.msra.mxu0 %v1905
        %2264 = vmatmul.f32.gmra.mxu0 %v1991
        %v2265 = vpop.f32.mrf.mxu0
        %v2266 = vadd.f32 %v1926, %v2265
        %2267 = vmatmul.f32.gmra.mxu0 %v1993
        %v2268 = vpop.f32.mrf.mxu0
        %v2269 = vadd.f32 %v1926, %v2268
        %2270 = vdwg.mxu0
        %2271 = vmatpush.msra.mxu0 0.0
        %2272 = vmatpush.msra.mxu0 0.0
        %2273 = vmatpush.msra.mxu0 0.0
        %2274 = vmatpush.msra.mxu0 0.0
        %2275 = vmatpush.msra.mxu0 0.0
        %2276 = vmatpush.msra.mxu0 0.0
        %2277 = vmatpush.msra.mxu0 0.0
        %2278 = vmatpush.msra.mxu0 0.0
        %2279 = vmatpush.msra.mxu0 0.0
        %2280 = vmatpush.msra.mxu0 0.0
        %2281 = vmatpush.msra.mxu0 0.0
        %2282 = vmatpush.msra.mxu0 0.0
        %2283 = vmatpush.msra.mxu0 0.0
        %2284 = vmatpush.msra.mxu0 0.0
        %2285 = vmatpush.msra.mxu0 0.0
        %2286 = vmatpush.msra.mxu0 %v1906
        %2287 = vmatmul.f32.gmra.mxu0 %v1991
        %v2288 = vpop.f32.mrf.mxu0
        %v2289 = vadd.f32 %v1927, %v2288
        %2290 = vmatmul.f32.gmra.mxu0 %v1993
        %v2291 = vpop.f32.mrf.mxu0
        %v2292 = vadd.f32 %v1927, %v2291
        %2293 = vdwg.mxu0
        %2294 = vmatpush.msra.mxu0 0.0
        %2295 = vmatpush.msra.mxu0 0.0
        %2296 = vmatpush.msra.mxu0 0.0
        %2297 = vmatpush.msra.mxu0 0.0
        %2298 = vmatpush.msra.mxu0 0.0
        %2299 = vmatpush.msra.mxu0 0.0
        %2300 = vmatpush.msra.mxu0 0.0
        %2301 = vmatpush.msra.mxu0 0.0
        %2302 = vmatpush.msra.mxu0 0.0
        %2303 = vmatpush.msra.mxu0 0.0
        %2304 = vmatpush.msra.mxu0 0.0
        %2305 = vmatpush.msra.mxu0 0.0
        %2306 = vmatpush.msra.mxu0 0.0
        %2307 = vmatpush.msra.mxu0 0.0
        %2308 = vmatpush.msra.mxu0 0.0
        %2309 = vmatpush.msra.mxu0 %v1907
        %2310 = vmatmul.f32.gmra.mxu0 %v1991
        %v2311 = vpop.f32.mrf.mxu0
        %v2312 = vadd.f32 %v1928, %v2311
        %2313 = vmatmul.f32.gmra.mxu0 %v1993
        %v2314 = vpop.f32.mrf.mxu0
        %v2315 = vadd.f32 %v1928, %v2314
        %2316 = vdwg.mxu0
        %2317 = vmatpush.msra.mxu0 0.0
        %2318 = vmatpush.msra.mxu0 0.0
        %2319 = vmatpush.msra.mxu0 0.0
        %2320 = vmatpush.msra.mxu0 0.0
        %2321 = vmatpush.msra.mxu0 0.0
        %2322 = vmatpush.msra.mxu0 0.0
        %2323 = vmatpush.msra.mxu0 0.0
        %2324 = vmatpush.msra.mxu0 0.0
        %2325 = vmatpush.msra.mxu0 0.0
        %2326 = vmatpush.msra.mxu0 0.0
        %2327 = vmatpush.msra.mxu0 0.0
        %2328 = vmatpush.msra.mxu0 0.0
        %2329 = vmatpush.msra.mxu0 0.0
        %2330 = vmatpush.msra.mxu0 0.0
        %2331 = vmatpush.msra.mxu0 0.0
        %2332 = vmatpush.msra.mxu0 %v1908
        %2333 = vmatmul.f32.gmra.mxu0 %v1991
        %v2334 = vpop.f32.mrf.mxu0
        %v2335 = vadd.f32 %v1929, %v2334
        %2336 = vmatmul.f32.gmra.mxu0 %v1993
        %v2337 = vpop.f32.mrf.mxu0
        %v2338 = vadd.f32 %v1929, %v2337
        %2339 = vdwg.mxu0
        %2340 = vmatpush.msra.mxu0 0.0
        %2341 = vmatpush.msra.mxu0 0.0
        %2342 = vmatpush.msra.mxu0 0.0
        %2343 = vmatpush.msra.mxu0 0.0
        %2344 = vmatpush.msra.mxu0 0.0
        %2345 = vmatpush.msra.mxu0 0.0
        %2346 = vmatpush.msra.mxu0 0.0
        %2347 = vmatpush.msra.mxu0 0.0
        %2348 = vmatpush.msra.mxu0 0.0
        %2349 = vmatpush.msra.mxu0 0.0
        %2350 = vmatpush.msra.mxu0 0.0
        %2351 = vmatpush.msra.mxu0 0.0
        %2352 = vmatpush.msra.mxu0 0.0
        %2353 = vmatpush.msra.mxu0 0.0
        %2354 = vmatpush.msra.mxu0 0.0
        %2355 = vmatpush.msra.mxu0 %v1909
        %2356 = vmatmul.f32.gmra.mxu0 %v1991
        %v2357 = vpop.f32.mrf.mxu0
        %v2358 = vadd.f32 %v1930, %v2357
        %2359 = vmatmul.f32.gmra.mxu0 %v1993
        %v2360 = vpop.f32.mrf.mxu0
        %v2361 = vadd.f32 %v1930, %v2360
        %2362 = vdwg.mxu0
        %v2363 = vadd.f32 %v2013, %v739
        %v2364 = vadd.f32 %v2036, %v740
        %v2365 = vadd.f32 %v2059, %v741
        %v2366 = vadd.f32 %v2082, %v742
        %v2367 = vadd.f32 %v2105, %v743
        %v2368 = vadd.f32 %v2128, %v744
        %v2369 = vadd.f32 %v2151, %v745
        %v2370 = vadd.f32 %v2174, %v746
        %v2371 = vadd.f32 %v2197, %v747
        %v2372 = vadd.f32 %v2220, %v748
        %v2373 = vadd.f32 %v2243, %v749
        %v2374 = vadd.f32 %v2266, %v750
        %v2375 = vadd.f32 %v2289, %v751
        %v2376 = vadd.f32 %v2312, %v752
        %v2377 = vadd.f32 %v2335, %v753
        %v2378 = vadd.f32 %v2358, %v754
        %v2379 = vadd.f32 %v2016, %v755
        %v2380 = vadd.f32 %v2039, %v756
        %v2381 = vadd.f32 %v2062, %v757
        %v2382 = vadd.f32 %v2085, %v758
        %v2383 = vadd.f32 %v2108, %v759
        %v2384 = vadd.f32 %v2131, %v760
        %v2385 = vadd.f32 %v2154, %v761
        %v2386 = vadd.f32 %v2177, %v762
        %v2387 = vadd.f32 %v2200, %v763
        %v2388 = vadd.f32 %v2223, %v764
        %v2389 = vadd.f32 %v2246, %v765
        %v2390 = vadd.f32 %v2269, %v766
        %v2391 = vadd.f32 %v2292, %v767
        %v2392 = vadd.f32 %v2315, %v768
        %v2393 = vadd.f32 %v2338, %v769
        %v2394 = vadd.f32 %v2361, %v770
        %2395 = vst [vmem:[%s704] sm:$0xff] %v2363
        %2396 = vst [vmem:[%s704 + $0x8] sm:$0xff] %v2364
        %2397 = vst [vmem:[%s704 + $0x10] sm:$0xff] %v2365
        %2398 = vst [vmem:[%s704 + $0x18] sm:$0xff] %v2366
        %2399 = vst [vmem:[%s704 + $0x20] sm:$0xff] %v2367
        %2400 = vst [vmem:[%s704 + $0x28] sm:$0xff] %v2368
        %2401 = vst [vmem:[%s704 + $0x30] sm:$0xff] %v2369
        %2402 = vst [vmem:[%s704 + $0x38] sm:$0xff] %v2370
        %2403 = vst [vmem:[%s704 + $0x40] sm:$0xff] %v2371
        %2404 = vst [vmem:[%s704 + $0x48] sm:$0xff] %v2372
        %2405 = vst [vmem:[%s704 + $0x50] sm:$0xff] %v2373
        %2406 = vst [vmem:[%s704 + $0x58] sm:$0xff] %v2374
        %2407 = vst [vmem:[%s704 + $0x60] sm:$0xff] %v2375
        %2408 = vst [vmem:[%s704 + $0x68] sm:$0xff] %v2376
        %2409 = vst [vmem:[%s704 + $0x70] sm:$0xff] %v2377
        %2410 = vst [vmem:[%s704 + $0x78] sm:$0xff] %v2378
        %2411 = vst [vmem:[%s704 + $0x80] sm:$0xff] %v2379
        %2412 = vst [vmem:[%s704 + $0x88] sm:$0xff] %v2380
        %2413 = vst [vmem:[%s704 + $0x90] sm:$0xff] %v2381
        %2414 = vst [vmem:[%s704 + $0x98] sm:$0xff] %v2382
        %2415 = vst [vmem:[%s704 + $0xa0] sm:$0xff] %v2383
        %2416 = vst [vmem:[%s704 + $0xa8] sm:$0xff] %v2384
        %2417 = vst [vmem:[%s704 + $0xb0] sm:$0xff] %v2385
        %2418 = vst [vmem:[%s704 + $0xb8] sm:$0xff] %v2386
        %2419 = vst [vmem:[%s704 + $0xc0] sm:$0xff] %v2387
        %2420 = vst [vmem:[%s704 + $0xc8] sm:$0xff] %v2388
        %2421 = vst [vmem:[%s704 + $0xd0] sm:$0xff] %v2389
        %2422 = vst [vmem:[%s704 + $0xd8] sm:$0xff] %v2390
        %2423 = vst [vmem:[%s704 + $0xe0] sm:$0xff] %v2391
        %2424 = vst [vmem:[%s704 + $0xe8] sm:$0xff] %v2392
        %2425 = vst [vmem:[%s704 + $0xf0] sm:$0xff] %v2393
        %2426 = vst [vmem:[%s704 + $0xf8] sm:$0xff] %v2394
        %v2427 = vld [vmem:[%s723 + $0x3] sm:$0x1]
        %v2428 = vld [vmem:[%s723 + $0xb] sm:$0x1]
        %v2429 = vld [vmem:[%s723 + $0x13] sm:$0x1]
        %v2430 = vld [vmem:[%s723 + $0x1b] sm:$0x1]
        %v2431 = vld [vmem:[%s723 + $0x23] sm:$0x1]
        %v2432 = vld [vmem:[%s723 + $0x2b] sm:$0x1]
        %v2433 = vld [vmem:[%s723 + $0x33] sm:$0x1]
        %v2434 = vld [vmem:[%s723 + $0x3b] sm:$0x1]
        %v2435 = vld [vmem:[%s723 + $0x43] sm:$0x1]
        %v2436 = vld [vmem:[%s723 + $0x4b] sm:$0x1]
        %v2437 = vld [vmem:[%s723 + $0x53] sm:$0x1]
        %v2438 = vld [vmem:[%s723 + $0x5b] sm:$0x1]
        %v2439 = vld [vmem:[%s723 + $0x63] sm:$0x1]
        %v2440 = vld [vmem:[%s723 + $0x6b] sm:$0x1]
        %v2441 = vld [vmem:[%s723 + $0x73] sm:$0x1]
        %v2442 = vld [vmem:[%s723 + $0x7b] sm:$0x1]
        %s2443 = scalar_lea.vmem %s648, 384 [#allocation3]
        %v2444 = vld [vmem:[%s2443] sm:$0xff]
        %v2445 = vld [vmem:[%s2443 + $0x8] sm:$0xff]
        %v2446 = vld [vmem:[%s2443 + $0x10] sm:$0xff]
        %v2447 = vld [vmem:[%s2443 + $0x18] sm:$0xff]
        %v2448 = vld [vmem:[%s2443 + $0x20] sm:$0xff]
        %v2449 = vld [vmem:[%s2443 + $0x28] sm:$0xff]
        %v2450 = vld [vmem:[%s2443 + $0x30] sm:$0xff]
        %v2451 = vld [vmem:[%s2443 + $0x38] sm:$0xff]
        %v2452 = vld [vmem:[%s2443 + $0x40] sm:$0xff]
        %v2453 = vld [vmem:[%s2443 + $0x48] sm:$0xff]
        %v2454 = vld [vmem:[%s2443 + $0x50] sm:$0xff]
        %v2455 = vld [vmem:[%s2443 + $0x58] sm:$0xff]
        %v2456 = vld [vmem:[%s2443 + $0x60] sm:$0xff]
        %v2457 = vld [vmem:[%s2443 + $0x68] sm:$0xff]
        %v2458 = vld [vmem:[%s2443 + $0x70] sm:$0xff]
        %v2459 = vld [vmem:[%s2443 + $0x78] sm:$0xff]
        %s2460 = scalar_lea.vmem %s655, 48 [#allocation4]
        %v2461 = vld [vmem:[%s2460] sm:$0xff]
        %v2462 = vld [vmem:[%s2460 + $0x8] sm:$0xff]
        %v2465 = vperm.slane %v2461, 0
        %v2466 = vperm.slane %v2461, 1
        %v2467 = vperm.slane %v2461, 2
        %v2468 = vperm.slane %v2461, 3
        %v2469 = vperm.slane %v2461, 4
        %v2470 = vperm.slane %v2461, 5
        %v2471 = vperm.slane %v2461, 6
        %v2472 = vperm.slane %v2461, 7
        %v2473 = vperm.slane %v2462, 0
        %v2474 = vperm.slane %v2462, 1
        %v2475 = vperm.slane %v2462, 2
        %v2476 = vperm.slane %v2462, 3
        %v2477 = vperm.slane %v2462, 4
        %v2478 = vperm.slane %v2462, 5
        %v2479 = vperm.slane %v2462, 6
        %v2480 = vperm.slane %v2462, 7
        %v2513 = vrot.slane %v2428, 7
        %v2514 = vsel %vm856, %v2513, %v2427
        %v2515 = vrot.slane %v2429, 6
        %v2516 = vsel %vm859, %v2515, %v2514
        %v2517 = vrot.slane %v2430, 5
        %v2518 = vsel %vm862, %v2517, %v2516
        %v2519 = vrot.slane %v2431, 4
        %v2520 = vsel %vm865, %v2519, %v2518
        %v2521 = vrot.slane %v2432, 3
        %v2522 = vsel %vm868, %v2521, %v2520
        %v2523 = vrot.slane %v2433, 2
        %v2524 = vsel %vm871, %v2523, %v2522
        %v2525 = vrot.slane %v2434, 1
        %v2526 = vsel %vm874, %v2525, %v2524
        %v2527 = vrot.slane %v2436, 7
        %v2528 = vsel %vm856, %v2527, %v2435
        %v2529 = vrot.slane %v2437, 6
        %v2530 = vsel %vm859, %v2529, %v2528
        %v2531 = vrot.slane %v2438, 5
        %v2532 = vsel %vm862, %v2531, %v2530
        %v2533 = vrot.slane %v2439, 4
        %v2534 = vsel %vm865, %v2533, %v2532
        %v2535 = vrot.slane %v2440, 3
        %v2536 = vsel %vm868, %v2535, %v2534
        %v2537 = vrot.slane %v2441, 2
        %v2538 = vsel %vm871, %v2537, %v2536
        %v2539 = vrot.slane %v2442, 1
        %v2540 = vsel %vm874, %v2539, %v2538
        %v2541 = vsel %vm890, %v2526, 0
        %v2543 = vsel %vm890, %v2540, 0
        %2545 = vmatpush.msra.mxu0 0.0
        %2546 = vmatpush.msra.mxu0 0.0
        %2547 = vmatpush.msra.mxu0 0.0
        %2548 = vmatpush.msra.mxu0 0.0
        %2549 = vmatpush.msra.mxu0 0.0
        %2550 = vmatpush.msra.mxu0 0.0
        %2551 = vmatpush.msra.mxu0 0.0
        %2552 = vmatpush.msra.mxu0 0.0
        %2553 = vmatpush.msra.mxu0 0.0
        %2554 = vmatpush.msra.mxu0 0.0
        %2555 = vmatpush.msra.mxu0 0.0
        %2556 = vmatpush.msra.mxu0 0.0
        %2557 = vmatpush.msra.mxu0 0.0
        %2558 = vmatpush.msra.mxu0 0.0
        %2559 = vmatpush.msra.mxu0 0.0
        %2560 = vmatpush.msra.mxu0 %v2444
        %2561 = vmatmul.f32.gmra.mxu0 %v2541
        %v2562 = vpop.f32.mrf.mxu0
        %v2563 = vadd.f32 %v2465, %v2562
        %2564 = vmatmul.f32.gmra.mxu0 %v2543
        %v2565 = vpop.f32.mrf.mxu0
        %v2566 = vadd.f32 %v2465, %v2565
        %2567 = vdwg.mxu0
        %2568 = vmatpush.msra.mxu0 0.0
        %2569 = vmatpush.msra.mxu0 0.0
        %2570 = vmatpush.msra.mxu0 0.0
        %2571 = vmatpush.msra.mxu0 0.0
        %2572 = vmatpush.msra.mxu0 0.0
        %2573 = vmatpush.msra.mxu0 0.0
        %2574 = vmatpush.msra.mxu0 0.0
        %2575 = vmatpush.msra.mxu0 0.0
        %2576 = vmatpush.msra.mxu0 0.0
        %2577 = vmatpush.msra.mxu0 0.0
        %2578 = vmatpush.msra.mxu0 0.0
        %2579 = vmatpush.msra.mxu0 0.0
        %2580 = vmatpush.msra.mxu0 0.0
        %2581 = vmatpush.msra.mxu0 0.0
        %2582 = vmatpush.msra.mxu0 0.0
        %2583 = vmatpush.msra.mxu0 %v2445
        %2584 = vmatmul.f32.gmra.mxu0 %v2541
        %v2585 = vpop.f32.mrf.mxu0
        %v2586 = vadd.f32 %v2466, %v2585
        %2587 = vmatmul.f32.gmra.mxu0 %v2543
        %v2588 = vpop.f32.mrf.mxu0
        %v2589 = vadd.f32 %v2466, %v2588
        %2590 = vdwg.mxu0
        %2591 = vmatpush.msra.mxu0 0.0
        %2592 = vmatpush.msra.mxu0 0.0
        %2593 = vmatpush.msra.mxu0 0.0
        %2594 = vmatpush.msra.mxu0 0.0
        %2595 = vmatpush.msra.mxu0 0.0
        %2596 = vmatpush.msra.mxu0 0.0
        %2597 = vmatpush.msra.mxu0 0.0
        %2598 = vmatpush.msra.mxu0 0.0
        %2599 = vmatpush.msra.mxu0 0.0
        %2600 = vmatpush.msra.mxu0 0.0
        %2601 = vmatpush.msra.mxu0 0.0
        %2602 = vmatpush.msra.mxu0 0.0
        %2603 = vmatpush.msra.mxu0 0.0
        %2604 = vmatpush.msra.mxu0 0.0
        %2605 = vmatpush.msra.mxu0 0.0
        %2606 = vmatpush.msra.mxu0 %v2446
        %2607 = vmatmul.f32.gmra.mxu0 %v2541
        %v2608 = vpop.f32.mrf.mxu0
        %v2609 = vadd.f32 %v2467, %v2608
        %2610 = vmatmul.f32.gmra.mxu0 %v2543
        %v2611 = vpop.f32.mrf.mxu0
        %v2612 = vadd.f32 %v2467, %v2611
        %2613 = vdwg.mxu0
        %2614 = vmatpush.msra.mxu0 0.0
        %2615 = vmatpush.msra.mxu0 0.0
        %2616 = vmatpush.msra.mxu0 0.0
        %2617 = vmatpush.msra.mxu0 0.0
        %2618 = vmatpush.msra.mxu0 0.0
        %2619 = vmatpush.msra.mxu0 0.0
        %2620 = vmatpush.msra.mxu0 0.0
        %2621 = vmatpush.msra.mxu0 0.0
        %2622 = vmatpush.msra.mxu0 0.0
        %2623 = vmatpush.msra.mxu0 0.0
        %2624 = vmatpush.msra.mxu0 0.0
        %2625 = vmatpush.msra.mxu0 0.0
        %2626 = vmatpush.msra.mxu0 0.0
        %2627 = vmatpush.msra.mxu0 0.0
        %2628 = vmatpush.msra.mxu0 0.0
        %2629 = vmatpush.msra.mxu0 %v2447
        %2630 = vmatmul.f32.gmra.mxu0 %v2541
        %v2631 = vpop.f32.mrf.mxu0
        %v2632 = vadd.f32 %v2468, %v2631
        %2633 = vmatmul.f32.gmra.mxu0 %v2543
        %v2634 = vpop.f32.mrf.mxu0
        %v2635 = vadd.f32 %v2468, %v2634
        %2636 = vdwg.mxu0
        %2637 = vmatpush.msra.mxu0 0.0
        %2638 = vmatpush.msra.mxu0 0.0
        %2639 = vmatpush.msra.mxu0 0.0
        %2640 = vmatpush.msra.mxu0 0.0
        %2641 = vmatpush.msra.mxu0 0.0
        %2642 = vmatpush.msra.mxu0 0.0
        %2643 = vmatpush.msra.mxu0 0.0
        %2644 = vmatpush.msra.mxu0 0.0
        %2645 = vmatpush.msra.mxu0 0.0
        %2646 = vmatpush.msra.mxu0 0.0
        %2647 = vmatpush.msra.mxu0 0.0
        %2648 = vmatpush.msra.mxu0 0.0
        %2649 = vmatpush.msra.mxu0 0.0
        %2650 = vmatpush.msra.mxu0 0.0
        %2651 = vmatpush.msra.mxu0 0.0
        %2652 = vmatpush.msra.mxu0 %v2448
        %2653 = vmatmul.f32.gmra.mxu0 %v2541
        %v2654 = vpop.f32.mrf.mxu0
        %v2655 = vadd.f32 %v2469, %v2654
        %2656 = vmatmul.f32.gmra.mxu0 %v2543
        %v2657 = vpop.f32.mrf.mxu0
        %v2658 = vadd.f32 %v2469, %v2657
        %2659 = vdwg.mxu0
        %2660 = vmatpush.msra.mxu0 0.0
        %2661 = vmatpush.msra.mxu0 0.0
        %2662 = vmatpush.msra.mxu0 0.0
        %2663 = vmatpush.msra.mxu0 0.0
        %2664 = vmatpush.msra.mxu0 0.0
        %2665 = vmatpush.msra.mxu0 0.0
        %2666 = vmatpush.msra.mxu0 0.0
        %2667 = vmatpush.msra.mxu0 0.0
        %2668 = vmatpush.msra.mxu0 0.0
        %2669 = vmatpush.msra.mxu0 0.0
        %2670 = vmatpush.msra.mxu0 0.0
        %2671 = vmatpush.msra.mxu0 0.0
        %2672 = vmatpush.msra.mxu0 0.0
        %2673 = vmatpush.msra.mxu0 0.0
        %2674 = vmatpush.msra.mxu0 0.0
        %2675 = vmatpush.msra.mxu0 %v2449
        %2676 = vmatmul.f32.gmra.mxu0 %v2541
        %v2677 = vpop.f32.mrf.mxu0
        %v2678 = vadd.f32 %v2470, %v2677
        %2679 = vmatmul.f32.gmra.mxu0 %v2543
        %v2680 = vpop.f32.mrf.mxu0
        %v2681 = vadd.f32 %v2470, %v2680
        %2682 = vdwg.mxu0
        %2683 = vmatpush.msra.mxu0 0.0
        %2684 = vmatpush.msra.mxu0 0.0
        %2685 = vmatpush.msra.mxu0 0.0
        %2686 = vmatpush.msra.mxu0 0.0
        %2687 = vmatpush.msra.mxu0 0.0
        %2688 = vmatpush.msra.mxu0 0.0
        %2689 = vmatpush.msra.mxu0 0.0
        %2690 = vmatpush.msra.mxu0 0.0
        %2691 = vmatpush.msra.mxu0 0.0
        %2692 = vmatpush.msra.mxu0 0.0
        %2693 = vmatpush.msra.mxu0 0.0
        %2694 = vmatpush.msra.mxu0 0.0
        %2695 = vmatpush.msra.mxu0 0.0
        %2696 = vmatpush.msra.mxu0 0.0
        %2697 = vmatpush.msra.mxu0 0.0
        %2698 = vmatpush.msra.mxu0 %v2450
        %2699 = vmatmul.f32.gmra.mxu0 %v2541
        %v2700 = vpop.f32.mrf.mxu0
        %v2701 = vadd.f32 %v2471, %v2700
        %2702 = vmatmul.f32.gmra.mxu0 %v2543
        %v2703 = vpop.f32.mrf.mxu0
        %v2704 = vadd.f32 %v2471, %v2703
        %2705 = vdwg.mxu0
        %2706 = vmatpush.msra.mxu0 0.0
        %2707 = vmatpush.msra.mxu0 0.0
        %2708 = vmatpush.msra.mxu0 0.0
        %2709 = vmatpush.msra.mxu0 0.0
        %2710 = vmatpush.msra.mxu0 0.0
        %2711 = vmatpush.msra.mxu0 0.0
        %2712 = vmatpush.msra.mxu0 0.0
        %2713 = vmatpush.msra.mxu0 0.0
        %2714 = vmatpush.msra.mxu0 0.0
        %2715 = vmatpush.msra.mxu0 0.0
        %2716 = vmatpush.msra.mxu0 0.0
        %2717 = vmatpush.msra.mxu0 0.0
        %2718 = vmatpush.msra.mxu0 0.0
        %2719 = vmatpush.msra.mxu0 0.0
        %2720 = vmatpush.msra.mxu0 0.0
        %2721 = vmatpush.msra.mxu0 %v2451
        %2722 = vmatmul.f32.gmra.mxu0 %v2541
        %v2723 = vpop.f32.mrf.mxu0
        %v2724 = vadd.f32 %v2472, %v2723
        %2725 = vmatmul.f32.gmra.mxu0 %v2543
        %v2726 = vpop.f32.mrf.mxu0
        %v2727 = vadd.f32 %v2472, %v2726
        %2728 = vdwg.mxu0
        %2729 = vmatpush.msra.mxu0 0.0
        %2730 = vmatpush.msra.mxu0 0.0
        %2731 = vmatpush.msra.mxu0 0.0
        %2732 = vmatpush.msra.mxu0 0.0
        %2733 = vmatpush.msra.mxu0 0.0
        %2734 = vmatpush.msra.mxu0 0.0
        %2735 = vmatpush.msra.mxu0 0.0
        %2736 = vmatpush.msra.mxu0 0.0
        %2737 = vmatpush.msra.mxu0 0.0
        %2738 = vmatpush.msra.mxu0 0.0
        %2739 = vmatpush.msra.mxu0 0.0
        %2740 = vmatpush.msra.mxu0 0.0
        %2741 = vmatpush.msra.mxu0 0.0
        %2742 = vmatpush.msra.mxu0 0.0
        %2743 = vmatpush.msra.mxu0 0.0
        %2744 = vmatpush.msra.mxu0 %v2452
        %2745 = vmatmul.f32.gmra.mxu0 %v2541
        %v2746 = vpop.f32.mrf.mxu0
        %v2747 = vadd.f32 %v2473, %v2746
        %2748 = vmatmul.f32.gmra.mxu0 %v2543
        %v2749 = vpop.f32.mrf.mxu0
        %v2750 = vadd.f32 %v2473, %v2749
        %2751 = vdwg.mxu0
        %2752 = vmatpush.msra.mxu0 0.0
        %2753 = vmatpush.msra.mxu0 0.0
        %2754 = vmatpush.msra.mxu0 0.0
        %2755 = vmatpush.msra.mxu0 0.0
        %2756 = vmatpush.msra.mxu0 0.0
        %2757 = vmatpush.msra.mxu0 0.0
        %2758 = vmatpush.msra.mxu0 0.0
        %2759 = vmatpush.msra.mxu0 0.0
        %2760 = vmatpush.msra.mxu0 0.0
        %2761 = vmatpush.msra.mxu0 0.0
        %2762 = vmatpush.msra.mxu0 0.0
        %2763 = vmatpush.msra.mxu0 0.0
        %2764 = vmatpush.msra.mxu0 0.0
        %2765 = vmatpush.msra.mxu0 0.0
        %2766 = vmatpush.msra.mxu0 0.0
        %2767 = vmatpush.msra.mxu0 %v2453
        %2768 = vmatmul.f32.gmra.mxu0 %v2541
        %v2769 = vpop.f32.mrf.mxu0
        %v2770 = vadd.f32 %v2474, %v2769
        %2771 = vmatmul.f32.gmra.mxu0 %v2543
        %v2772 = vpop.f32.mrf.mxu0
        %v2773 = vadd.f32 %v2474, %v2772
        %2774 = vdwg.mxu0
        %2775 = vmatpush.msra.mxu0 0.0
        %2776 = vmatpush.msra.mxu0 0.0
        %2777 = vmatpush.msra.mxu0 0.0
        %2778 = vmatpush.msra.mxu0 0.0
        %2779 = vmatpush.msra.mxu0 0.0
        %2780 = vmatpush.msra.mxu0 0.0
        %2781 = vmatpush.msra.mxu0 0.0
        %2782 = vmatpush.msra.mxu0 0.0
        %2783 = vmatpush.msra.mxu0 0.0
        %2784 = vmatpush.msra.mxu0 0.0
        %2785 = vmatpush.msra.mxu0 0.0
        %2786 = vmatpush.msra.mxu0 0.0
        %2787 = vmatpush.msra.mxu0 0.0
        %2788 = vmatpush.msra.mxu0 0.0
        %2789 = vmatpush.msra.mxu0 0.0
        %2790 = vmatpush.msra.mxu0 %v2454
        %2791 = vmatmul.f32.gmra.mxu0 %v2541
        %v2792 = vpop.f32.mrf.mxu0
        %v2793 = vadd.f32 %v2475, %v2792
        %2794 = vmatmul.f32.gmra.mxu0 %v2543
        %v2795 = vpop.f32.mrf.mxu0
        %v2796 = vadd.f32 %v2475, %v2795
        %2797 = vdwg.mxu0
        %2798 = vmatpush.msra.mxu0 0.0
        %2799 = vmatpush.msra.mxu0 0.0
        %2800 = vmatpush.msra.mxu0 0.0
        %2801 = vmatpush.msra.mxu0 0.0
        %2802 = vmatpush.msra.mxu0 0.0
        %2803 = vmatpush.msra.mxu0 0.0
        %2804 = vmatpush.msra.mxu0 0.0
        %2805 = vmatpush.msra.mxu0 0.0
        %2806 = vmatpush.msra.mxu0 0.0
        %2807 = vmatpush.msra.mxu0 0.0
        %2808 = vmatpush.msra.mxu0 0.0
        %2809 = vmatpush.msra.mxu0 0.0
        %2810 = vmatpush.msra.mxu0 0.0
        %2811 = vmatpush.msra.mxu0 0.0
        %2812 = vmatpush.msra.mxu0 0.0
        %2813 = vmatpush.msra.mxu0 %v2455
        %2814 = vmatmul.f32.gmra.mxu0 %v2541
        %v2815 = vpop.f32.mrf.mxu0
        %v2816 = vadd.f32 %v2476, %v2815
        %2817 = vmatmul.f32.gmra.mxu0 %v2543
        %v2818 = vpop.f32.mrf.mxu0
        %v2819 = vadd.f32 %v2476, %v2818
        %2820 = vdwg.mxu0
        %2821 = vmatpush.msra.mxu0 0.0
        %2822 = vmatpush.msra.mxu0 0.0
        %2823 = vmatpush.msra.mxu0 0.0
        %2824 = vmatpush.msra.mxu0 0.0
        %2825 = vmatpush.msra.mxu0 0.0
        %2826 = vmatpush.msra.mxu0 0.0
        %2827 = vmatpush.msra.mxu0 0.0
        %2828 = vmatpush.msra.mxu0 0.0
        %2829 = vmatpush.msra.mxu0 0.0
        %2830 = vmatpush.msra.mxu0 0.0
        %2831 = vmatpush.msra.mxu0 0.0
        %2832 = vmatpush.msra.mxu0 0.0
        %2833 = vmatpush.msra.mxu0 0.0
        %2834 = vmatpush.msra.mxu0 0.0
        %2835 = vmatpush.msra.mxu0 0.0
        %2836 = vmatpush.msra.mxu0 %v2456
        %2837 = vmatmul.f32.gmra.mxu0 %v2541
        %v2838 = vpop.f32.mrf.mxu0
        %v2839 = vadd.f32 %v2477, %v2838
        %2840 = vmatmul.f32.gmra.mxu0 %v2543
        %v2841 = vpop.f32.mrf.mxu0
        %v2842 = vadd.f32 %v2477, %v2841
        %2843 = vdwg.mxu0
        %2844 = vmatpush.msra.mxu0 0.0
        %2845 = vmatpush.msra.mxu0 0.0
        %2846 = vmatpush.msra.mxu0 0.0
        %2847 = vmatpush.msra.mxu0 0.0
        %2848 = vmatpush.msra.mxu0 0.0
        %2849 = vmatpush.msra.mxu0 0.0
        %2850 = vmatpush.msra.mxu0 0.0
        %2851 = vmatpush.msra.mxu0 0.0
        %2852 = vmatpush.msra.mxu0 0.0
        %2853 = vmatpush.msra.mxu0 0.0
        %2854 = vmatpush.msra.mxu0 0.0
        %2855 = vmatpush.msra.mxu0 0.0
        %2856 = vmatpush.msra.mxu0 0.0
        %2857 = vmatpush.msra.mxu0 0.0
        %2858 = vmatpush.msra.mxu0 0.0
        %2859 = vmatpush.msra.mxu0 %v2457
        %2860 = vmatmul.f32.gmra.mxu0 %v2541
        %v2861 = vpop.f32.mrf.mxu0
        %v2862 = vadd.f32 %v2478, %v2861
        %2863 = vmatmul.f32.gmra.mxu0 %v2543
        %v2864 = vpop.f32.mrf.mxu0
        %v2865 = vadd.f32 %v2478, %v2864
        %2866 = vdwg.mxu0
        %2867 = vmatpush.msra.mxu0 0.0
        %2868 = vmatpush.msra.mxu0 0.0
        %2869 = vmatpush.msra.mxu0 0.0
        %2870 = vmatpush.msra.mxu0 0.0
        %2871 = vmatpush.msra.mxu0 0.0
        %2872 = vmatpush.msra.mxu0 0.0
        %2873 = vmatpush.msra.mxu0 0.0
        %2874 = vmatpush.msra.mxu0 0.0
        %2875 = vmatpush.msra.mxu0 0.0
        %2876 = vmatpush.msra.mxu0 0.0
        %2877 = vmatpush.msra.mxu0 0.0
        %2878 = vmatpush.msra.mxu0 0.0
        %2879 = vmatpush.msra.mxu0 0.0
        %2880 = vmatpush.msra.mxu0 0.0
        %2881 = vmatpush.msra.mxu0 0.0
        %2882 = vmatpush.msra.mxu0 %v2458
        %2883 = vmatmul.f32.gmra.mxu0 %v2541
        %v2884 = vpop.f32.mrf.mxu0
        %v2885 = vadd.f32 %v2479, %v2884
        %2886 = vmatmul.f32.gmra.mxu0 %v2543
        %v2887 = vpop.f32.mrf.mxu0
        %v2888 = vadd.f32 %v2479, %v2887
        %2889 = vdwg.mxu0
        %2890 = vmatpush.msra.mxu0 0.0
        %2891 = vmatpush.msra.mxu0 0.0
        %2892 = vmatpush.msra.mxu0 0.0
        %2893 = vmatpush.msra.mxu0 0.0
        %2894 = vmatpush.msra.mxu0 0.0
        %2895 = vmatpush.msra.mxu0 0.0
        %2896 = vmatpush.msra.mxu0 0.0
        %2897 = vmatpush.msra.mxu0 0.0
        %2898 = vmatpush.msra.mxu0 0.0
        %2899 = vmatpush.msra.mxu0 0.0
        %2900 = vmatpush.msra.mxu0 0.0
        %2901 = vmatpush.msra.mxu0 0.0
        %2902 = vmatpush.msra.mxu0 0.0
        %2903 = vmatpush.msra.mxu0 0.0
        %2904 = vmatpush.msra.mxu0 0.0
        %2905 = vmatpush.msra.mxu0 %v2459
        %2906 = vmatmul.f32.gmra.mxu0 %v2541
        %v2907 = vpop.f32.mrf.mxu0
        %v2908 = vadd.f32 %v2480, %v2907
        %2909 = vmatmul.f32.gmra.mxu0 %v2543
        %v2910 = vpop.f32.mrf.mxu0
        %v2911 = vadd.f32 %v2480, %v2910
        %2912 = vdwg.mxu0
        %v2913 = vadd.f32 %v2563, %v739
        %v2914 = vadd.f32 %v2586, %v740
        %v2915 = vadd.f32 %v2609, %v741
        %v2916 = vadd.f32 %v2632, %v742
        %v2917 = vadd.f32 %v2655, %v743
        %v2918 = vadd.f32 %v2678, %v744
        %v2919 = vadd.f32 %v2701, %v745
        %v2920 = vadd.f32 %v2724, %v746
        %v2921 = vadd.f32 %v2747, %v747
        %v2922 = vadd.f32 %v2770, %v748
        %v2923 = vadd.f32 %v2793, %v749
        %v2924 = vadd.f32 %v2816, %v750
        %v2925 = vadd.f32 %v2839, %v751
        %v2926 = vadd.f32 %v2862, %v752
        %v2927 = vadd.f32 %v2885, %v753
        %v2928 = vadd.f32 %v2908, %v754
        %v2929 = vadd.f32 %v2566, %v755
        %v2930 = vadd.f32 %v2589, %v756
        %v2931 = vadd.f32 %v2612, %v757
        %v2932 = vadd.f32 %v2635, %v758
        %v2933 = vadd.f32 %v2658, %v759
        %v2934 = vadd.f32 %v2681, %v760
        %v2935 = vadd.f32 %v2704, %v761
        %v2936 = vadd.f32 %v2727, %v762
        %v2937 = vadd.f32 %v2750, %v763
        %v2938 = vadd.f32 %v2773, %v764
        %v2939 = vadd.f32 %v2796, %v765
        %v2940 = vadd.f32 %v2819, %v766
        %v2941 = vadd.f32 %v2842, %v767
        %v2942 = vadd.f32 %v2865, %v768
        %v2943 = vadd.f32 %v2888, %v769
        %v2944 = vadd.f32 %v2911, %v770
        %2945 = vst [vmem:[%s711] sm:$0xff] %v2913
        %2946 = vst [vmem:[%s711 + $0x8] sm:$0xff] %v2914
        %2947 = vst [vmem:[%s711 + $0x10] sm:$0xff] %v2915
        %2948 = vst [vmem:[%s711 + $0x18] sm:$0xff] %v2916
        %2949 = vst [vmem:[%s711 + $0x20] sm:$0xff] %v2917
        %2950 = vst [vmem:[%s711 + $0x28] sm:$0xff] %v2918
        %2951 = vst [vmem:[%s711 + $0x30] sm:$0xff] %v2919
        %2952 = vst [vmem:[%s711 + $0x38] sm:$0xff] %v2920
        %2953 = vst [vmem:[%s711 + $0x40] sm:$0xff] %v2921
        %2954 = vst [vmem:[%s711 + $0x48] sm:$0xff] %v2922
        %2955 = vst [vmem:[%s711 + $0x50] sm:$0xff] %v2923
        %2956 = vst [vmem:[%s711 + $0x58] sm:$0xff] %v2924
        %2957 = vst [vmem:[%s711 + $0x60] sm:$0xff] %v2925
        %2958 = vst [vmem:[%s711 + $0x68] sm:$0xff] %v2926
        %2959 = vst [vmem:[%s711 + $0x70] sm:$0xff] %v2927
        %2960 = vst [vmem:[%s711 + $0x78] sm:$0xff] %v2928
        %2961 = vst [vmem:[%s711 + $0x80] sm:$0xff] %v2929
        %2962 = vst [vmem:[%s711 + $0x88] sm:$0xff] %v2930
        %2963 = vst [vmem:[%s711 + $0x90] sm:$0xff] %v2931
        %2964 = vst [vmem:[%s711 + $0x98] sm:$0xff] %v2932
        %2965 = vst [vmem:[%s711 + $0xa0] sm:$0xff] %v2933
        %2966 = vst [vmem:[%s711 + $0xa8] sm:$0xff] %v2934
        %2967 = vst [vmem:[%s711 + $0xb0] sm:$0xff] %v2935
        %2968 = vst [vmem:[%s711 + $0xb8] sm:$0xff] %v2936
        %2969 = vst [vmem:[%s711 + $0xc0] sm:$0xff] %v2937
        %2970 = vst [vmem:[%s711 + $0xc8] sm:$0xff] %v2938
        %2971 = vst [vmem:[%s711 + $0xd0] sm:$0xff] %v2939
        %2972 = vst [vmem:[%s711 + $0xd8] sm:$0xff] %v2940
        %2973 = vst [vmem:[%s711 + $0xe0] sm:$0xff] %v2941
        %2974 = vst [vmem:[%s711 + $0xe8] sm:$0xff] %v2942
        %2975 = vst [vmem:[%s711 + $0xf0] sm:$0xff] %v2943
        %2976 = vst [vmem:[%s711 + $0xf8] sm:$0xff] %v2944
        %v2977 = vld [vmem:[%s723 + $0x4] sm:$0x1]
        %v2978 = vld [vmem:[%s723 + $0xc] sm:$0x1]
        %v2979 = vld [vmem:[%s723 + $0x14] sm:$0x1]
        %v2980 = vld [vmem:[%s723 + $0x1c] sm:$0x1]
        %v2981 = vld [vmem:[%s723 + $0x24] sm:$0x1]
        %v2982 = vld [vmem:[%s723 + $0x2c] sm:$0x1]
        %v2983 = vld [vmem:[%s723 + $0x34] sm:$0x1]
        %v2984 = vld [vmem:[%s723 + $0x3c] sm:$0x1]
        %v2985 = vld [vmem:[%s723 + $0x44] sm:$0x1]
        %v2986 = vld [vmem:[%s723 + $0x4c] sm:$0x1]
        %v2987 = vld [vmem:[%s723 + $0x54] sm:$0x1]
        %v2988 = vld [vmem:[%s723 + $0x5c] sm:$0x1]
        %v2989 = vld [vmem:[%s723 + $0x64] sm:$0x1]
        %v2990 = vld [vmem:[%s723 + $0x6c] sm:$0x1]
        %v2991 = vld [vmem:[%s723 + $0x74] sm:$0x1]
        %v2992 = vld [vmem:[%s723 + $0x7c] sm:$0x1]
        %s2993 = scalar_lea.vmem %s648, 512 [#allocation3]
        %v2994 = vld [vmem:[%s2993] sm:$0xff]
        %v2995 = vld [vmem:[%s2993 + $0x8] sm:$0xff]
        %v2996 = vld [vmem:[%s2993 + $0x10] sm:$0xff]
        %v2997 = vld [vmem:[%s2993 + $0x18] sm:$0xff]
        %v2998 = vld [vmem:[%s2993 + $0x20] sm:$0xff]
        %v2999 = vld [vmem:[%s2993 + $0x28] sm:$0xff]
        %v3000 = vld [vmem:[%s2993 + $0x30] sm:$0xff]
        %v3001 = vld [vmem:[%s2993 + $0x38] sm:$0xff]
        %v3002 = vld [vmem:[%s2993 + $0x40] sm:$0xff]
        %v3003 = vld [vmem:[%s2993 + $0x48] sm:$0xff]
        %v3004 = vld [vmem:[%s2993 + $0x50] sm:$0xff]
        %v3005 = vld [vmem:[%s2993 + $0x58] sm:$0xff]
        %v3006 = vld [vmem:[%s2993 + $0x60] sm:$0xff]
        %v3007 = vld [vmem:[%s2993 + $0x68] sm:$0xff]
        %v3008 = vld [vmem:[%s2993 + $0x70] sm:$0xff]
        %v3009 = vld [vmem:[%s2993 + $0x78] sm:$0xff]
        %s3010 = scalar_lea.vmem %s655, 64 [#allocation4]
        %v3011 = vld [vmem:[%s3010] sm:$0xff]
        %v3012 = vld [vmem:[%s3010 + $0x8] sm:$0xff]
        %v3015 = vperm.slane %v3011, 0
        %v3016 = vperm.slane %v3011, 1
        %v3017 = vperm.slane %v3011, 2
        %v3018 = vperm.slane %v3011, 3
        %v3019 = vperm.slane %v3011, 4
        %v3020 = vperm.slane %v3011, 5
        %v3021 = vperm.slane %v3011, 6
        %v3022 = vperm.slane %v3011, 7
        %v3023 = vperm.slane %v3012, 0
        %v3024 = vperm.slane %v3012, 1
        %v3025 = vperm.slane %v3012, 2
        %v3026 = vperm.slane %v3012, 3
        %v3027 = vperm.slane %v3012, 4
        %v3028 = vperm.slane %v3012, 5
        %v3029 = vperm.slane %v3012, 6
        %v3030 = vperm.slane %v3012, 7
        %v3063 = vrot.slane %v2978, 7
        %v3064 = vsel %vm856, %v3063, %v2977
        %v3065 = vrot.slane %v2979, 6
        %v3066 = vsel %vm859, %v3065, %v3064
        %v3067 = vrot.slane %v2980, 5
        %v3068 = vsel %vm862, %v3067, %v3066
        %v3069 = vrot.slane %v2981, 4
        %v3070 = vsel %vm865, %v3069, %v3068
        %v3071 = vrot.slane %v2982, 3
        %v3072 = vsel %vm868, %v3071, %v3070
        %v3073 = vrot.slane %v2983, 2
        %v3074 = vsel %vm871, %v3073, %v3072
        %v3075 = vrot.slane %v2984, 1
        %v3076 = vsel %vm874, %v3075, %v3074
        %v3077 = vrot.slane %v2986, 7
        %v3078 = vsel %vm856, %v3077, %v2985
        %v3079 = vrot.slane %v2987, 6
        %v3080 = vsel %vm859, %v3079, %v3078
        %v3081 = vrot.slane %v2988, 5
        %v3082 = vsel %vm862, %v3081, %v3080
        %v3083 = vrot.slane %v2989, 4
        %v3084 = vsel %vm865, %v3083, %v3082
        %v3085 = vrot.slane %v2990, 3
        %v3086 = vsel %vm868, %v3085, %v3084
        %v3087 = vrot.slane %v2991, 2
        %v3088 = vsel %vm871, %v3087, %v3086
        %v3089 = vrot.slane %v2992, 1
        %v3090 = vsel %vm874, %v3089, %v3088
        %v3091 = vsel %vm890, %v3076, 0
        %v3093 = vsel %vm890, %v3090, 0
        %3095 = vmatpush.msra.mxu0 0.0
        %3096 = vmatpush.msra.mxu0 0.0
        %3097 = vmatpush.msra.mxu0 0.0
        %3098 = vmatpush.msra.mxu0 0.0
        %3099 = vmatpush.msra.mxu0 0.0
        %3100 = vmatpush.msra.mxu0 0.0
        %3101 = vmatpush.msra.mxu0 0.0
        %3102 = vmatpush.msra.mxu0 0.0
        %3103 = vmatpush.msra.mxu0 0.0
        %3104 = vmatpush.msra.mxu0 0.0
        %3105 = vmatpush.msra.mxu0 0.0
        %3106 = vmatpush.msra.mxu0 0.0
        %3107 = vmatpush.msra.mxu0 0.0
        %3108 = vmatpush.msra.mxu0 0.0
        %3109 = vmatpush.msra.mxu0 0.0
        %3110 = vmatpush.msra.mxu0 %v2994
        %3111 = vmatmul.f32.gmra.mxu0 %v3091
        %v3112 = vpop.f32.mrf.mxu0
        %v3113 = vadd.f32 %v3015, %v3112
        %3114 = vmatmul.f32.gmra.mxu0 %v3093
        %v3115 = vpop.f32.mrf.mxu0
        %v3116 = vadd.f32 %v3015, %v3115
        %3117 = vdwg.mxu0
        %3118 = vmatpush.msra.mxu0 0.0
        %3119 = vmatpush.msra.mxu0 0.0
        %3120 = vmatpush.msra.mxu0 0.0
        %3121 = vmatpush.msra.mxu0 0.0
        %3122 = vmatpush.msra.mxu0 0.0
        %3123 = vmatpush.msra.mxu0 0.0
        %3124 = vmatpush.msra.mxu0 0.0
        %3125 = vmatpush.msra.mxu0 0.0
        %3126 = vmatpush.msra.mxu0 0.0
        %3127 = vmatpush.msra.mxu0 0.0
        %3128 = vmatpush.msra.mxu0 0.0
        %3129 = vmatpush.msra.mxu0 0.0
        %3130 = vmatpush.msra.mxu0 0.0
        %3131 = vmatpush.msra.mxu0 0.0
        %3132 = vmatpush.msra.mxu0 0.0
        %3133 = vmatpush.msra.mxu0 %v2995
        %3134 = vmatmul.f32.gmra.mxu0 %v3091
        %v3135 = vpop.f32.mrf.mxu0
        %v3136 = vadd.f32 %v3016, %v3135
        %3137 = vmatmul.f32.gmra.mxu0 %v3093
        %v3138 = vpop.f32.mrf.mxu0
        %v3139 = vadd.f32 %v3016, %v3138
        %3140 = vdwg.mxu0
        %3141 = vmatpush.msra.mxu0 0.0
        %3142 = vmatpush.msra.mxu0 0.0
        %3143 = vmatpush.msra.mxu0 0.0
        %3144 = vmatpush.msra.mxu0 0.0
        %3145 = vmatpush.msra.mxu0 0.0
        %3146 = vmatpush.msra.mxu0 0.0
        %3147 = vmatpush.msra.mxu0 0.0
        %3148 = vmatpush.msra.mxu0 0.0
        %3149 = vmatpush.msra.mxu0 0.0
        %3150 = vmatpush.msra.mxu0 0.0
        %3151 = vmatpush.msra.mxu0 0.0
        %3152 = vmatpush.msra.mxu0 0.0
        %3153 = vmatpush.msra.mxu0 0.0
        %3154 = vmatpush.msra.mxu0 0.0
        %3155 = vmatpush.msra.mxu0 0.0
        %3156 = vmatpush.msra.mxu0 %v2996
        %3157 = vmatmul.f32.gmra.mxu0 %v3091
        %v3158 = vpop.f32.mrf.mxu0
        %v3159 = vadd.f32 %v3017, %v3158
        %3160 = vmatmul.f32.gmra.mxu0 %v3093
        %v3161 = vpop.f32.mrf.mxu0
        %v3162 = vadd.f32 %v3017, %v3161
        %3163 = vdwg.mxu0
        %3164 = vmatpush.msra.mxu0 0.0
        %3165 = vmatpush.msra.mxu0 0.0
        %3166 = vmatpush.msra.mxu0 0.0
        %3167 = vmatpush.msra.mxu0 0.0
        %3168 = vmatpush.msra.mxu0 0.0
        %3169 = vmatpush.msra.mxu0 0.0
        %3170 = vmatpush.msra.mxu0 0.0
        %3171 = vmatpush.msra.mxu0 0.0
        %3172 = vmatpush.msra.mxu0 0.0
        %3173 = vmatpush.msra.mxu0 0.0
        %3174 = vmatpush.msra.mxu0 0.0
        %3175 = vmatpush.msra.mxu0 0.0
        %3176 = vmatpush.msra.mxu0 0.0
        %3177 = vmatpush.msra.mxu0 0.0
        %3178 = vmatpush.msra.mxu0 0.0
        %3179 = vmatpush.msra.mxu0 %v2997
        %3180 = vmatmul.f32.gmra.mxu0 %v3091
        %v3181 = vpop.f32.mrf.mxu0
        %v3182 = vadd.f32 %v3018, %v3181
        %3183 = vmatmul.f32.gmra.mxu0 %v3093
        %v3184 = vpop.f32.mrf.mxu0
        %v3185 = vadd.f32 %v3018, %v3184
        %3186 = vdwg.mxu0
        %3187 = vmatpush.msra.mxu0 0.0
        %3188 = vmatpush.msra.mxu0 0.0
        %3189 = vmatpush.msra.mxu0 0.0
        %3190 = vmatpush.msra.mxu0 0.0
        %3191 = vmatpush.msra.mxu0 0.0
        %3192 = vmatpush.msra.mxu0 0.0
        %3193 = vmatpush.msra.mxu0 0.0
        %3194 = vmatpush.msra.mxu0 0.0
        %3195 = vmatpush.msra.mxu0 0.0
        %3196 = vmatpush.msra.mxu0 0.0
        %3197 = vmatpush.msra.mxu0 0.0
        %3198 = vmatpush.msra.mxu0 0.0
        %3199 = vmatpush.msra.mxu0 0.0
        %3200 = vmatpush.msra.mxu0 0.0
        %3201 = vmatpush.msra.mxu0 0.0
        %3202 = vmatpush.msra.mxu0 %v2998
        %3203 = vmatmul.f32.gmra.mxu0 %v3091
        %v3204 = vpop.f32.mrf.mxu0
        %v3205 = vadd.f32 %v3019, %v3204
        %3206 = vmatmul.f32.gmra.mxu0 %v3093
        %v3207 = vpop.f32.mrf.mxu0
        %v3208 = vadd.f32 %v3019, %v3207
        %3209 = vdwg.mxu0
        %3210 = vmatpush.msra.mxu0 0.0
        %3211 = vmatpush.msra.mxu0 0.0
        %3212 = vmatpush.msra.mxu0 0.0
        %3213 = vmatpush.msra.mxu0 0.0
        %3214 = vmatpush.msra.mxu0 0.0
        %3215 = vmatpush.msra.mxu0 0.0
        %3216 = vmatpush.msra.mxu0 0.0
        %3217 = vmatpush.msra.mxu0 0.0
        %3218 = vmatpush.msra.mxu0 0.0
        %3219 = vmatpush.msra.mxu0 0.0
        %3220 = vmatpush.msra.mxu0 0.0
        %3221 = vmatpush.msra.mxu0 0.0
        %3222 = vmatpush.msra.mxu0 0.0
        %3223 = vmatpush.msra.mxu0 0.0
        %3224 = vmatpush.msra.mxu0 0.0
        %3225 = vmatpush.msra.mxu0 %v2999
        %3226 = vmatmul.f32.gmra.mxu0 %v3091
        %v3227 = vpop.f32.mrf.mxu0
        %v3228 = vadd.f32 %v3020, %v3227
        %3229 = vmatmul.f32.gmra.mxu0 %v3093
        %v3230 = vpop.f32.mrf.mxu0
        %v3231 = vadd.f32 %v3020, %v3230
        %3232 = vdwg.mxu0
        %3233 = vmatpush.msra.mxu0 0.0
        %3234 = vmatpush.msra.mxu0 0.0
        %3235 = vmatpush.msra.mxu0 0.0
        %3236 = vmatpush.msra.mxu0 0.0
        %3237 = vmatpush.msra.mxu0 0.0
        %3238 = vmatpush.msra.mxu0 0.0
        %3239 = vmatpush.msra.mxu0 0.0
        %3240 = vmatpush.msra.mxu0 0.0
        %3241 = vmatpush.msra.mxu0 0.0
        %3242 = vmatpush.msra.mxu0 0.0
        %3243 = vmatpush.msra.mxu0 0.0
        %3244 = vmatpush.msra.mxu0 0.0
        %3245 = vmatpush.msra.mxu0 0.0
        %3246 = vmatpush.msra.mxu0 0.0
        %3247 = vmatpush.msra.mxu0 0.0
        %3248 = vmatpush.msra.mxu0 %v3000
        %3249 = vmatmul.f32.gmra.mxu0 %v3091
        %v3250 = vpop.f32.mrf.mxu0
        %v3251 = vadd.f32 %v3021, %v3250
        %3252 = vmatmul.f32.gmra.mxu0 %v3093
        %v3253 = vpop.f32.mrf.mxu0
        %v3254 = vadd.f32 %v3021, %v3253
        %3255 = vdwg.mxu0
        %3256 = vmatpush.msra.mxu0 0.0
        %3257 = vmatpush.msra.mxu0 0.0
        %3258 = vmatpush.msra.mxu0 0.0
        %3259 = vmatpush.msra.mxu0 0.0
        %3260 = vmatpush.msra.mxu0 0.0
        %3261 = vmatpush.msra.mxu0 0.0
        %3262 = vmatpush.msra.mxu0 0.0
        %3263 = vmatpush.msra.mxu0 0.0
        %3264 = vmatpush.msra.mxu0 0.0
        %3265 = vmatpush.msra.mxu0 0.0
        %3266 = vmatpush.msra.mxu0 0.0
        %3267 = vmatpush.msra.mxu0 0.0
        %3268 = vmatpush.msra.mxu0 0.0
        %3269 = vmatpush.msra.mxu0 0.0
        %3270 = vmatpush.msra.mxu0 0.0
        %3271 = vmatpush.msra.mxu0 %v3001
        %3272 = vmatmul.f32.gmra.mxu0 %v3091
        %v3273 = vpop.f32.mrf.mxu0
        %v3274 = vadd.f32 %v3022, %v3273
        %3275 = vmatmul.f32.gmra.mxu0 %v3093
        %v3276 = vpop.f32.mrf.mxu0
        %v3277 = vadd.f32 %v3022, %v3276
        %3278 = vdwg.mxu0
        %3279 = vmatpush.msra.mxu0 0.0
        %3280 = vmatpush.msra.mxu0 0.0
        %3281 = vmatpush.msra.mxu0 0.0
        %3282 = vmatpush.msra.mxu0 0.0
        %3283 = vmatpush.msra.mxu0 0.0
        %3284 = vmatpush.msra.mxu0 0.0
        %3285 = vmatpush.msra.mxu0 0.0
        %3286 = vmatpush.msra.mxu0 0.0
        %3287 = vmatpush.msra.mxu0 0.0
        %3288 = vmatpush.msra.mxu0 0.0
        %3289 = vmatpush.msra.mxu0 0.0
        %3290 = vmatpush.msra.mxu0 0.0
        %3291 = vmatpush.msra.mxu0 0.0
        %3292 = vmatpush.msra.mxu0 0.0
        %3293 = vmatpush.msra.mxu0 0.0
        %3294 = vmatpush.msra.mxu0 %v3002
        %3295 = vmatmul.f32.gmra.mxu0 %v3091
        %v3296 = vpop.f32.mrf.mxu0
        %v3297 = vadd.f32 %v3023, %v3296
        %3298 = vmatmul.f32.gmra.mxu0 %v3093
        %v3299 = vpop.f32.mrf.mxu0
        %v3300 = vadd.f32 %v3023, %v3299
        %3301 = vdwg.mxu0
        %3302 = vmatpush.msra.mxu0 0.0
        %3303 = vmatpush.msra.mxu0 0.0
        %3304 = vmatpush.msra.mxu0 0.0
        %3305 = vmatpush.msra.mxu0 0.0
        %3306 = vmatpush.msra.mxu0 0.0
        %3307 = vmatpush.msra.mxu0 0.0
        %3308 = vmatpush.msra.mxu0 0.0
        %3309 = vmatpush.msra.mxu0 0.0
        %3310 = vmatpush.msra.mxu0 0.0
        %3311 = vmatpush.msra.mxu0 0.0
        %3312 = vmatpush.msra.mxu0 0.0
        %3313 = vmatpush.msra.mxu0 0.0
        %3314 = vmatpush.msra.mxu0 0.0
        %3315 = vmatpush.msra.mxu0 0.0
        %3316 = vmatpush.msra.mxu0 0.0
        %3317 = vmatpush.msra.mxu0 %v3003
        %3318 = vmatmul.f32.gmra.mxu0 %v3091
        %v3319 = vpop.f32.mrf.mxu0
        %v3320 = vadd.f32 %v3024, %v3319
        %3321 = vmatmul.f32.gmra.mxu0 %v3093
        %v3322 = vpop.f32.mrf.mxu0
        %v3323 = vadd.f32 %v3024, %v3322
        %3324 = vdwg.mxu0
        %3325 = vmatpush.msra.mxu0 0.0
        %3326 = vmatpush.msra.mxu0 0.0
        %3327 = vmatpush.msra.mxu0 0.0
        %3328 = vmatpush.msra.mxu0 0.0
        %3329 = vmatpush.msra.mxu0 0.0
        %3330 = vmatpush.msra.mxu0 0.0
        %3331 = vmatpush.msra.mxu0 0.0
        %3332 = vmatpush.msra.mxu0 0.0
        %3333 = vmatpush.msra.mxu0 0.0
        %3334 = vmatpush.msra.mxu0 0.0
        %3335 = vmatpush.msra.mxu0 0.0
        %3336 = vmatpush.msra.mxu0 0.0
        %3337 = vmatpush.msra.mxu0 0.0
        %3338 = vmatpush.msra.mxu0 0.0
        %3339 = vmatpush.msra.mxu0 0.0
        %3340 = vmatpush.msra.mxu0 %v3004
        %3341 = vmatmul.f32.gmra.mxu0 %v3091
        %v3342 = vpop.f32.mrf.mxu0
        %v3343 = vadd.f32 %v3025, %v3342
        %3344 = vmatmul.f32.gmra.mxu0 %v3093
        %v3345 = vpop.f32.mrf.mxu0
        %v3346 = vadd.f32 %v3025, %v3345
        %3347 = vdwg.mxu0
        %3348 = vmatpush.msra.mxu0 0.0
        %3349 = vmatpush.msra.mxu0 0.0
        %3350 = vmatpush.msra.mxu0 0.0
        %3351 = vmatpush.msra.mxu0 0.0
        %3352 = vmatpush.msra.mxu0 0.0
        %3353 = vmatpush.msra.mxu0 0.0
        %3354 = vmatpush.msra.mxu0 0.0
        %3355 = vmatpush.msra.mxu0 0.0
        %3356 = vmatpush.msra.mxu0 0.0
        %3357 = vmatpush.msra.mxu0 0.0
        %3358 = vmatpush.msra.mxu0 0.0
        %3359 = vmatpush.msra.mxu0 0.0
        %3360 = vmatpush.msra.mxu0 0.0
        %3361 = vmatpush.msra.mxu0 0.0
        %3362 = vmatpush.msra.mxu0 0.0
        %3363 = vmatpush.msra.mxu0 %v3005
        %3364 = vmatmul.f32.gmra.mxu0 %v3091
        %v3365 = vpop.f32.mrf.mxu0
        %v3366 = vadd.f32 %v3026, %v3365
        %3367 = vmatmul.f32.gmra.mxu0 %v3093
        %v3368 = vpop.f32.mrf.mxu0
        %v3369 = vadd.f32 %v3026, %v3368
        %3370 = vdwg.mxu0
        %3371 = vmatpush.msra.mxu0 0.0
        %3372 = vmatpush.msra.mxu0 0.0
        %3373 = vmatpush.msra.mxu0 0.0
        %3374 = vmatpush.msra.mxu0 0.0
        %3375 = vmatpush.msra.mxu0 0.0
        %3376 = vmatpush.msra.mxu0 0.0
        %3377 = vmatpush.msra.mxu0 0.0
        %3378 = vmatpush.msra.mxu0 0.0
        %3379 = vmatpush.msra.mxu0 0.0
        %3380 = vmatpush.msra.mxu0 0.0
        %3381 = vmatpush.msra.mxu0 0.0
        %3382 = vmatpush.msra.mxu0 0.0
        %3383 = vmatpush.msra.mxu0 0.0
        %3384 = vmatpush.msra.mxu0 0.0
        %3385 = vmatpush.msra.mxu0 0.0
        %3386 = vmatpush.msra.mxu0 %v3006
        %3387 = vmatmul.f32.gmra.mxu0 %v3091
        %v3388 = vpop.f32.mrf.mxu0
        %v3389 = vadd.f32 %v3027, %v3388
        %3390 = vmatmul.f32.gmra.mxu0 %v3093
        %v3391 = vpop.f32.mrf.mxu0
        %v3392 = vadd.f32 %v3027, %v3391
        %3393 = vdwg.mxu0
        %3394 = vmatpush.msra.mxu0 0.0
        %3395 = vmatpush.msra.mxu0 0.0
        %3396 = vmatpush.msra.mxu0 0.0
        %3397 = vmatpush.msra.mxu0 0.0
        %3398 = vmatpush.msra.mxu0 0.0
        %3399 = vmatpush.msra.mxu0 0.0
        %3400 = vmatpush.msra.mxu0 0.0
        %3401 = vmatpush.msra.mxu0 0.0
        %3402 = vmatpush.msra.mxu0 0.0
        %3403 = vmatpush.msra.mxu0 0.0
        %3404 = vmatpush.msra.mxu0 0.0
        %3405 = vmatpush.msra.mxu0 0.0
        %3406 = vmatpush.msra.mxu0 0.0
        %3407 = vmatpush.msra.mxu0 0.0
        %3408 = vmatpush.msra.mxu0 0.0
        %3409 = vmatpush.msra.mxu0 %v3007
        %3410 = vmatmul.f32.gmra.mxu0 %v3091
        %v3411 = vpop.f32.mrf.mxu0
        %v3412 = vadd.f32 %v3028, %v3411
        %3413 = vmatmul.f32.gmra.mxu0 %v3093
        %v3414 = vpop.f32.mrf.mxu0
        %v3415 = vadd.f32 %v3028, %v3414
        %3416 = vdwg.mxu0
        %3417 = vmatpush.msra.mxu0 0.0
        %3418 = vmatpush.msra.mxu0 0.0
        %3419 = vmatpush.msra.mxu0 0.0
        %3420 = vmatpush.msra.mxu0 0.0
        %3421 = vmatpush.msra.mxu0 0.0
        %3422 = vmatpush.msra.mxu0 0.0
        %3423 = vmatpush.msra.mxu0 0.0
        %3424 = vmatpush.msra.mxu0 0.0
        %3425 = vmatpush.msra.mxu0 0.0
        %3426 = vmatpush.msra.mxu0 0.0
        %3427 = vmatpush.msra.mxu0 0.0
        %3428 = vmatpush.msra.mxu0 0.0
        %3429 = vmatpush.msra.mxu0 0.0
        %3430 = vmatpush.msra.mxu0 0.0
        %3431 = vmatpush.msra.mxu0 0.0
        %3432 = vmatpush.msra.mxu0 %v3008
        %3433 = vmatmul.f32.gmra.mxu0 %v3091
        %v3434 = vpop.f32.mrf.mxu0
        %v3435 = vadd.f32 %v3029, %v3434
        %3436 = vmatmul.f32.gmra.mxu0 %v3093
        %v3437 = vpop.f32.mrf.mxu0
        %v3438 = vadd.f32 %v3029, %v3437
        %3439 = vdwg.mxu0
        %3440 = vmatpush.msra.mxu0 0.0
        %3441 = vmatpush.msra.mxu0 0.0
        %3442 = vmatpush.msra.mxu0 0.0
        %3443 = vmatpush.msra.mxu0 0.0
        %3444 = vmatpush.msra.mxu0 0.0
        %3445 = vmatpush.msra.mxu0 0.0
        %3446 = vmatpush.msra.mxu0 0.0
        %3447 = vmatpush.msra.mxu0 0.0
        %3448 = vmatpush.msra.mxu0 0.0
        %3449 = vmatpush.msra.mxu0 0.0
        %3450 = vmatpush.msra.mxu0 0.0
        %3451 = vmatpush.msra.mxu0 0.0
        %3452 = vmatpush.msra.mxu0 0.0
        %3453 = vmatpush.msra.mxu0 0.0
        %3454 = vmatpush.msra.mxu0 0.0
        %3455 = vmatpush.msra.mxu0 %v3009
        %3456 = vmatmul.f32.gmra.mxu0 %v3091
        %v3457 = vpop.f32.mrf.mxu0
        %v3458 = vadd.f32 %v3030, %v3457
        %3459 = vmatmul.f32.gmra.mxu0 %v3093
        %v3460 = vpop.f32.mrf.mxu0
        %v3461 = vadd.f32 %v3030, %v3460
        %3462 = vdwg.mxu0
        %v3463 = vadd.f32 %v3113, %v739
        %v3464 = vadd.f32 %v3136, %v740
        %v3465 = vadd.f32 %v3159, %v741
        %v3466 = vadd.f32 %v3182, %v742
        %v3467 = vadd.f32 %v3205, %v743
        %v3468 = vadd.f32 %v3228, %v744
        %v3469 = vadd.f32 %v3251, %v745
        %v3470 = vadd.f32 %v3274, %v746
        %v3471 = vadd.f32 %v3297, %v747
        %v3472 = vadd.f32 %v3320, %v748
        %v3473 = vadd.f32 %v3343, %v749
        %v3474 = vadd.f32 %v3366, %v750
        %v3475 = vadd.f32 %v3389, %v751
        %v3476 = vadd.f32 %v3412, %v752
        %v3477 = vadd.f32 %v3435, %v753
        %v3478 = vadd.f32 %v3458, %v754
        %v3479 = vadd.f32 %v3116, %v755
        %v3480 = vadd.f32 %v3139, %v756
        %v3481 = vadd.f32 %v3162, %v757
        %v3482 = vadd.f32 %v3185, %v758
        %v3483 = vadd.f32 %v3208, %v759
        %v3484 = vadd.f32 %v3231, %v760
        %v3485 = vadd.f32 %v3254, %v761
        %v3486 = vadd.f32 %v3277, %v762
        %v3487 = vadd.f32 %v3300, %v763
        %v3488 = vadd.f32 %v3323, %v764
        %v3489 = vadd.f32 %v3346, %v765
        %v3490 = vadd.f32 %v3369, %v766
        %v3491 = vadd.f32 %v3392, %v767
        %v3492 = vadd.f32 %v3415, %v768
        %v3493 = vadd.f32 %v3438, %v769
        %v3494 = vadd.f32 %v3461, %v770
        %3495 = vst [vmem:[%s718] sm:$0xff] %v3463
        %3496 = vst [vmem:[%s718 + $0x8] sm:$0xff] %v3464
        %3497 = vst [vmem:[%s718 + $0x10] sm:$0xff] %v3465
        %3498 = vst [vmem:[%s718 + $0x18] sm:$0xff] %v3466
        %3499 = vst [vmem:[%s718 + $0x20] sm:$0xff] %v3467
        %3500 = vst [vmem:[%s718 + $0x28] sm:$0xff] %v3468
        %3501 = vst [vmem:[%s718 + $0x30] sm:$0xff] %v3469
        %3502 = vst [vmem:[%s718 + $0x38] sm:$0xff] %v3470
        %3503 = vst [vmem:[%s718 + $0x40] sm:$0xff] %v3471
        %3504 = vst [vmem:[%s718 + $0x48] sm:$0xff] %v3472
        %3505 = vst [vmem:[%s718 + $0x50] sm:$0xff] %v3473
        %3506 = vst [vmem:[%s718 + $0x58] sm:$0xff] %v3474
        %3507 = vst [vmem:[%s718 + $0x60] sm:$0xff] %v3475
        %3508 = vst [vmem:[%s718 + $0x68] sm:$0xff] %v3476
        %3509 = vst [vmem:[%s718 + $0x70] sm:$0xff] %v3477
        %3510 = vst [vmem:[%s718 + $0x78] sm:$0xff] %v3478
        %3511 = vst [vmem:[%s718 + $0x80] sm:$0xff] %v3479
        %3512 = vst [vmem:[%s718 + $0x88] sm:$0xff] %v3480
        %3513 = vst [vmem:[%s718 + $0x90] sm:$0xff] %v3481
        %3514 = vst [vmem:[%s718 + $0x98] sm:$0xff] %v3482
        %3515 = vst [vmem:[%s718 + $0xa0] sm:$0xff] %v3483
        %3516 = vst [vmem:[%s718 + $0xa8] sm:$0xff] %v3484
        %3517 = vst [vmem:[%s718 + $0xb0] sm:$0xff] %v3485
        %3518 = vst [vmem:[%s718 + $0xb8] sm:$0xff] %v3486
        %3519 = vst [vmem:[%s718 + $0xc0] sm:$0xff] %v3487
        %3520 = vst [vmem:[%s718 + $0xc8] sm:$0xff] %v3488
        %3521 = vst [vmem:[%s718 + $0xd0] sm:$0xff] %v3489
        %3522 = vst [vmem:[%s718 + $0xd8] sm:$0xff] %v3490
        %3523 = vst [vmem:[%s718 + $0xe0] sm:$0xff] %v3491
        %3524 = vst [vmem:[%s718 + $0xe8] sm:$0xff] %v3492
        %3525 = vst [vmem:[%s718 + $0xf0] sm:$0xff] %v3493
        %3526 = vst [vmem:[%s718 + $0xf8] sm:$0xff] %v3494
        %s3527 = sand.u32 %s157, 1
        %s3528 = scalar_lea.sflag [#allocation6], %s3527
        %s3529 = sand.u32 %s157, 1
        %s3530 = smul.addr %s3529, 256
        %s3531 = scalar_lea.vmem [#allocation5], %s3530
        %s3532 = sand.u32 %s29, 1
        %s3533 = scalar_lea.sflag [#allocation8], %s3532
        %s3534 = sand.u32 %s185, 1
        %s3535 = smul.addr %s3534, 256
        %s3536 = scalar_lea.vmem [#allocation7], %s3535
        %s3537 = sand.u32 %s29, 1
        %s3538 = scalar_lea.sflag [#allocation8], %s3537
        %s3539 = sand.u32 %s213, 1
        %s3540 = smul.addr %s3539, 256
        %s3541 = scalar_lea.vmem [#allocation9], %s3540
        %s3542 = sand.u32 %s29, 1
        %s3543 = scalar_lea.sflag [#allocation11], %s3542
        %s3544 = sand.u32 %s241, 1
        %s3545 = smul.addr %s3544, 256
        %s3546 = scalar_lea.vmem [#allocation10], %s3545
        %s3547 = sand.u32 %s29, 1
        %s3548 = scalar_lea.sflag [#allocation11], %s3547
        %s3549 = sand.u32 %s269, 1
        %s3550 = smul.addr %s3549, 256
        %s3551 = scalar_lea.vmem [#allocation12], %s3550
        // Predicated region
        $region106: #{_forward.1} parent=92 // pred_check
          %p3552 = pneg %p167
        $region107: #{_forward.1} parent=92 // pred_check_branch
          %3554 = sbr.rel (%p3552) target = $region109
        $region108: #{_forward.1} parent=92 // pred_region
          %s3555 = smul.u32 2, %s34
          %s3556 = smul.u32 16, %s33
          %3558 = vsyncadd %s3528, 0
          %s3559 = smul.addr %s3555, 32
          %s3560 = sadd.s32 %s3556, %s3559
          %s3561 = smul.addr %s3560, 8
          %s3562 = scalar_lea.hbm %s4, %s3561
          %s3563 = sshll.u32 %s3531, 4
          %s3564 = int_to_ptr.vmem [resolvable:$true] %s3563
          %s3565 = sshll.u32 %s3562, 4
          %s3566 = int_to_ptr.hbm [resolvable:$true] %s3565
          %3571 = dma.vmem_to_hbm [thread:$0]  %s3564, 4096, %s3566, %s3528, 2048, 4096, 128
        $region109: #{_forward.1} parent=92 // pred_fallthru
          _
        // Predicated region
        $region110: #{_forward.1} parent=92 // pred_check
          %p3572 = pneg %p195
        $region111: #{_forward.1} parent=92 // pred_check_branch
          %3574 = sbr.rel (%p3572) target = $region113
        $region112: #{_forward.1} parent=92 // pred_region
          %s3575 = smul.u32 2, %s34
          %s3576 = smul.u32 16, %s33
          %3578 = vsyncadd %s3533, 0
          %s3579 = smul.addr %s3575, 32
          %s3580 = sadd.s32 %s3576, %s3579
          %s3581 = smul.addr %s3580, 8
          %s3582 = scalar_lea.hbm %s5, %s3581
          %s3583 = sshll.u32 %s3536, 4
          %s3584 = int_to_ptr.vmem [resolvable:$true] %s3583
          %s3585 = sshll.u32 %s3582, 4
          %s3586 = int_to_ptr.hbm [resolvable:$true] %s3585
          %3591 = dma.vmem_to_hbm [thread:$0]  %s3584, 4096, %s3586, %s3533, 2048, 4096, 128
        $region113: #{_forward.1} parent=92 // pred_fallthru
          _
        // Predicated region
        $region114: #{_forward.1} parent=92 // pred_check
          %p3592 = pneg %p223
        $region115: #{_forward.1} parent=92 // pred_check_branch
          %3594 = sbr.rel (%p3592) target = $region117
        $region116: #{_forward.1} parent=92 // pred_region
          %s3595 = smul.u32 2, %s34
          %s3596 = smul.u32 16, %s33
          %3598 = vsyncadd %s3538, 0
          %s3599 = smul.addr %s3595, 32
          %s3600 = sadd.s32 %s3596, %s3599
          %s3601 = smul.addr %s3600, 8
          %s3602 = scalar_lea.hbm %s6, %s3601
          %s3603 = sshll.u32 %s3541, 4
          %s3604 = int_to_ptr.vmem [resolvable:$true] %s3603
          %s3605 = sshll.u32 %s3602, 4
          %s3606 = int_to_ptr.hbm [resolvable:$true] %s3605
          %3611 = dma.vmem_to_hbm [thread:$0]  %s3604, 4096, %s3606, %s3538, 2048, 4096, 128
        $region117: #{_forward.1} parent=92 // pred_fallthru
          _
        // Predicated region
        $region118: #{_forward.1} parent=92 // pred_check
          %p3612 = pneg %p251
        $region119: #{_forward.1} parent=92 // pred_check_branch
          %3614 = sbr.rel (%p3612) target = $region121
        $region120: #{_forward.1} parent=92 // pred_region
          %s3615 = smul.u32 2, %s34
          %s3616 = smul.u32 16, %s33
          %3618 = vsyncadd %s3543, 0
          %s3619 = smul.addr %s3615, 32
          %s3620 = sadd.s32 %s3616, %s3619
          %s3621 = smul.addr %s3620, 8
          %s3622 = scalar_lea.hbm %s7, %s3621
          %s3623 = sshll.u32 %s3546, 4
          %s3624 = int_to_ptr.vmem [resolvable:$true] %s3623
          %s3625 = sshll.u32 %s3622, 4
          %s3626 = int_to_ptr.hbm [resolvable:$true] %s3625
          %3631 = dma.vmem_to_hbm [thread:$0]  %s3624, 4096, %s3626, %s3543, 2048, 4096, 128
        $region121: #{_forward.1} parent=92 // pred_fallthru
          _
        // Predicated region
        $region122: #{_forward.1} parent=92 // pred_check
          %p3632 = pneg %p279
        $region123: #{_forward.1} parent=92 // pred_check_branch
          %3634 = sbr.rel (%p3632) target = $region125
        $region124: #{_forward.1} parent=92 // pred_region
          %s3635 = smul.u32 2, %s34
          %s3636 = smul.u32 16, %s33
          %3638 = vsyncadd %s3548, 0
          %s3639 = smul.addr %s3635, 32
          %s3640 = sadd.s32 %s3636, %s3639
          %s3641 = smul.addr %s3640, 8
          %s3642 = scalar_lea.hbm %s8, %s3641
          %s3643 = sshll.u32 %s3551, 4
          %s3644 = int_to_ptr.vmem [resolvable:$true] %s3643
          %s3645 = sshll.u32 %s3642, 4
          %s3646 = int_to_ptr.hbm [resolvable:$true] %s3645
          %3651 = dma.vmem_to_hbm [thread:$0]  %s3644, 4096, %s3646, %s3548, 2048, 4096, 128
        $region125: #{_forward.1} parent=92 // pred_fallthru
          _
      $region93: #{_forward.1} parent=5 // pred_fallthru
        _
      %p3652 = scmp.le.s32.totalorder 2, %s24
      // Predicated region
      $region126: #{_forward.1} parent=5 // pred_check
        %p3653 = pneg %p3652
      $region127: #{_forward.1} parent=5 // pred_check_branch
        %3655 = sbr.rel (%p3653) target = $region129
      $region128: #{_forward.1} parent=5 // pred_region
        %s3656 = ssub.s32 %s24, 2
        // Predicated region
        $region130: #{_forward.1} parent=128 // pred_check
          %p3657 = pneg %p173
        $region131: #{_forward.1} parent=128 // pred_check_branch
          %3659 = sbr.rel (%p3657) target = $region133
        $region132: #{_forward.1} parent=128 // pred_region
          %s3660 = sand.u32 %s158, 1
          %s3661 = scalar_lea.sflag [#allocation6], %s3660
          %s3662 = sand.u32 %s158, 1
          %s3663 = smul.addr %s3662, 256
          %s3664 = scalar_lea.vmem [#allocation5], %s3663
          %3666 = dma.done %s3661, 4096
        $region133: #{_forward.1} parent=128 // pred_fallthru
          _
        // Predicated region
        $region134: #{_forward.1} parent=128 // pred_check
          %p3667 = pneg %p201
        $region135: #{_forward.1} parent=128 // pred_check_branch
          %3669 = sbr.rel (%p3667) target = $region137
        $region136: #{_forward.1} parent=128 // pred_region
          %s3670 = sand.u32 %s30, 1
          %s3671 = scalar_lea.sflag [#allocation8], %s3670
          %s3672 = sand.u32 %s186, 1
          %s3673 = smul.addr %s3672, 256
          %s3674 = scalar_lea.vmem [#allocation7], %s3673
          %3676 = dma.done %s3671, 4096
        $region137: #{_forward.1} parent=128 // pred_fallthru
          _
        // Predicated region
        $region138: #{_forward.1} parent=128 // pred_check
          %p3677 = pneg %p229
        $region139: #{_forward.1} parent=128 // pred_check_branch
          %3679 = sbr.rel (%p3677) target = $region141
        $region140: #{_forward.1} parent=128 // pred_region
          %s3680 = sand.u32 %s30, 1
          %s3681 = scalar_lea.sflag [#allocation8], %s3680
          %s3682 = sand.u32 %s214, 1
          %s3683 = smul.addr %s3682, 256
          %s3684 = scalar_lea.vmem [#allocation9], %s3683
          %3686 = dma.done %s3681, 4096
        $region141: #{_forward.1} parent=128 // pred_fallthru
          _
        // Predicated region
        $region142: #{_forward.1} parent=128 // pred_check
          %p3687 = pneg %p257
        $region143: #{_forward.1} parent=128 // pred_check_branch
          %3689 = sbr.rel (%p3687) target = $region145
        $region144: #{_forward.1} parent=128 // pred_region
          %s3690 = sand.u32 %s30, 1
          %s3691 = scalar_lea.sflag [#allocation11], %s3690
          %s3692 = sand.u32 %s242, 1
          %s3693 = smul.addr %s3692, 256
          %s3694 = scalar_lea.vmem [#allocation10], %s3693
          %3696 = dma.done %s3691, 4096
        $region145: #{_forward.1} parent=128 // pred_fallthru
          _
        // Predicated region
        $region146: #{_forward.1} parent=128 // pred_check
          %p3697 = pneg %p285
        $region147: #{_forward.1} parent=128 // pred_check_branch
          %3699 = sbr.rel (%p3697) target = $region149
        $region148: #{_forward.1} parent=128 // pred_region
          %s3700 = sand.u32 %s30, 1
          %s3701 = scalar_lea.sflag [#allocation11], %s3700
          %s3702 = sand.u32 %s270, 1
          %s3703 = smul.addr %s3702, 256
          %s3704 = scalar_lea.vmem [#allocation12], %s3703
          %3706 = dma.done %s3701, 4096
        $region149: #{_forward.1} parent=128 // pred_fallthru
          _
      $region129: #{_forward.1} parent=5 // pred_fallthru
        _
    $region6: #{_forward.1} parent=1 // loop_footer
      %s28 = sadd.s32 1, %s24
    $region7: #{_forward.1} parent=1 // loop_footer_branch
      %23 = sbr.rel target = $region3
    $region8: #{_forward.1} parent=1 // loop_exit
      _
    %3707 = vsyncpa [#allocation6], 1
    %s3708 = scalar_lea.sflag [#allocation6], 1
    %3709 = vsyncpa %s3708, 1
    %3710 = vsyncpa [#allocation8], 1
    %s3711 = scalar_lea.sflag [#allocation8], 1
    %3712 = vsyncpa %s3711, 1
    %3713 = vsyncpa [#allocation11], 1
    %s3714 = scalar_lea.sflag [#allocation11], 1
    %3715 = vsyncpa %s3714, 1

</llo_original>
